<compile_context>
chip_gen: v7x
topology: tpu7x:2x2x1
jax: 0.10.0
libtpu: 0.0.40
codegen_flags: <defaults>
</compile_context>

<pallas_src>
import functools

import jax
import jax.numpy as jnp
from jax import lax
from jax.experimental import pallas as pl
from jax.experimental.pallas import tpu as pltpu

F32 = jnp.float32
LN_EPS = 1e-5

# MXU operand / stored-weight dtype.  bf16 gives ~2x+ matmul throughput and halves
# weight + attention-activation HBM traffic; accumulation stays f32.
MATMUL_DTYPE = jnp.bfloat16

# NOTE: approx=True uses the EUP reciprocal (free slot); ~1e-3 relative error vs a
# true divide.  Flip to False for closer parity with torch softmax.
SOFTMAX_APPROX_RECIP = True


# ----------------------------------------------------------------------------
# hardware-derived budgets
# ----------------------------------------------------------------------------

def _vmem_capacity_bytes():
    try:
        return int(pltpu.get_tpu_info().vmem_capacity_bytes)
    except Exception:
        return 64 * 1024 * 1024            # conservative (v7x-sized) fallback

_VMEM_CAP = _vmem_capacity_bytes()
# Explicit scoped-VMEM budget (replaces the 16/32 MiB default), with headroom
# below physical capacity.
_VMEM_LIMIT = int(min(max(_VMEM_CAP - 8 * 2**20, 24 * 2**20), 112 * 2**20))

ROW_TILE = 512 if _VMEM_CAP >= 96 * 2**20 else 256   # v5e/v6e: 512, v7x: 256
FFN_ROW_TILE = ROW_TILE                              # d_ff is tiled, rows can stay big
FF_COL_TILE = 512                                    # d_ff tile (multiple of 128)


def _cparams(*sem):
    return pltpu.CompilerParams(dimension_semantics=sem,
                                vmem_limit_bytes=_VMEM_LIMIT)

_P1 = _cparams("parallel")
_P2 = _cparams("parallel", "parallel")
_PA = _cparams("parallel", "arbitrary")


# ----------------------------------------------------------------------------
# single-buffered (Buffered(1)) constant-index specs for resident weights/biases
# ----------------------------------------------------------------------------

def _probe_buffered_one():
    """Check that pipeline_mode=pl.Buffered(1) is accepted on this jax/libtpu."""
    try:
        def _k(x_ref, o_ref):
            o_ref[...] = x_ref[...] + 1.0
        f = pl.pallas_call(
            _k,
            grid=(2,),
            out_shape=jax.ShapeDtypeStruct((8, 128), jnp.float32),
            in_specs=[pl.BlockSpec((8, 128), lambda i: (0, 0),
                                   pipeline_mode=pl.Buffered(1))],
            out_specs=pl.BlockSpec((8, 128), lambda i: (0, 0)),
            compiler_params=_P1,
        )
        jax.block_until_ready(f(jnp.zeros((8, 128), jnp.float32)))
        return True
    except Exception:
        return False

_WEIGHT_BUFFERED_ONE = _probe_buffered_one()


def _const_spec(shape):
    """BlockSpec for an operand fetched once (constant block index across the grid)."""
    nd = len(shape)
    idx = lambda *_: (0,) * nd
    if _WEIGHT_BUFFERED_ONE:
        return pl.BlockSpec(shape, idx, pipeline_mode=pl.Buffered(1))
    return pl.BlockSpec(shape, idx)


# ----------------------------------------------------------------------------
# small in-kernel helpers
# ----------------------------------------------------------------------------

def _mm(a, b):
    return jnp.dot(a.astype(MATMUL_DTYPE), b.astype(MATMUL_DTYPE),
                   preferred_element_type=jnp.float32)


def _layer_norm(x, g, b):
    # biased variance, matching torch.nn.LayerNorm (f32 math)
    x = x.astype(jnp.float32)
    mean = jnp.mean(x, axis=-1, keepdims=True)
    c = x - mean
    var = jnp.mean(c * c, axis=-1, keepdims=True)
    return c * lax.rsqrt(var + LN_EPS) * g + b


def _tile_rows(n, cap):
    """Largest clean row tile <= cap that divides n (falls back to n)."""
    t = min(cap, n)
    if t == n and n > 8 and n % 16 == 0:
        t = n // 2          # make sure 1-step grids become >= 2 steps (megacore / pipeline)
    while t > 8 and n % t:
        t //= 2
    return t if n % t == 0 else n


def _ff_col_tile(dff):
    if dff <= FF_COL_TILE:
        return dff
    for t in (FF_COL_TILE, 256, 128):
        if dff % t == 0:
            return t
    return dff              # rare: d_ff not a multiple of 128 -> keep untiled


def _softmax(s):
    s = s - jnp.max(s, axis=-1, keepdims=True)
    e = jnp.exp(s)
    denom = jnp.sum(e, axis=-1, keepdims=True)
    if SOFTMAX_APPROX_RECIP:
        return e * pl.reciprocal(denom, approx=True)
    return e / denom


# ----------------------------------------------------------------------------
# Pallas kernels
# ----------------------------------------------------------------------------

def _ln_kernel(x_ref, g_ref, b_ref, o_ref):
    o_ref[...] = _layer_norm(x_ref[...], g_ref[...], b_ref[...]).astype(o_ref.dtype)


def _ln_linear_kernel(x_ref, g_ref, b_ref, w_ref, wb_ref, norm_ref, proj_ref):
    # LN(x) and LN(x) @ W + b in one pass (x read from HBM once).
    nx = _layer_norm(x_ref[...], g_ref[...], b_ref[...])
    norm_ref[...] = nx.astype(norm_ref.dtype)
    proj_ref[...] = (_mm(nx, w_ref[...]) + wb_ref[...]).astype(proj_ref.dtype)


def _add_ln_linear_kernel(x_ref, r_ref, g_ref, b_ref, w_ref, wb_ref, norm_ref, proj_ref):
    nx = _layer_norm(x_ref[...] + r_ref[...], g_ref[...], b_ref[...])
    norm_ref[...] = nx.astype(norm_ref.dtype)
    proj_ref[...] = (_mm(nx, w_ref[...]) + wb_ref[...]).astype(proj_ref.dtype)


def _linear_kernel(x_ref, w_ref, wb_ref, o_ref):
    o_ref[...] = (_mm(x_ref[...], w_ref[...]) + wb_ref[...]).astype(o_ref.dtype)


def _out_ln_qproj_kernel(x_ref, w_ref, wb_ref, r_ref, g_ref, b_ref,
                         w2_ref, b2_ref, t_ref, q_ref):
    # self-attn out-projection + residual + LayerNorm, fused with the
    # cross-attention Q projection of the result (reuses the in-vreg LN output).
    y = _mm(x_ref[...], w_ref[...]) + wb_ref[...]
    t2 = _layer_norm(r_ref[...] + y, g_ref[...], b_ref[...])
    t_ref[...] = t2.astype(t_ref.dtype)
    q_ref[...] = (_mm(t2, w2_ref[...]) + b2_ref[...]).astype(q_ref.dtype)


def _linear_add_ln_kernel(x_ref, w_ref, wb_ref, r_ref, g_ref, b_ref, o_ref):
    # out-projection + residual add + LayerNorm in one pass.
    y = _mm(x_ref[...], w_ref[...]) + wb_ref[...]
    o_ref[...] = _layer_norm(r_ref[...] + y, g_ref[...], b_ref[...]).astype(o_ref.dtype)


def _ffn_kernel(two_branch, *refs):
    # d_ff-tiled FFN:  x = xa  (or (xa + xb)/2),  LN(x + W2 @ ReLU(W1 @ x + b1) + b2)
    # grid = (row blocks, d_ff blocks);  d_ff axis is a reduction (arbitrary).
    if two_branch:
        xa_ref, xb_ref = refs[0], refs[1]
        (w1_ref, b1_ref, w2_ref, b2_ref, g_ref, b_ref, o_ref, x_sc, acc_sc) = refs[2:]
    else:
        xa_ref, xb_ref = refs[0], None
        (w1_ref, b1_ref, w2_ref, b2_ref, g_ref, b_ref, o_ref, x_sc, acc_sc) = refs[1:]

    k = pl.program_id(1)

    @pl.when(k == 0)
    def _():
        if two_branch:
            x_sc[...] = (xa_ref[...] + xb_ref[...]) * 0.5
        else:
            x_sc[...] = xa_ref[...].astype(x_sc.dtype)
        acc_sc[...] = jnp.zeros_like(acc_sc)

    h = jnp.maximum(_mm(x_sc[...], w1_ref[...]) + b1_ref[...], 0.0)
    acc_sc[...] += _mm(h, w2_ref[...])

    @pl.when(k == pl.num_programs(1) - 1)
    def _():
        y = acc_sc[...] + b2_ref[...]
        o_ref[...] = _layer_norm(x_sc[...] + y, g_ref[...], b_ref[...]).astype(o_ref.dtype)


def _mha_kernel(q_ref, k_ref, v_ref, o_ref, *, inv_scale):
    # one (batch, head) pair per grid step -> score block is (Sq, Sk)
    q = q_ref[0, 0].astype(MATMUL_DTYPE)
    k = k_ref[0, 0].astype(MATMUL_DTYPE)
    v = v_ref[0, 0].astype(MATMUL_DTYPE)
    s = lax.dot_general(q, k, dimension_numbers=(((1,), (1,)), ((), ())),
                        preferred_element_type=jnp.float32) * inv_scale
    p = _softmax(s)
    o = jnp.dot(p.astype(MATMUL_DTYPE), v, preferred_element_type=jnp.float32)
    o_ref[0, 0] = o.astype(o_ref.dtype)


# ----------------------------------------------------------------------------
# pallas_call wrappers (row-tiled grids; resident weights single-buffered)
# ----------------------------------------------------------------------------

def _row_spec(tile, ncols):
    return pl.BlockSpec((tile, ncols), lambda i: (i, 0))


def ln_op(x2d, g, b, *, out_dtype=F32):
    n, d = x2d.shape
    tn = _tile_rows(n, ROW_TILE)
    return pl.pallas_call(
        _ln_kernel,
        grid=(n // tn,),
        out_shape=jax.ShapeDtypeStruct((n, d), out_dtype),
        in_specs=[_row_spec(tn, d), _const_spec((1, d)), _const_spec((1, d))],
        out_specs=_row_spec(tn, d),
        compiler_params=_P1,
    )(x2d, g.reshape(1, d), b.reshape(1, d))


def ln_linear_op(x2d, g, b, w, wb):
    n, d = x2d.shape
    dout = w.shape[1]
    tn = _tile_rows(n, ROW_TILE)
    return pl.pallas_call(
        _ln_linear_kernel,
        grid=(n // tn,),
        out_shape=(jax.ShapeDtypeStruct((n, d), F32),
                   jax.ShapeDtypeStruct((n, dout), MATMUL_DTYPE)),
        in_specs=[_row_spec(tn, d), _const_spec((1, d)), _const_spec((1, d)),
                  _const_spec((d, dout)), _const_spec((1, dout))],
        out_specs=(_row_spec(tn, d), _row_spec(tn, dout)),
        compiler_params=_P1,
    )(x2d, g.reshape(1, d), b.reshape(1, d), w, wb.reshape(1, dout))


def add_ln_linear_op(x2d, r2d, g, b, w, wb):
    n, d = x2d.shape
    dout = w.shape[1]
    tn = _tile_rows(n, ROW_TILE)
    return pl.pallas_call(
        _add_ln_linear_kernel,
        grid=(n // tn,),
        out_shape=(jax.ShapeDtypeStruct((n, d), F32),
                   jax.ShapeDtypeStruct((n, dout), MATMUL_DTYPE)),
        in_specs=[_row_spec(tn, d), _row_spec(tn, d),
                  _const_spec((1, d)), _const_spec((1, d)),
                  _const_spec((d, dout)), _const_spec((1, dout))],
        out_specs=(_row_spec(tn, d), _row_spec(tn, dout)),
        compiler_params=_P1,
    )(x2d, r2d, g.reshape(1, d), b.reshape(1, d), w, wb.reshape(1, dout))


def linear_op(x2d, w, wb, *, out_dtype=MATMUL_DTYPE):
    n, din = x2d.shape
    dout = w.shape[1]
    tn = _tile_rows(n, ROW_TILE)
    return pl.pallas_call(
        _linear_kernel,
        grid=(n // tn,),
        out_shape=jax.ShapeDtypeStruct((n, dout), out_dtype),
        in_specs=[_row_spec(tn, din), _const_spec((din, dout)), _const_spec((1, dout))],
        out_specs=_row_spec(tn, dout),
        compiler_params=_P1,
    )(x2d, w, wb.reshape(1, dout))


def self_out_ln_qproj_op(x2d, w, wb, r2d, g, b, w2, b2):
    n, din = x2d.shape
    d = w.shape[1]
    dq = w2.shape[1]
    tn = _tile_rows(n, ROW_TILE)
    return pl.pallas_call(
        _out_ln_qproj_kernel,
        grid=(n // tn,),
        out_shape=(jax.ShapeDtypeStruct((n, d), F32),
                   jax.ShapeDtypeStruct((n, dq), MATMUL_DTYPE)),
        in_specs=[_row_spec(tn, din),
                  _const_spec((din, d)), _const_spec((1, d)),
                  _row_spec(tn, d),
                  _const_spec((1, d)), _const_spec((1, d)),
                  _const_spec((d, dq)), _const_spec((1, dq))],
        out_specs=(_row_spec(tn, d), _row_spec(tn, dq)),
        compiler_params=_P1,
    )(x2d, w, wb.reshape(1, d), r2d, g.reshape(1, d), b.reshape(1, d),
      w2, b2.reshape(1, dq))


def cross_out_add_ln_op(x2d, w, wb, r2d, g, b):
    """Out-projection + residual + LN.  x2d may have r2d.shape[0] rows or 2x rows
    (memory / memo2 branches stacked); the residual index_map wraps modulo the
    first half so wo/bo are streamed once and no HBM slices are materialized."""
    nx, din = x2d.shape
    nr = r2d.shape[0]
    dout = w.shape[1]
    tn = _tile_rows(nr, ROW_TILE)
    nb = nr // tn

    def r_map(i):
        return (i % nb, 0)

    return pl.pallas_call(
        _linear_add_ln_kernel,
        grid=(nx // tn,),
        out_shape=jax.ShapeDtypeStruct((nx, dout), F32),
        in_specs=[_row_spec(tn, din),
                  _const_spec((din, dout)), _const_spec((1, dout)),
                  pl.BlockSpec((tn, dout), r_map),
                  _const_spec((1, dout)), _const_spec((1, dout))],
        out_specs=_row_spec(tn, dout),
        compiler_params=_P1,
    )(x2d, w, wb.reshape(1, dout), r2d, g.reshape(1, dout), b.reshape(1, dout))


def ffn_add_ln_op(xa, xb, w1, b1, w2, b2, g, b, *, n_rows):
    """FFN (+ optional memory/memo2 branch averaging) + residual + LayerNorm.

    xb is None            -> single branch  : LN(x + FFN(x)),  x = xa
    xb is xa (2N, D)      -> merged branches: rows [:N] and [N:] of xa are averaged
    xb separate (N, D)    -> two branch arrays are averaged
    d_ff is tiled (reduction axis) with an f32 VMEM accumulator.
    """
    d = xa.shape[1]
    dff = w1.shape[1]
    tn = _tile_rows(n_rows, FFN_ROW_TILE)
    nb = n_rows // tn
    tf = _ff_col_tile(dff)
    nk = dff // tf
    two = xb is not None
    off_b = 0
    if two and xb.shape[0] == 2 * n_rows:
        off_b = nb

    def xb_map(i, k):
        return (i + off_b, 0)

    in_specs = [pl.BlockSpec((tn, d), lambda i, k: (i, 0))]
    args = [xa]
    if two:
        in_specs.append(pl.BlockSpec((tn, d), xb_map))
        args.append(xb)
    in_specs += [pl.BlockSpec((d, tf), lambda i, k: (0, k)),
                 pl.BlockSpec((1, tf), lambda i, k: (0, k)),
                 pl.BlockSpec((tf, d), lambda i, k: (k, 0)),
                 _const_spec((1, d)), _const_spec((1, d)), _const_spec((1, d))]
    args += [w1, b1.reshape(1, dff), w2, b2.reshape(1, d),
             g.reshape(1, d), b.reshape(1, d)]

    return pl.pallas_call(
        functools.partial(_ffn_kernel, two),
        grid=(nb, nk),
        out_shape=jax.ShapeDtypeStruct((n_rows, d), F32),
        in_specs=in_specs,
        out_specs=pl.BlockSpec((tn, d), lambda i, k: (i, 0)),
        scratch_shapes=[pltpu.VMEM((tn, d), F32), pltpu.VMEM((tn, d), F32)],
        compiler_params=_PA,
    )(*args)


def mha_op(q_heads, k_heads, v_heads, *, inv_scale):
    # q: (Bq, H, Sq, dh);  k/v: (Bkv, H, Sk, dh) with Bkv == Bq or Bkv == 2*Bq
    # (memory and memo2 K/V batched on the leading axis; q reused via index_map).
    bq, h, sq, dh = q_heads.shape
    bkv, _, sk, _ = k_heads.shape

    if bkv == bq:
        q_map = lambda i, j: (i, j, 0, 0)
    else:
        q_map = lambda i, j: (i % bq, j, 0, 0)

    kernel = functools.partial(_mha_kernel, inv_scale=inv_scale)
    return pl.pallas_call(
        kernel,
        grid=(bkv, h),
        out_shape=jax.ShapeDtypeStruct((bkv, h, sq, dh), MATMUL_DTYPE),
        in_specs=[pl.BlockSpec((1, 1, sq, dh), q_map),
                  pl.BlockSpec((1, 1, sk, dh), lambda i, j: (i, j, 0, 0)),
                  pl.BlockSpec((1, 1, sk, dh), lambda i, j: (i, j, 0, 0))],
        out_specs=pl.BlockSpec((1, 1, sq, dh), lambda i, j: (i, j, 0, 0)),
        compiler_params=_P2,
    )(q_heads, k_heads, v_heads)


# ----------------------------------------------------------------------------
# model glue (reshapes / orchestration in plain JAX)
# ----------------------------------------------------------------------------

def decoder_layer(lp, tgt3d, emb2d, norm_mem2d, mem_batch, kv_batch, sk,
                  g_att, b_att, *, num_heads, d_model):
    B, S, D = tgt3d.shape
    H = num_heads
    dh = D // H
    N = B * S
    inv_scale = 1.0 / (float(dh) ** 0.5)
    x2d = tgt3d.reshape(N, D)

    sa, ea = lp["self_attn"], lp["enc_attn"]

    # ---- norm_tgt = LN(tgt [+ embedding]) fused with the packed Q/K/V projection ----
    if emb2d is None:
        norm_tgt2d, qkv = ln_linear_op(x2d, g_att, b_att, sa["wqkv"], sa["bqkv"])
    else:
        norm_tgt2d, qkv = add_ln_linear_op(x2d, emb2d, g_att, b_att,
                                           sa["wqkv"], sa["bqkv"])

    q, k, v = jnp.split(qkv, 3, axis=-1)
    # faithful torch `.view(batch*heads, -1, d_model//heads)` (contiguous reshape)
    q = q.reshape(B, H, S, dh)
    k = k.reshape(B, H, S, dh)
    v = v.reshape(B, H, S, dh)
    att = mha_op(q, k, v, inv_scale=inv_scale).reshape(N, D)

    # ---- self-attn out-proj + residual + LN, fused with the cross-attn Q projection ----
    tgt2_2d, q_enc2d = self_out_ln_qproj_op(
        att, sa["wo"], sa["bo"], norm_tgt2d,
        lp["self_attn_norm"]["g"], lp["self_attn_norm"]["b"], ea["wq"], ea["bq"])
    q_enc = q_enc2d.reshape(B, H, S, dh)

    # ---- memory / memo2 K,V projections for both branches in one call ----
    kv_enc = linear_op(norm_mem2d, ea["wkv"], ea["bkv"])        # (kv_batch*sk, 2D)
    ke, ve = jnp.split(kv_enc, 2, axis=-1)
    ke = ke.reshape(kv_batch, H, sk, dh)
    ve = ve.reshape(kv_batch, H, sk, dh)
    att_enc = mha_op(q_enc, ke, ve, inv_scale=inv_scale).reshape(kv_batch * S, D)

    g_e, b_e = lp["enc_attn_norm"]["g"], lp["enc_attn_norm"]["b"]
    ff1, ff2, ffn = lp["ff1"], lp["ff2"], lp["ff_norm"]
    two_branch = (kv_batch == 2 * mem_batch)

    if two_branch and N % 8 == 0:
        # one call over both branches: residual wraps modulo the first half and the
        # FFN reads both halves of the same (2N, D) array via offset index_maps.
        tgt3_both = cross_out_add_ln_op(att_enc, ea["wo"], ea["bo"], tgt2_2d, g_e, b_e)
        tgt4_2d = ffn_add_ln_op(tgt3_both, tgt3_both, ff1["w"], ff1["b"],
                                ff2["w"], ff2["b"], ffn["g"], ffn["b"], n_rows=N)
    elif two_branch:
        # rare fallback (N not a multiple of 8): two separate calls on HBM slices
        tgt3_a = cross_out_add_ln_op(att_enc[:N], ea["wo"], ea["bo"], tgt2_2d, g_e, b_e)
        tgt3_b = cross_out_add_ln_op(att_enc[N:], ea["wo"], ea["bo"], tgt2_2d, g_e, b_e)
        tgt4_2d = ffn_add_ln_op(tgt3_a, tgt3_b, ff1["w"], ff1["b"],
                                ff2["w"], ff2["b"], ffn["g"], ffn["b"], n_rows=N)
    else:
        # memo2 is None at the module level -> both branches identical; (a + a)/2 == a
        tgt3 = cross_out_add_ln_op(att_enc, ea["wo"], ea["bo"], tgt2_2d, g_e, b_e)
        tgt4_2d = ffn_add_ln_op(tgt3, None, ff1["w"], ff1["b"],
                                ff2["w"], ff2["b"], ffn["g"], ffn["b"], n_rows=N)

    return tgt4_2d.reshape(B, S, D)[:mem_batch]    # faithful `[:memory.size(0)]`


def transformer_decoder(params, tgt, memory, memo2=None, embedding=None, *,
                        num_heads, d_model, num_layers):
    B, S, D = tgt.shape
    assert memory.shape[0] == B, "memory batch must match tgt batch"
    if memo2 is not None:
        assert memo2.shape == memory.shape, "memo2 must match memory shape"
        # TODO(synk): support mismatched memory/memo2 shapes (not exercised by module).
        mem_all = jnp.concatenate([memory, memo2], axis=0)    # (2B, Sk, D)
    else:
        mem_all = memory
    kv_batch, sk, _ = mem_all.shape

    g_att, b_att = params["norm_att"]["g"], params["norm_att"]["b"]
    # LN(memory)/LN(memo2) are layer-invariant -> hoisted; stored in MATMUL_DTYPE
    # because they only ever feed the K/V projection matmuls.
    norm_mem2d = ln_op(mem_all.reshape(kv_batch * sk, D), g_att, b_att,
                       out_dtype=MATMUL_DTYPE)
    emb2d = None if embedding is None else embedding.reshape(B * S, D)

    x = tgt
    for i in range(num_layers):
        x = decoder_layer(params["layers"][i], x, emb2d, norm_mem2d,
                          memory.shape[0], kv_batch, sk, g_att, b_att,
                          num_heads=num_heads, d_model=d_model)
    return x


# ----------------------------------------------------------------------------
# deterministic parameter init (shapes follow the PyTorch __init__) + packing
# ----------------------------------------------------------------------------

def init_linear(key, din, dout):
    kw, kb = jax.random.split(key)
    bound = 1.0 / (din ** 0.5)
    return {"w": jax.random.uniform(kw, (din, dout), F32, -bound, bound),
            "b": jax.random.uniform(kb, (dout,), F32, -bound, bound)}


def init_ln(d):
    return {"g": jnp.ones((d,), F32), "b": jnp.zeros((d,), F32)}


def init_mha(key, d_model):
    ks = jax.random.split(key, 4)
    return {"q": init_linear(ks[0], d_model, d_model),
            "k": init_linear(ks[1], d_model, d_model),
            "v": init_linear(ks[2], d_model, d_model),
            "o": init_linear(ks[3], d_model, d_model)}


def init_layer(key, d_model, d_ff):
    ks = jax.random.split(key, 4)
    return {"self_attn": init_mha(ks[0], d_model),
            "self_attn_norm": init_ln(d_model),
            "enc_attn": init_mha(ks[1], d_model),
            "enc_attn_norm": init_ln(d_model),
            "ff1": init_linear(ks[2], d_model, d_ff),
            "ff2": init_linear(ks[3], d_ff, d_model),
            "ff_norm": init_ln(d_model)}


def init_decoder(key, num_layers, d_model, d_ff):
    ks = jax.random.split(key, num_layers)
    return {"layers": [init_layer(ks[i], d_model, d_ff) for i in range(num_layers)],
            "norm_att": init_ln(d_model)}   # norm_att1/2/3 exist in __init__ but are unused


def _pack_mha(p):
    # Fused weight layouts: Wqkv = [Wq|Wk|Wv] (self-attn), Wkv = [Wk|Wv] (cross-attn).
    wd = MATMUL_DTYPE
    return {"wqkv": jnp.concatenate([p["q"]["w"], p["k"]["w"], p["v"]["w"]], axis=1).astype(wd),
            "bqkv": jnp.concatenate([p["q"]["b"], p["k"]["b"], p["v"]["b"]], axis=0),
            "wq": p["q"]["w"].astype(wd), "bq": p["q"]["b"],
            "wkv": jnp.concatenate([p["k"]["w"], p["v"]["w"]], axis=1).astype(wd),
            "bkv": jnp.concatenate([p["k"]["b"], p["v"]["b"]], axis=0),
            "wo": p["o"]["w"].astype(wd), "bo": p["o"]["b"]}


def pack_params(raw):
    wd = MATMUL_DTYPE
    return {"layers": [{"self_attn": _pack_mha(l["self_attn"]),
                        "self_attn_norm": l["self_attn_norm"],
                        "enc_attn": _pack_mha(l["enc_attn"]),
                        "enc_attn_norm": l["enc_attn_norm"],
                        "ff1": {"w": l["ff1"]["w"].astype(wd), "b": l["ff1"]["b"]},
                        "ff2": {"w": l["ff2"]["w"].astype(wd), "b": l["ff2"]["b"]},
                        "ff_norm": l["ff_norm"]}
                       for l in raw["layers"]],
            "norm_att": raw["norm_att"]}


# ----------------------------------------------------------------------------
# pure-JAX f32 reference (torch-equivalent forward) for a loose sanity check
# ----------------------------------------------------------------------------

def _ref_ln(x, p):
    mean = jnp.mean(x, axis=-1, keepdims=True)
    var = jnp.mean((x - mean) ** 2, axis=-1, keepdims=True)
    return (x - mean) / jnp.sqrt(var + LN_EPS) * p["g"] + p["b"]


def _ref_mha(p, query, key, value, num_heads, d_model):
    bsz = query.shape[0]
    dh = d_model // num_heads
    q = query @ p["q"]["w"] + p["q"]["b"]
    k = key @ p["k"]["w"] + p["k"]["b"]
    v = value @ p["v"]["w"] + p["v"]["b"]
    q = q.reshape(bsz * num_heads, -1, dh)
    k = k.reshape(bsz * num_heads, -1, dh)
    v = v.reshape(bsz * num_heads, -1, dh)
    s = jnp.einsum("bik,bjk->bij", q, k) / (dh ** 0.5)
    w = jax.nn.softmax(s, axis=-1)
    a = jnp.einsum("bij,bjk->bik", w, v).reshape(bsz, -1, d_model)
    return a @ p["o"]["w"] + p["o"]["b"]


def _ref_layer(lp, tgt, memory, memo2, num_heads, d_model):
    tgt2 = _ref_ln(tgt + _ref_mha(lp["self_attn"], tgt, tgt, tgt, num_heads, d_model),
                   lp["self_attn_norm"])
    tgt3 = _ref_ln(tgt2 + _ref_mha(lp["enc_attn"], tgt2, memory, memory, num_heads, d_model),
                   lp["enc_attn_norm"])
    tgt3_5 = _ref_ln(tgt2 + _ref_mha(lp["enc_attn"], tgt2, memo2, memo2, num_heads, d_model),
                     lp["enc_attn_norm"])
    tgt3 = (tgt3 + tgt3_5) / 2
    h = jnp.maximum(tgt3 @ lp["ff1"]["w"] + lp["ff1"]["b"], 0.0)
    ff = h @ lp["ff2"]["w"] + lp["ff2"]["b"]
    return _ref_ln(tgt3 + ff, lp["ff_norm"])[:memory.shape[0]]


def reference_decoder(raw, tgt, memory, memo2, embedding, *, num_heads, d_model, num_layers):
    for i in range(num_layers):
        norm_tgt = _ref_ln(tgt + embedding if embedding is not None else tgt, raw["norm_att"])
        nm1 = _ref_ln(memory, raw["norm_att"])
        nm2 = _ref_ln(memo2, raw["norm_att"]) if memo2 is not None else nm1
        tgt = _ref_layer(raw["layers"][i], norm_tgt, nm1, nm2, num_heads, d_model)
    return tgt


# ----------------------------------------------------------------------------

if __name__ == "__main__":
    num_layers, num_heads, d_model, d_ff = 2, 4, 32, 64
    B, S = 2, 8

    key = jax.random.PRNGKey(0)
    kp, kt, km, km2, ke = jax.random.split(key, 5)

    raw = init_decoder(kp, num_layers, d_model, d_ff)
    params = pack_params(raw)
    tgt = jax.random.normal(kt, (B, S, d_model), F32)
    memory = jax.random.normal(km, (B, S, d_model), F32)
    memo2 = jax.random.normal(km2, (B, S, d_model), F32)
    embedding = jax.random.normal(ke, (B, S, d_model), F32)

    fwd = jax.jit(functools.partial(transformer_decoder,
                                    num_heads=num_heads, d_model=d_model,
                                    num_layers=num_layers))

    # memo2 + embedding path (two-branch cross attention, merged kernels)
    out = fwd(params, tgt, memory, memo2, embedding)
    jax.block_until_ready(out)
    assert out.shape == (B, S, d_model)
    assert bool(jnp.all(jnp.isfinite(out)))
    ref = reference_decoder(raw, tgt, memory, memo2, embedding,
                            num_heads=num_heads, d_model=d_model, num_layers=num_layers)
    # loose tolerance: bf16 MXU operands + EUP approximate-reciprocal softmax
    assert float(jnp.max(jnp.abs(out - ref))) < 0.25

    # no-memo2 / no-embedding path (single-branch FFN, LN-only QKV kernel)
    out2 = fwd(params, tgt, memory, None, None)
    jax.block_until_ready(out2)
    assert out2.shape == (B, S, d_model)
    assert bool(jnp.all(jnp.isfinite(out2)))
    ref2 = reference_decoder(raw, tgt, memory, None, None,
                             num_heads=num_heads, d_model=d_model, num_layers=num_layers)
    assert float(jnp.max(jnp.abs(out2 - ref2))) < 0.25

    print("KERNEL_OK")
</pallas_src>

<mosaic_0001>
module attributes {stable_mosaic.version = 11 : i64} {
  func.func @_k(%arg0: i32, %arg1: memref<8x128xf32, #tpu.memory_space<vmem>>, %arg2: memref<8x128xf32, #tpu.memory_space<vmem>>) attributes {dimension_semantics = [#tpu.dimension_semantics<parallel>], iteration_bounds = array<i64: 2>, scalar_prefetch = 0 : i64, scratch_operands = 0 : i64, tpu.core_type = #tpu.core_type<tc>, window_params = [{pipeline_mode = #tpu.pipeline_mode<synchronous>, transform_indices = @transform_0, window_bounds = array<i64: 8, 128>}, {pipeline_mode = #tpu.pipeline_mode<synchronous>, transform_indices = @transform_1, window_bounds = array<i64: 8, 128>}]} {
    %c0 = arith.constant 0 : index
    %c0_0 = arith.constant 0 : index
    %0 = vector.load %arg1[%c0, %c0_0] : memref<8x128xf32, #tpu.memory_space<vmem>>, vector<8x128xf32>
    %cst = arith.constant 1.000000e+00 : f32
    %1 = vector.broadcast %cst : f32 to vector<8x128xf32>
    %2 = arith.addf %0, %1 : vector<8x128xf32>
    %c0_1 = arith.constant 0 : index
    %c0_2 = arith.constant 0 : index
    %3 = vector.load %arg2[%c0_1, %c0_2] : memref<8x128xf32, #tpu.memory_space<vmem>>, vector<8x128xf32>
    tpu.vector_store %arg2[%c0_1, %c0_2], %2 {strides = array<i32>} : memref<8x128xf32, #tpu.memory_space<vmem>>, vector<8x128xf32>,
    return
  }
  func.func @transform_0(%arg0: i32) -> (i32, i32) {
    %c0_i32 = arith.constant 0 : i32
    %c0_i32_0 = arith.constant 0 : i32
    %c0_i32_1 = arith.constant 0 : i32
    return %c0_i32, %c0_i32_0 : i32, i32
  }
  func.func @transform_1(%arg0: i32) -> (i32, i32) {
    %c0_i32 = arith.constant 0 : i32
    %c0_i32_0 = arith.constant 0 : i32
    %c0_i32_1 = arith.constant 0 : i32
    return %c0_i32, %c0_i32_0 : i32, i32
  }
}

module attributes {stable_mosaic.version = 11 : i64} {
  func.func @_mha_kernel(%arg0: i32, %arg1: i32, %arg2: memref<1x1x8x8xbf16, #tpu.memory_space<vmem>>, %arg3: memref<1x1x8x8xbf16, #tpu.memory_space<vmem>>, %arg4: memref<1x1x8x8xbf16, #tpu.memory_space<vmem>>, %arg5: memref<1x1x8x8xbf16, #tpu.memory_space<vmem>>) attributes {dimension_semantics = [#tpu.dimension_semantics<parallel>, #tpu.dimension_semantics<parallel>], iteration_bounds = array<i64: 2, 4>, scalar_prefetch = 0 : i64, scratch_operands = 0 : i64, tpu.core_type = #tpu.core_type<tc>, window_params = [{transform_indices = @transform_0, window_bounds = array<i64: 1, 1, 8, 8>}, {transform_indices = @transform_1, window_bounds = array<i64: 1, 1, 8, 8>}, {transform_indices = @transform_2, window_bounds = array<i64: 1, 1, 8, 8>}, {transform_indices = @transform_3, window_bounds = array<i64: 1, 1, 8, 8>}]} {
    %c0 = arith.constant 0 : index
    %c0_0 = arith.constant 0 : index
    %c0_1 = arith.constant 0 : index
    %c0_2 = arith.constant 0 : index
    %0 = vector.load %arg2[%c0, %c0_0, %c0_1, %c0_2] : memref<1x1x8x8xbf16, #tpu.memory_space<vmem>>, vector<1x1x8x8xbf16>
    %1 = vector.shape_cast %0 : vector<1x1x8x8xbf16> to vector<8x8xbf16>
    %c0_3 = arith.constant 0 : index
    %c0_4 = arith.constant 0 : index
    %c0_5 = arith.constant 0 : index
    %c0_6 = arith.constant 0 : index
    %2 = vector.load %arg3[%c0_3, %c0_4, %c0_5, %c0_6] : memref<1x1x8x8xbf16, #tpu.memory_space<vmem>>, vector<1x1x8x8xbf16>
    %3 = vector.shape_cast %2 : vector<1x1x8x8xbf16> to vector<8x8xbf16>
    %c0_7 = arith.constant 0 : index
    %c0_8 = arith.constant 0 : index
    %c0_9 = arith.constant 0 : index
    %c0_10 = arith.constant 0 : index
    %4 = vector.load %arg4[%c0_7, %c0_8, %c0_9, %c0_10] : memref<1x1x8x8xbf16, #tpu.memory_space<vmem>>, vector<1x1x8x8xbf16>
    %5 = vector.shape_cast %4 : vector<1x1x8x8xbf16> to vector<8x8xbf16>
    %cst = arith.constant dense<0.000000e+00> : vector<8x8xf32>
    %6 = tpu.matmul %1, %3, %cst {dimension_numbers = #tpu.dot_dimension_numbers<[1], [1], [0], [0], [0, 0, 1, 0], [], []>} : vector<8x8xbf16>, vector<8x8xbf16>, vector<8x8xf32> -> vector<8x8xf32>
    %cst_11 = arith.constant 0.353553385 : f32
    %7 = vector.broadcast %cst_11 : f32 to vector<8x8xf32>
    %8 = arith.mulf %6, %7 : vector<8x8xf32>
    %cst_12 = arith.constant dense<0xFF800000> : vector<8xf32>
    %9 = vector.multi_reduction <maximumf>, %8, %cst_12 [1] : vector<8x8xf32> to vector<8xf32>
    %10 = vector.shape_cast %9 : vector<8xf32> to vector<8x1xf32>
    %11 = vector.broadcast %10 : vector<8x1xf32> to vector<8x8xf32>
    %12 = arith.subf %8, %11 : vector<8x8xf32>
    %13 = math.exp %12 : vector<8x8xf32>
    %cst_13 = arith.constant dense<0.000000e+00> : vector<8xf32>
    %14 = vector.multi_reduction <add>, %13, %cst_13 [1] : vector<8x8xf32> to vector<8xf32>
    %15 = vector.shape_cast %14 : vector<8xf32> to vector<8x1xf32>
    %16 = tpu.reciprocal %15 {approx = true} : vector<8x1xf32> -> vector<8x1xf32>
    %17 = vector.broadcast %16 : vector<8x1xf32> to vector<8x8xf32>
    %18 = arith.mulf %13, %17 : vector<8x8xf32>
    %19 = arith.truncf %18 : vector<8x8xf32> to vector<8x8xbf16>
    %cst_14 = arith.constant dense<0.000000e+00> : vector<8x8xf32>
    %20 = tpu.matmul %19, %5, %cst_14 {dimension_numbers = #tpu.dot_dimension_numbers<[1], [0], [0], [1], [0, 0, 1, 1], [], []>} : vector<8x8xbf16>, vector<8x8xbf16>, vector<8x8xf32> -> vector<8x8xf32>
    %21 = arith.truncf %20 : vector<8x8xf32> to vector<8x8xbf16>
    %c0_15 = arith.constant 0 : index
    %c0_16 = arith.constant 0 : index
    %c0_17 = arith.constant 0 : index
    %c0_18 = arith.constant 0 : index
    %22 = vector.load %arg5[%c0_15, %c0_16, %c0_17, %c0_18] : memref<1x1x8x8xbf16, #tpu.memory_space<vmem>>, vector<1x1x8x8xbf16>
    %23 = vector.shape_cast %22 : vector<1x1x8x8xbf16> to vector<8x8xbf16>
    %24 = vector.shape_cast %21 : vector<8x8xbf16> to vector<1x1x8x8xbf16>
    tpu.vector_store %arg5[%c0_15, %c0_16, %c0_17, %c0_18], %24 {strides = array<i32>} : memref<1x1x8x8xbf16, #tpu.memory_space<vmem>>, vector<1x1x8x8xbf16>,
    return
  }
  func.func @transform_0(%arg0: i32, %arg1: i32) -> (i32, i32, i32, i32) {
    %c0_i32 = arith.constant 0 : i32
    %c0_i32_0 = arith.constant 0 : i32
    %c0_i32_1 = arith.constant 0 : i32
    return %arg0, %arg1, %c0_i32, %c0_i32_0 : i32, i32, i32, i32
  }
  func.func @transform_1(%arg0: i32, %arg1: i32) -> (i32, i32, i32, i32) {
    %c0_i32 = arith.constant 0 : i32
    %c0_i32_0 = arith.constant 0 : i32
    %c0_i32_1 = arith.constant 0 : i32
    return %arg0, %arg1, %c0_i32, %c0_i32_0 : i32, i32, i32, i32
  }
  func.func @transform_2(%arg0: i32, %arg1: i32) -> (i32, i32, i32, i32) {
    %c0_i32 = arith.constant 0 : i32
    %c0_i32_0 = arith.constant 0 : i32
    %c0_i32_1 = arith.constant 0 : i32
    return %arg0, %arg1, %c0_i32, %c0_i32_0 : i32, i32, i32, i32
  }
  func.func @transform_3(%arg0: i32, %arg1: i32) -> (i32, i32, i32, i32) {
    %c0_i32 = arith.constant 0 : i32
    %c0_i32_0 = arith.constant 0 : i32
    %c0_i32_1 = arith.constant 0 : i32
    return %arg0, %arg1, %c0_i32, %c0_i32_0 : i32, i32, i32, i32
  }
}

module attributes {stable_mosaic.version = 11 : i64} {
  func.func @_add_ln_linear_kernel(%arg0: i32, %arg1: memref<8x32xf32, #tpu.memory_space<vmem>>, %arg2: memref<8x32xf32, #tpu.memory_space<vmem>>, %arg3: memref<1x32xf32, #tpu.memory_space<vmem>>, %arg4: memref<1x32xf32, #tpu.memory_space<vmem>>, %arg5: memref<32x96xbf16, #tpu.memory_space<vmem>>, %arg6: memref<1x96xf32, #tpu.memory_space<vmem>>, %arg7: memref<8x32xf32, #tpu.memory_space<vmem>>, %arg8: memref<8x96xbf16, #tpu.memory_space<vmem>>) attributes {dimension_semantics = [#tpu.dimension_semantics<parallel>], iteration_bounds = array<i64: 2>, scalar_prefetch = 0 : i64, scratch_operands = 0 : i64, tpu.core_type = #tpu.core_type<tc>, window_params = [{transform_indices = @transform_0, window_bounds = array<i64: 8, 32>}, {transform_indices = @transform_1, window_bounds = array<i64: 8, 32>}, {pipeline_mode = #tpu.pipeline_mode<synchronous>, transform_indices = @transform_2, window_bounds = array<i64: 1, 32>}, {pipeline_mode = #tpu.pipeline_mode<synchronous>, transform_indices = @transform_3, window_bounds = array<i64: 1, 32>}, {pipeline_mode = #tpu.pipeline_mode<synchronous>, transform_indices = @transform_4, window_bounds = array<i64: 32, 96>}, {pipeline_mode = #tpu.pipeline_mode<synchronous>, transform_indices = @transform_5, window_bounds = array<i64: 1, 96>}, {transform_indices = @transform_6, window_bounds = array<i64: 8, 32>}, {transform_indices = @transform_7, window_bounds = array<i64: 8, 96>}]} {
    %c0 = arith.constant 0 : index
    %c0_0 = arith.constant 0 : index
    %0 = vector.load %arg1[%c0, %c0_0] : memref<8x32xf32, #tpu.memory_space<vmem>>, vector<8x32xf32>
    %c0_1 = arith.constant 0 : index
    %c0_2 = arith.constant 0 : index
    %1 = vector.load %arg2[%c0_1, %c0_2] : memref<8x32xf32, #tpu.memory_space<vmem>>, vector<8x32xf32>
    %2 = arith.addf %0, %1 : vector<8x32xf32>
    %c0_3 = arith.constant 0 : index
    %c0_4 = arith.constant 0 : index
    %3 = vector.load %arg3[%c0_3, %c0_4] : memref<1x32xf32, #tpu.memory_space<vmem>>, vector<1x32xf32>
    %c0_5 = arith.constant 0 : index
    %c0_6 = arith.constant 0 : index
    %4 = vector.load %arg4[%c0_5, %c0_6] : memref<1x32xf32, #tpu.memory_space<vmem>>, vector<1x32xf32>
    %cst = arith.constant dense<0.000000e+00> : vector<8xf32>
    %5 = vector.multi_reduction <add>, %2, %cst [1] : vector<8x32xf32> to vector<8xf32>
    %6 = vector.shape_cast %5 : vector<8xf32> to vector<8x1xf32>
    %cst_7 = arith.constant 3.200000e+01 : f32
    %7 = vector.broadcast %cst_7 : f32 to vector<8x1xf32>
    %8 = arith.divf %6, %7 : vector<8x1xf32>
    %9 = vector.broadcast %8 : vector<8x1xf32> to vector<8x32xf32>
    %10 = arith.subf %2, %9 : vector<8x32xf32>
    %11 = arith.mulf %10, %10 : vector<8x32xf32>
    %cst_8 = arith.constant dense<0.000000e+00> : vector<8xf32>
    %12 = vector.multi_reduction <add>, %11, %cst_8 [1] : vector<8x32xf32> to vector<8xf32>
    %13 = vector.shape_cast %12 : vector<8xf32> to vector<8x1xf32>
    %cst_9 = arith.constant 3.200000e+01 : f32
    %14 = vector.broadcast %cst_9 : f32 to vector<8x1xf32>
    %15 = arith.divf %13, %14 : vector<8x1xf32>
    %cst_10 = arith.constant 9.99999974E-6 : f32
    %16 = vector.broadcast %cst_10 : f32 to vector<8x1xf32>
    %17 = arith.addf %15, %16 : vector<8x1xf32>
    %18 = math.rsqrt %17 : vector<8x1xf32>
    %19 = vector.broadcast %18 : vector<8x1xf32> to vector<8x32xf32>
    %20 = arith.mulf %10, %19 : vector<8x32xf32>
    %21 = vector.broadcast %3 : vector<1x32xf32> to vector<8x32xf32>
    %22 = arith.mulf %20, %21 : vector<8x32xf32>
    %23 = vector.broadcast %4 : vector<1x32xf32> to vector<8x32xf32>
    %24 = arith.addf %22, %23 : vector<8x32xf32>
    %c0_11 = arith.constant 0 : index
    %c0_12 = arith.constant 0 : index
    %25 = vector.load %arg7[%c0_11, %c0_12] : memref<8x32xf32, #tpu.memory_space<vmem>>, vector<8x32xf32>
    tpu.vector_store %arg7[%c0_11, %c0_12], %24 {strides = array<i32>} : memref<8x32xf32, #tpu.memory_space<vmem>>, vector<8x32xf32>,
    %c0_13 = arith.constant 0 : index
    %c0_14 = arith.constant 0 : index
    %26 = vector.load %arg5[%c0_13, %c0_14] : memref<32x96xbf16, #tpu.memory_space<vmem>>, vector<32x96xbf16>
    %27 = arith.truncf %24 : vector<8x32xf32> to vector<8x32xbf16>
    %cst_15 = arith.constant dense<0.000000e+00> : vector<8x96xf32>
    %28 = tpu.matmul %27, %26, %cst_15 {dimension_numbers = #tpu.dot_dimension_numbers<[1], [0], [0], [1], [0, 0, 1, 1], [], []>} : vector<8x32xbf16>, vector<32x96xbf16>, vector<8x96xf32> -> vector<8x96xf32>
    %c0_16 = arith.constant 0 : index
    %c0_17 = arith.constant 0 : index
    %29 = vector.load %arg6[%c0_16, %c0_17] : memref<1x96xf32, #tpu.memory_space<vmem>>, vector<1x96xf32>
    %30 = vector.broadcast %29 : vector<1x96xf32> to vector<8x96xf32>
    %31 = arith.addf %28, %30 : vector<8x96xf32>
    %32 = arith.truncf %31 : vector<8x96xf32> to vector<8x96xbf16>
    %c0_18 = arith.constant 0 : index
    %c0_19 = arith.constant 0 : index
    %33 = vector.load %arg8[%c0_18, %c0_19] : memref<8x96xbf16, #tpu.memory_space<vmem>>, vector<8x96xbf16>
    tpu.vector_store %arg8[%c0_18, %c0_19], %32 {strides = array<i32>} : memref<8x96xbf16, #tpu.memory_space<vmem>>, vector<8x96xbf16>,
    return
  }
  func.func @transform_0(%arg0: i32) -> (i32, i32) {
    %c0_i32 = arith.constant 0 : i32
    %c0_i32_0 = arith.constant 0 : i32
    return %arg0, %c0_i32 : i32, i32
  }
  func.func @transform_1(%arg0: i32) -> (i32, i32) {
    %c0_i32 = arith.constant 0 : i32
    %c0_i32_0 = arith.constant 0 : i32
    return %arg0, %c0_i32 : i32, i32
  }
  func.func @transform_2(%arg0: i32) -> (i32, i32) {
    %c0_i32 = arith.constant 0 : i32
    %c0_i32_0 = arith.constant 0 : i32
    %c0_i32_1 = arith.constant 0 : i32
    return %c0_i32, %c0_i32_0 : i32, i32
  }
  func.func @transform_3(%arg0: i32) -> (i32, i32) {
    %c0_i32 = arith.constant 0 : i32
    %c0_i32_0 = arith.constant 0 : i32
    %c0_i32_1 = arith.constant 0 : i32
    return %c0_i32, %c0_i32_0 : i32, i32
  }
  func.func @transform_4(%arg0: i32) -> (i32, i32) {
    %c0_i32 = arith.constant 0 : i32
    %c0_i32_0 = arith.constant 0 : i32
    %c0_i32_1 = arith.constant 0 : i32
    return %c0_i32, %c0_i32_0 : i32, i32
  }
  func.func @transform_5(%arg0: i32) -> (i32, i32) {
    %c0_i32 = arith.constant 0 : i32
    %c0_i32_0 = arith.constant 0 : i32
    %c0_i32_1 = arith.constant 0 : i32
    return %c0_i32, %c0_i32_0 : i32, i32
  }
  func.func @transform_6(%arg0: i32) -> (i32, i32) {
    %c0_i32 = arith.constant 0 : i32
    %c0_i32_0 = arith.constant 0 : i32
    return %arg0, %c0_i32 : i32, i32
  }
  func.func @transform_7(%arg0: i32) -> (i32, i32) {
    %c0_i32 = arith.constant 0 : i32
    %c0_i32_0 = arith.constant 0 : i32
    return %arg0, %c0_i32 : i32, i32
  }
}

module attributes {stable_mosaic.version = 11 : i64} {
  func.func @_out_ln_qproj_kernel(%arg0: i32, %arg1: memref<8x32xbf16, #tpu.memory_space<vmem>>, %arg2: memref<32x32xbf16, #tpu.memory_space<vmem>>, %arg3: memref<1x32xf32, #tpu.memory_space<vmem>>, %arg4: memref<8x32xf32, #tpu.memory_space<vmem>>, %arg5: memref<1x32xf32, #tpu.memory_space<vmem>>, %arg6: memref<1x32xf32, #tpu.memory_space<vmem>>, %arg7: memref<32x32xbf16, #tpu.memory_space<vmem>>, %arg8: memref<1x32xf32, #tpu.memory_space<vmem>>, %arg9: memref<8x32xf32, #tpu.memory_space<vmem>>, %arg10: memref<8x32xbf16, #tpu.memory_space<vmem>>) attributes {dimension_semantics = [#tpu.dimension_semantics<parallel>], iteration_bounds = array<i64: 2>, scalar_prefetch = 0 : i64, scratch_operands = 0 : i64, tpu.core_type = #tpu.core_type<tc>, window_params = [{transform_indices = @transform_0, window_bounds = array<i64: 8, 32>}, {pipeline_mode = #tpu.pipeline_mode<synchronous>, transform_indices = @transform_1, window_bounds = array<i64: 32, 32>}, {pipeline_mode = #tpu.pipeline_mode<synchronous>, transform_indices = @transform_2, window_bounds = array<i64: 1, 32>}, {transform_indices = @transform_3, window_bounds = array<i64: 8, 32>}, {pipeline_mode = #tpu.pipeline_mode<synchronous>, transform_indices = @transform_4, window_bounds = array<i64: 1, 32>}, {pipeline_mode = #tpu.pipeline_mode<synchronous>, transform_indices = @transform_5, window_bounds = array<i64: 1, 32>}, {pipeline_mode = #tpu.pipeline_mode<synchronous>, transform_indices = @transform_6, window_bounds = array<i64: 32, 32>}, {pipeline_mode = #tpu.pipeline_mode<synchronous>, transform_indices = @transform_7, window_bounds = array<i64: 1, 32>}, {transform_indices = @transform_8, window_bounds = array<i64: 8, 32>}, {transform_indices = @transform_9, window_bounds = array<i64: 8, 32>}]} {
    %c0 = arith.constant 0 : index
    %c0_0 = arith.constant 0 : index
    %0 = vector.load %arg1[%c0, %c0_0] : memref<8x32xbf16, #tpu.memory_space<vmem>>, vector<8x32xbf16>
    %c0_1 = arith.constant 0 : index
    %c0_2 = arith.constant 0 : index
    %1 = vector.load %arg2[%c0_1, %c0_2] : memref<32x32xbf16, #tpu.memory_space<vmem>>, vector<32x32xbf16>
    %cst = arith.constant dense<0.000000e+00> : vector<8x32xf32>
    %2 = tpu.matmul %0, %1, %cst {dimension_numbers = #tpu.dot_dimension_numbers<[1], [0], [0], [1], [0, 0, 1, 1], [], []>} : vector<8x32xbf16>, vector<32x32xbf16>, vector<8x32xf32> -> vector<8x32xf32>
    %c0_3 = arith.constant 0 : index
    %c0_4 = arith.constant 0 : index
    %3 = vector.load %arg3[%c0_3, %c0_4] : memref<1x32xf32, #tpu.memory_space<vmem>>, vector<1x32xf32>
    %4 = vector.broadcast %3 : vector<1x32xf32> to vector<8x32xf32>
    %5 = arith.addf %2, %4 : vector<8x32xf32>
    %c0_5 = arith.constant 0 : index
    %c0_6 = arith.constant 0 : index
    %6 = vector.load %arg4[%c0_5, %c0_6] : memref<8x32xf32, #tpu.memory_space<vmem>>, vector<8x32xf32>
    %7 = arith.addf %6, %5 : vector<8x32xf32>
    %c0_7 = arith.constant 0 : index
    %c0_8 = arith.constant 0 : index
    %8 = vector.load %arg5[%c0_7, %c0_8] : memref<1x32xf32, #tpu.memory_space<vmem>>, vector<1x32xf32>
    %c0_9 = arith.constant 0 : index
    %c0_10 = arith.constant 0 : index
    %9 = vector.load %arg6[%c0_9, %c0_10] : memref<1x32xf32, #tpu.memory_space<vmem>>, vector<1x32xf32>
    %cst_11 = arith.constant dense<0.000000e+00> : vector<8xf32>
    %10 = vector.multi_reduction <add>, %7, %cst_11 [1] : vector<8x32xf32> to vector<8xf32>
    %11 = vector.shape_cast %10 : vector<8xf32> to vector<8x1xf32>
    %cst_12 = arith.constant 3.200000e+01 : f32
    %12 = vector.broadcast %cst_12 : f32 to vector<8x1xf32>
    %13 = arith.divf %11, %12 : vector<8x1xf32>
    %14 = vector.broadcast %13 : vector<8x1xf32> to vector<8x32xf32>
    %15 = arith.subf %7, %14 : vector<8x32xf32>
    %16 = arith.mulf %15, %15 : vector<8x32xf32>
    %cst_13 = arith.constant dense<0.000000e+00> : vector<8xf32>
    %17 = vector.multi_reduction <add>, %16, %cst_13 [1] : vector<8x32xf32> to vector<8xf32>
    %18 = vector.shape_cast %17 : vector<8xf32> to vector<8x1xf32>
    %cst_14 = arith.constant 3.200000e+01 : f32
    %19 = vector.broadcast %cst_14 : f32 to vector<8x1xf32>
    %20 = arith.divf %18, %19 : vector<8x1xf32>
    %cst_15 = arith.constant 9.99999974E-6 : f32
    %21 = vector.broadcast %cst_15 : f32 to vector<8x1xf32>
    %22 = arith.addf %20, %21 : vector<8x1xf32>
    %23 = math.rsqrt %22 : vector<8x1xf32>
    %24 = vector.broadcast %23 : vector<8x1xf32> to vector<8x32xf32>
    %25 = arith.mulf %15, %24 : vector<8x32xf32>
    %26 = vector.broadcast %8 : vector<1x32xf32> to vector<8x32xf32>
    %27 = arith.mulf %25, %26 : vector<8x32xf32>
    %28 = vector.broadcast %9 : vector<1x32xf32> to vector<8x32xf32>
    %29 = arith.addf %27, %28 : vector<8x32xf32>
    %c0_16 = arith.constant 0 : index
    %c0_17 = arith.constant 0 : index
    %30 = vector.load %arg9[%c0_16, %c0_17] : memref<8x32xf32, #tpu.memory_space<vmem>>, vector<8x32xf32>
    tpu.vector_store %arg9[%c0_16, %c0_17], %29 {strides = array<i32>} : memref<8x32xf32, #tpu.memory_space<vmem>>, vector<8x32xf32>,
    %c0_18 = arith.constant 0 : index
    %c0_19 = arith.constant 0 : index
    %31 = vector.load %arg7[%c0_18, %c0_19] : memref<32x32xbf16, #tpu.memory_space<vmem>>, vector<32x32xbf16>
    %32 = arith.truncf %29 : vector<8x32xf32> to vector<8x32xbf16>
    %cst_20 = arith.constant dense<0.000000e+00> : vector<8x32xf32>
    %33 = tpu.matmul %32, %31, %cst_20 {dimension_numbers = #tpu.dot_dimension_numbers<[1], [0], [0], [1], [0, 0, 1, 1], [], []>} : vector<8x32xbf16>, vector<32x32xbf16>, vector<8x32xf32> -> vector<8x32xf32>
    %c0_21 = arith.constant 0 : index
    %c0_22 = arith.constant 0 : index
    %34 = vector.load %arg8[%c0_21, %c0_22] : memref<1x32xf32, #tpu.memory_space<vmem>>, vector<1x32xf32>
    %35 = vector.broadcast %34 : vector<1x32xf32> to vector<8x32xf32>
    %36 = arith.addf %33, %35 : vector<8x32xf32>
    %37 = arith.truncf %36 : vector<8x32xf32> to vector<8x32xbf16>
    %c0_23 = arith.constant 0 : index
    %c0_24 = arith.constant 0 : index
    %38 = vector.load %arg10[%c0_23, %c0_24] : memref<8x32xbf16, #tpu.memory_space<vmem>>, vector<8x32xbf16>
    tpu.vector_store %arg10[%c0_23, %c0_24], %37 {strides = array<i32>} : memref<8x32xbf16, #tpu.memory_space<vmem>>, vector<8x32xbf16>,
    return
  }
  func.func @transform_0(%arg0: i32) -> (i32, i32) {
    %c0_i32 = arith.constant 0 : i32
    %c0_i32_0 = arith.constant 0 : i32
    return %arg0, %c0_i32 : i32, i32
  }
  func.func @transform_1(%arg0: i32) -> (i32, i32) {
    %c0_i32 = arith.constant 0 : i32
    %c0_i32_0 = arith.constant 0 : i32
    %c0_i32_1 = arith.constant 0 : i32
    return %c0_i32, %c0_i32_0 : i32, i32
  }
  func.func @transform_2(%arg0: i32) -> (i32, i32) {
    %c0_i32 = arith.constant 0 : i32
    %c0_i32_0 = arith.constant 0 : i32
    %c0_i32_1 = arith.constant 0 : i32
    return %c0_i32, %c0_i32_0 : i32, i32
  }
  func.func @transform_3(%arg0: i32) -> (i32, i32) {
    %c0_i32 = arith.constant 0 : i32
    %c0_i32_0 = arith.constant 0 : i32
    return %arg0, %c0_i32 : i32, i32
  }
  func.func @transform_4(%arg0: i32) -> (i32, i32) {
    %c0_i32 = arith.constant 0 : i32
    %c0_i32_0 = arith.constant 0 : i32
    %c0_i32_1 = arith.constant 0 : i32
    return %c0_i32, %c0_i32_0 : i32, i32
  }
  func.func @transform_5(%arg0: i32) -> (i32, i32) {
    %c0_i32 = arith.constant 0 : i32
    %c0_i32_0 = arith.constant 0 : i32
    %c0_i32_1 = arith.constant 0 : i32
    return %c0_i32, %c0_i32_0 : i32, i32
  }
  func.func @transform_6(%arg0: i32) -> (i32, i32) {
    %c0_i32 = arith.constant 0 : i32
    %c0_i32_0 = arith.constant 0 : i32
    %c0_i32_1 = arith.constant 0 : i32
    return %c0_i32, %c0_i32_0 : i32, i32
  }
  func.func @transform_7(%arg0: i32) -> (i32, i32) {
    %c0_i32 = arith.constant 0 : i32
    %c0_i32_0 = arith.constant 0 : i32
    %c0_i32_1 = arith.constant 0 : i32
    return %c0_i32, %c0_i32_0 : i32, i32
  }
  func.func @transform_8(%arg0: i32) -> (i32, i32) {
    %c0_i32 = arith.constant 0 : i32
    %c0_i32_0 = arith.constant 0 : i32
    return %arg0, %c0_i32 : i32, i32
  }
  func.func @transform_9(%arg0: i32) -> (i32, i32) {
    %c0_i32 = arith.constant 0 : i32
    %c0_i32_0 = arith.constant 0 : i32
    return %arg0, %c0_i32 : i32, i32
  }
}

module attributes {stable_mosaic.version = 11 : i64} {
  func.func @_ln_kernel(%arg0: i32, %arg1: memref<16x32xf32, #tpu.memory_space<vmem>>, %arg2: memref<1x32xf32, #tpu.memory_space<vmem>>, %arg3: memref<1x32xf32, #tpu.memory_space<vmem>>, %arg4: memref<16x32xbf16, #tpu.memory_space<vmem>>) attributes {dimension_semantics = [#tpu.dimension_semantics<parallel>], iteration_bounds = array<i64: 2>, scalar_prefetch = 0 : i64, scratch_operands = 0 : i64, tpu.core_type = #tpu.core_type<tc>, window_params = [{transform_indices = @transform_0, window_bounds = array<i64: 16, 32>}, {pipeline_mode = #tpu.pipeline_mode<synchronous>, transform_indices = @transform_1, window_bounds = array<i64: 1, 32>}, {pipeline_mode = #tpu.pipeline_mode<synchronous>, transform_indices = @transform_2, window_bounds = array<i64: 1, 32>}, {transform_indices = @transform_3, window_bounds = array<i64: 16, 32>}]} {
    %c0 = arith.constant 0 : index
    %c0_0 = arith.constant 0 : index
    %0 = vector.load %arg1[%c0, %c0_0] : memref<16x32xf32, #tpu.memory_space<vmem>>, vector<16x32xf32>
    %c0_1 = arith.constant 0 : index
    %c0_2 = arith.constant 0 : index
    %1 = vector.load %arg2[%c0_1, %c0_2] : memref<1x32xf32, #tpu.memory_space<vmem>>, vector<1x32xf32>
    %c0_3 = arith.constant 0 : index
    %c0_4 = arith.constant 0 : index
    %2 = vector.load %arg3[%c0_3, %c0_4] : memref<1x32xf32, #tpu.memory_space<vmem>>, vector<1x32xf32>
    %cst = arith.constant dense<0.000000e+00> : vector<16xf32>
    %3 = vector.multi_reduction <add>, %0, %cst [1] : vector<16x32xf32> to vector<16xf32>
    %4 = vector.shape_cast %3 : vector<16xf32> to vector<16x1xf32>
    %cst_5 = arith.constant 3.200000e+01 : f32
    %5 = vector.broadcast %cst_5 : f32 to vector<16x1xf32>
    %6 = arith.divf %4, %5 : vector<16x1xf32>
    %7 = vector.broadcast %6 : vector<16x1xf32> to vector<16x32xf32>
    %8 = arith.subf %0, %7 : vector<16x32xf32>
    %9 = arith.mulf %8, %8 : vector<16x32xf32>
    %cst_6 = arith.constant dense<0.000000e+00> : vector<16xf32>
    %10 = vector.multi_reduction <add>, %9, %cst_6 [1] : vector<16x32xf32> to vector<16xf32>
    %11 = vector.shape_cast %10 : vector<16xf32> to vector<16x1xf32>
    %cst_7 = arith.constant 3.200000e+01 : f32
    %12 = vector.broadcast %cst_7 : f32 to vector<16x1xf32>
    %13 = arith.divf %11, %12 : vector<16x1xf32>
    %cst_8 = arith.constant 9.99999974E-6 : f32
    %14 = vector.broadcast %cst_8 : f32 to vector<16x1xf32>
    %15 = arith.addf %13, %14 : vector<16x1xf32>
    %16 = math.rsqrt %15 : vector<16x1xf32>
    %17 = vector.broadcast %16 : vector<16x1xf32> to vector<16x32xf32>
    %18 = arith.mulf %8, %17 : vector<16x32xf32>
    %19 = vector.broadcast %1 : vector<1x32xf32> to vector<16x32xf32>
    %20 = arith.mulf %18, %19 : vector<16x32xf32>
    %21 = vector.broadcast %2 : vector<1x32xf32> to vector<16x32xf32>
    %22 = arith.addf %20, %21 : vector<16x32xf32>
    %23 = arith.truncf %22 : vector<16x32xf32> to vector<16x32xbf16>
    %c0_9 = arith.constant 0 : index
    %c0_10 = arith.constant 0 : index
    %24 = vector.load %arg4[%c0_9, %c0_10] : memref<16x32xbf16, #tpu.memory_space<vmem>>, vector<16x32xbf16>
    tpu.vector_store %arg4[%c0_9, %c0_10], %23 {strides = array<i32>} : memref<16x32xbf16, #tpu.memory_space<vmem>>, vector<16x32xbf16>,
    return
  }
  func.func @transform_0(%arg0: i32) -> (i32, i32) {
    %c0_i32 = arith.constant 0 : i32
    %c0_i32_0 = arith.constant 0 : i32
    return %arg0, %c0_i32 : i32, i32
  }
  func.func @transform_1(%arg0: i32) -> (i32, i32) {
    %c0_i32 = arith.constant 0 : i32
    %c0_i32_0 = arith.constant 0 : i32
    %c0_i32_1 = arith.constant 0 : i32
    return %c0_i32, %c0_i32_0 : i32, i32
  }
  func.func @transform_2(%arg0: i32) -> (i32, i32) {
    %c0_i32 = arith.constant 0 : i32
    %c0_i32_0 = arith.constant 0 : i32
    %c0_i32_1 = arith.constant 0 : i32
    return %c0_i32, %c0_i32_0 : i32, i32
  }
  func.func @transform_3(%arg0: i32) -> (i32, i32) {
    %c0_i32 = arith.constant 0 : i32
    %c0_i32_0 = arith.constant 0 : i32
    return %arg0, %c0_i32 : i32, i32
  }
}

module attributes {stable_mosaic.version = 11 : i64} {
  func.func @_linear_kernel(%arg0: i32, %arg1: memref<16x32xbf16, #tpu.memory_space<vmem>>, %arg2: memref<32x64xbf16, #tpu.memory_space<vmem>>, %arg3: memref<1x64xf32, #tpu.memory_space<vmem>>, %arg4: memref<16x64xbf16, #tpu.memory_space<vmem>>) attributes {dimension_semantics = [#tpu.dimension_semantics<parallel>], iteration_bounds = array<i64: 2>, scalar_prefetch = 0 : i64, scratch_operands = 0 : i64, tpu.core_type = #tpu.core_type<tc>, window_params = [{transform_indices = @transform_0, window_bounds = array<i64: 16, 32>}, {pipeline_mode = #tpu.pipeline_mode<synchronous>, transform_indices = @transform_1, window_bounds = array<i64: 32, 64>}, {pipeline_mode = #tpu.pipeline_mode<synchronous>, transform_indices = @transform_2, window_bounds = array<i64: 1, 64>}, {transform_indices = @transform_3, window_bounds = array<i64: 16, 64>}]} {
    %c0 = arith.constant 0 : index
    %c0_0 = arith.constant 0 : index
    %0 = vector.load %arg1[%c0, %c0_0] : memref<16x32xbf16, #tpu.memory_space<vmem>>, vector<16x32xbf16>
    %c0_1 = arith.constant 0 : index
    %c0_2 = arith.constant 0 : index
    %1 = vector.load %arg2[%c0_1, %c0_2] : memref<32x64xbf16, #tpu.memory_space<vmem>>, vector<32x64xbf16>
    %cst = arith.constant dense<0.000000e+00> : vector<16x64xf32>
    %2 = tpu.matmul %0, %1, %cst {dimension_numbers = #tpu.dot_dimension_numbers<[1], [0], [0], [1], [0, 0, 1, 1], [], []>} : vector<16x32xbf16>, vector<32x64xbf16>, vector<16x64xf32> -> vector<16x64xf32>
    %c0_3 = arith.constant 0 : index
    %c0_4 = arith.constant 0 : index
    %3 = vector.load %arg3[%c0_3, %c0_4] : memref<1x64xf32, #tpu.memory_space<vmem>>, vector<1x64xf32>
    %4 = vector.broadcast %3 : vector<1x64xf32> to vector<16x64xf32>
    %5 = arith.addf %2, %4 : vector<16x64xf32>
    %6 = arith.truncf %5 : vector<16x64xf32> to vector<16x64xbf16>
    %c0_5 = arith.constant 0 : index
    %c0_6 = arith.constant 0 : index
    %7 = vector.load %arg4[%c0_5, %c0_6] : memref<16x64xbf16, #tpu.memory_space<vmem>>, vector<16x64xbf16>
    tpu.vector_store %arg4[%c0_5, %c0_6], %6 {strides = array<i32>} : memref<16x64xbf16, #tpu.memory_space<vmem>>, vector<16x64xbf16>,
    return
  }
  func.func @transform_0(%arg0: i32) -> (i32, i32) {
    %c0_i32 = arith.constant 0 : i32
    %c0_i32_0 = arith.constant 0 : i32
    return %arg0, %c0_i32 : i32, i32
  }
  func.func @transform_1(%arg0: i32) -> (i32, i32) {
    %c0_i32 = arith.constant 0 : i32
    %c0_i32_0 = arith.constant 0 : i32
    %c0_i32_1 = arith.constant 0 : i32
    return %c0_i32, %c0_i32_0 : i32, i32
  }
  func.func @transform_2(%arg0: i32) -> (i32, i32) {
    %c0_i32 = arith.constant 0 : i32
    %c0_i32_0 = arith.constant 0 : i32
    %c0_i32_1 = arith.constant 0 : i32
    return %c0_i32, %c0_i32_0 : i32, i32
  }
  func.func @transform_3(%arg0: i32) -> (i32, i32) {
    %c0_i32 = arith.constant 0 : i32
    %c0_i32_0 = arith.constant 0 : i32
    return %arg0, %c0_i32 : i32, i32
  }
}

module attributes {stable_mosaic.version = 11 : i64} {
  func.func @_mha_kernel(%arg0: i32, %arg1: i32, %arg2: memref<1x1x8x8xbf16, #tpu.memory_space<vmem>>, %arg3: memref<1x1x8x8xbf16, #tpu.memory_space<vmem>>, %arg4: memref<1x1x8x8xbf16, #tpu.memory_space<vmem>>, %arg5: memref<1x1x8x8xbf16, #tpu.memory_space<vmem>>) attributes {dimension_semantics = [#tpu.dimension_semantics<parallel>, #tpu.dimension_semantics<parallel>], iteration_bounds = array<i64: 4, 4>, scalar_prefetch = 0 : i64, scratch_operands = 0 : i64, tpu.core_type = #tpu.core_type<tc>, window_params = [{transform_indices = @transform_0, window_bounds = array<i64: 1, 1, 8, 8>}, {transform_indices = @transform_1, window_bounds = array<i64: 1, 1, 8, 8>}, {transform_indices = @transform_2, window_bounds = array<i64: 1, 1, 8, 8>}, {transform_indices = @transform_3, window_bounds = array<i64: 1, 1, 8, 8>}]} {
    %c0 = arith.constant 0 : index
    %c0_0 = arith.constant 0 : index
    %c0_1 = arith.constant 0 : index
    %c0_2 = arith.constant 0 : index
    %0 = vector.load %arg2[%c0, %c0_0, %c0_1, %c0_2] : memref<1x1x8x8xbf16, #tpu.memory_space<vmem>>, vector<1x1x8x8xbf16>
    %1 = vector.shape_cast %0 : vector<1x1x8x8xbf16> to vector<8x8xbf16>
    %c0_3 = arith.constant 0 : index
    %c0_4 = arith.constant 0 : index
    %c0_5 = arith.constant 0 : index
    %c0_6 = arith.constant 0 : index
    %2 = vector.load %arg3[%c0_3, %c0_4, %c0_5, %c0_6] : memref<1x1x8x8xbf16, #tpu.memory_space<vmem>>, vector<1x1x8x8xbf16>
    %3 = vector.shape_cast %2 : vector<1x1x8x8xbf16> to vector<8x8xbf16>
    %c0_7 = arith.constant 0 : index
    %c0_8 = arith.constant 0 : index
    %c0_9 = arith.constant 0 : index
    %c0_10 = arith.constant 0 : index
    %4 = vector.load %arg4[%c0_7, %c0_8, %c0_9, %c0_10] : memref<1x1x8x8xbf16, #tpu.memory_space<vmem>>, vector<1x1x8x8xbf16>
    %5 = vector.shape_cast %4 : vector<1x1x8x8xbf16> to vector<8x8xbf16>
    %cst = arith.constant dense<0.000000e+00> : vector<8x8xf32>
    %6 = tpu.matmul %1, %3, %cst {dimension_numbers = #tpu.dot_dimension_numbers<[1], [1], [0], [0], [0, 0, 1, 0], [], []>} : vector<8x8xbf16>, vector<8x8xbf16>, vector<8x8xf32> -> vector<8x8xf32>
    %cst_11 = arith.constant 0.353553385 : f32
    %7 = vector.broadcast %cst_11 : f32 to vector<8x8xf32>
    %8 = arith.mulf %6, %7 : vector<8x8xf32>
    %cst_12 = arith.constant dense<0xFF800000> : vector<8xf32>
    %9 = vector.multi_reduction <maximumf>, %8, %cst_12 [1] : vector<8x8xf32> to vector<8xf32>
    %10 = vector.shape_cast %9 : vector<8xf32> to vector<8x1xf32>
    %11 = vector.broadcast %10 : vector<8x1xf32> to vector<8x8xf32>
    %12 = arith.subf %8, %11 : vector<8x8xf32>
    %13 = math.exp %12 : vector<8x8xf32>
    %cst_13 = arith.constant dense<0.000000e+00> : vector<8xf32>
    %14 = vector.multi_reduction <add>, %13, %cst_13 [1] : vector<8x8xf32> to vector<8xf32>
    %15 = vector.shape_cast %14 : vector<8xf32> to vector<8x1xf32>
    %16 = tpu.reciprocal %15 {approx = true} : vector<8x1xf32> -> vector<8x1xf32>
    %17 = vector.broadcast %16 : vector<8x1xf32> to vector<8x8xf32>
    %18 = arith.mulf %13, %17 : vector<8x8xf32>
    %19 = arith.truncf %18 : vector<8x8xf32> to vector<8x8xbf16>
    %cst_14 = arith.constant dense<0.000000e+00> : vector<8x8xf32>
    %20 = tpu.matmul %19, %5, %cst_14 {dimension_numbers = #tpu.dot_dimension_numbers<[1], [0], [0], [1], [0, 0, 1, 1], [], []>} : vector<8x8xbf16>, vector<8x8xbf16>, vector<8x8xf32> -> vector<8x8xf32>
    %21 = arith.truncf %20 : vector<8x8xf32> to vector<8x8xbf16>
    %c0_15 = arith.constant 0 : index
    %c0_16 = arith.constant 0 : index
    %c0_17 = arith.constant 0 : index
    %c0_18 = arith.constant 0 : index
    %22 = vector.load %arg5[%c0_15, %c0_16, %c0_17, %c0_18] : memref<1x1x8x8xbf16, #tpu.memory_space<vmem>>, vector<1x1x8x8xbf16>
    %23 = vector.shape_cast %22 : vector<1x1x8x8xbf16> to vector<8x8xbf16>
    %24 = vector.shape_cast %21 : vector<8x8xbf16> to vector<1x1x8x8xbf16>
    tpu.vector_store %arg5[%c0_15, %c0_16, %c0_17, %c0_18], %24 {strides = array<i32>} : memref<1x1x8x8xbf16, #tpu.memory_space<vmem>>, vector<1x1x8x8xbf16>,
    return
  }
  func.func @transform_0(%arg0: i32, %arg1: i32) -> (i32, i32, i32, i32) {
    %c2_i32 = arith.constant 2 : i32
    %c0_i32 = arith.constant 0 : i32
    %0 = arith.cmpi eq, %c2_i32, %c0_i32 : i32
    %c1_i32 = arith.constant 1 : i32
    %1 = arith.select %0, %c1_i32, %c2_i32 : i32
    %2 = arith.remsi %arg0, %1 : i32
    %c0_i32_0 = arith.constant 0 : i32
    %3 = arith.cmpi ne, %2, %c0_i32_0 : i32
    %c0_i32_1 = arith.constant 0 : i32
    %4 = arith.cmpi slt, %2, %c0_i32_1 : i32
    %c0_i32_2 = arith.constant 0 : i32
    %5 = arith.cmpi slt, %1, %c0_i32_2 : i32
    %6 = arith.xori %4, %5 : i1
    %7 = arith.andi %6, %3 : i1
    %8 = arith.addi %2, %1 : i32
    %9 = arith.select %7, %8, %2 : i32
    %c0_i32_3 = arith.constant 0 : i32
    %c0_i32_4 = arith.constant 0 : i32
    %c0_i32_5 = arith.constant 0 : i32
    return %9, %arg1, %c0_i32_3, %c0_i32_4 : i32, i32, i32, i32
  }
  func.func @transform_1(%arg0: i32, %arg1: i32) -> (i32, i32, i32, i32) {
    %c0_i32 = arith.constant 0 : i32
    %c0_i32_0 = arith.constant 0 : i32
    %c0_i32_1 = arith.constant 0 : i32
    return %arg0, %arg1, %c0_i32, %c0_i32_0 : i32, i32, i32, i32
  }
  func.func @transform_2(%arg0: i32, %arg1: i32) -> (i32, i32, i32, i32) {
    %c0_i32 = arith.constant 0 : i32
    %c0_i32_0 = arith.constant 0 : i32
    %c0_i32_1 = arith.constant 0 : i32
    return %arg0, %arg1, %c0_i32, %c0_i32_0 : i32, i32, i32, i32
  }
  func.func @transform_3(%arg0: i32, %arg1: i32) -> (i32, i32, i32, i32) {
    %c0_i32 = arith.constant 0 : i32
    %c0_i32_0 = arith.constant 0 : i32
    %c0_i32_1 = arith.constant 0 : i32
    return %arg0, %arg1, %c0_i32, %c0_i32_0 : i32, i32, i32, i32
  }
}

module attributes {stable_mosaic.version = 11 : i64} {
  func.func @_linear_add_ln_kernel(%arg0: i32, %arg1: memref<8x32xbf16, #tpu.memory_space<vmem>>, %arg2: memref<32x32xbf16, #tpu.memory_space<vmem>>, %arg3: memref<1x32xf32, #tpu.memory_space<vmem>>, %arg4: memref<8x32xf32, #tpu.memory_space<vmem>>, %arg5: memref<1x32xf32, #tpu.memory_space<vmem>>, %arg6: memref<1x32xf32, #tpu.memory_space<vmem>>, %arg7: memref<8x32xf32, #tpu.memory_space<vmem>>) attributes {dimension_semantics = [#tpu.dimension_semantics<parallel>], iteration_bounds = array<i64: 4>, scalar_prefetch = 0 : i64, scratch_operands = 0 : i64, tpu.core_type = #tpu.core_type<tc>, window_params = [{transform_indices = @transform_0, window_bounds = array<i64: 8, 32>}, {pipeline_mode = #tpu.pipeline_mode<synchronous>, transform_indices = @transform_1, window_bounds = array<i64: 32, 32>}, {pipeline_mode = #tpu.pipeline_mode<synchronous>, transform_indices = @transform_2, window_bounds = array<i64: 1, 32>}, {transform_indices = @transform_3, window_bounds = array<i64: 8, 32>}, {pipeline_mode = #tpu.pipeline_mode<synchronous>, transform_indices = @transform_4, window_bounds = array<i64: 1, 32>}, {pipeline_mode = #tpu.pipeline_mode<synchronous>, transform_indices = @transform_5, window_bounds = array<i64: 1, 32>}, {transform_indices = @transform_6, window_bounds = array<i64: 8, 32>}]} {
    %c0 = arith.constant 0 : index
    %c0_0 = arith.constant 0 : index
    %0 = vector.load %arg1[%c0, %c0_0] : memref<8x32xbf16, #tpu.memory_space<vmem>>, vector<8x32xbf16>
    %c0_1 = arith.constant 0 : index
    %c0_2 = arith.constant 0 : index
    %1 = vector.load %arg2[%c0_1, %c0_2] : memref<32x32xbf16, #tpu.memory_space<vmem>>, vector<32x32xbf16>
    %cst = arith.constant dense<0.000000e+00> : vector<8x32xf32>
    %2 = tpu.matmul %0, %1, %cst {dimension_numbers = #tpu.dot_dimension_numbers<[1], [0], [0], [1], [0, 0, 1, 1], [], []>} : vector<8x32xbf16>, vector<32x32xbf16>, vector<8x32xf32> -> vector<8x32xf32>
    %c0_3 = arith.constant 0 : index
    %c0_4 = arith.constant 0 : index
    %3 = vector.load %arg3[%c0_3, %c0_4] : memref<1x32xf32, #tpu.memory_space<vmem>>, vector<1x32xf32>
    %4 = vector.broadcast %3 : vector<1x32xf32> to vector<8x32xf32>
    %5 = arith.addf %2, %4 : vector<8x32xf32>
    %c0_5 = arith.constant 0 : index
    %c0_6 = arith.constant 0 : index
    %6 = vector.load %arg4[%c0_5, %c0_6] : memref<8x32xf32, #tpu.memory_space<vmem>>, vector<8x32xf32>
    %7 = arith.addf %6, %5 : vector<8x32xf32>
    %c0_7 = arith.constant 0 : index
    %c0_8 = arith.constant 0 : index
    %8 = vector.load %arg5[%c0_7, %c0_8] : memref<1x32xf32, #tpu.memory_space<vmem>>, vector<1x32xf32>
    %c0_9 = arith.constant 0 : index
    %c0_10 = arith.constant 0 : index
    %9 = vector.load %arg6[%c0_9, %c0_10] : memref<1x32xf32, #tpu.memory_space<vmem>>, vector<1x32xf32>
    %cst_11 = arith.constant dense<0.000000e+00> : vector<8xf32>
    %10 = vector.multi_reduction <add>, %7, %cst_11 [1] : vector<8x32xf32> to vector<8xf32>
    %11 = vector.shape_cast %10 : vector<8xf32> to vector<8x1xf32>
    %cst_12 = arith.constant 3.200000e+01 : f32
    %12 = vector.broadcast %cst_12 : f32 to vector<8x1xf32>
    %13 = arith.divf %11, %12 : vector<8x1xf32>
    %14 = vector.broadcast %13 : vector<8x1xf32> to vector<8x32xf32>
    %15 = arith.subf %7, %14 : vector<8x32xf32>
    %16 = arith.mulf %15, %15 : vector<8x32xf32>
    %cst_13 = arith.constant dense<0.000000e+00> : vector<8xf32>
    %17 = vector.multi_reduction <add>, %16, %cst_13 [1] : vector<8x32xf32> to vector<8xf32>
    %18 = vector.shape_cast %17 : vector<8xf32> to vector<8x1xf32>
    %cst_14 = arith.constant 3.200000e+01 : f32
    %19 = vector.broadcast %cst_14 : f32 to vector<8x1xf32>
    %20 = arith.divf %18, %19 : vector<8x1xf32>
    %cst_15 = arith.constant 9.99999974E-6 : f32
    %21 = vector.broadcast %cst_15 : f32 to vector<8x1xf32>
    %22 = arith.addf %20, %21 : vector<8x1xf32>
    %23 = math.rsqrt %22 : vector<8x1xf32>
    %24 = vector.broadcast %23 : vector<8x1xf32> to vector<8x32xf32>
    %25 = arith.mulf %15, %24 : vector<8x32xf32>
    %26 = vector.broadcast %8 : vector<1x32xf32> to vector<8x32xf32>
    %27 = arith.mulf %25, %26 : vector<8x32xf32>
    %28 = vector.broadcast %9 : vector<1x32xf32> to vector<8x32xf32>
    %29 = arith.addf %27, %28 : vector<8x32xf32>
    %c0_16 = arith.constant 0 : index
    %c0_17 = arith.constant 0 : index
    %30 = vector.load %arg7[%c0_16, %c0_17] : memref<8x32xf32, #tpu.memory_space<vmem>>, vector<8x32xf32>
    tpu.vector_store %arg7[%c0_16, %c0_17], %29 {strides = array<i32>} : memref<8x32xf32, #tpu.memory_space<vmem>>, vector<8x32xf32>,
    return
  }
  func.func @transform_0(%arg0: i32) -> (i32, i32) {
    %c0_i32 = arith.constant 0 : i32
    %c0_i32_0 = arith.constant 0 : i32
    return %arg0, %c0_i32 : i32, i32
  }
  func.func @transform_1(%arg0: i32) -> (i32, i32) {
    %c0_i32 = arith.constant 0 : i32
    %c0_i32_0 = arith.constant 0 : i32
    %c0_i32_1 = arith.constant 0 : i32
    return %c0_i32, %c0_i32_0 : i32, i32
  }
  func.func @transform_2(%arg0: i32) -> (i32, i32) {
    %c0_i32 = arith.constant 0 : i32
    %c0_i32_0 = arith.constant 0 : i32
    %c0_i32_1 = arith.constant 0 : i32
    return %c0_i32, %c0_i32_0 : i32, i32
  }
  func.func @transform_3(%arg0: i32) -> (i32, i32) {
    %c2_i32 = arith.constant 2 : i32
    %c0_i32 = arith.constant 0 : i32
    %0 = arith.cmpi eq, %c2_i32, %c0_i32 : i32
    %c1_i32 = arith.constant 1 : i32
    %1 = arith.select %0, %c1_i32, %c2_i32 : i32
    %2 = arith.remsi %arg0, %1 : i32
    %c0_i32_0 = arith.constant 0 : i32
    %3 = arith.cmpi ne, %2, %c0_i32_0 : i32
    %c0_i32_1 = arith.constant 0 : i32
    %4 = arith.cmpi slt, %2, %c0_i32_1 : i32
    %c0_i32_2 = arith.constant 0 : i32
    %5 = arith.cmpi slt, %1, %c0_i32_2 : i32
    %6 = arith.xori %4, %5 : i1
    %7 = arith.andi %6, %3 : i1
    %8 = arith.addi %2, %1 : i32
    %9 = arith.select %7, %8, %2 : i32
    %c0_i32_3 = arith.constant 0 : i32
    %c0_i32_4 = arith.constant 0 : i32
    return %9, %c0_i32_3 : i32, i32
  }
  func.func @transform_4(%arg0: i32) -> (i32, i32) {
    %c0_i32 = arith.constant 0 : i32
    %c0_i32_0 = arith.constant 0 : i32
    %c0_i32_1 = arith.constant 0 : i32
    return %c0_i32, %c0_i32_0 : i32, i32
  }
  func.func @transform_5(%arg0: i32) -> (i32, i32) {
    %c0_i32 = arith.constant 0 : i32
    %c0_i32_0 = arith.constant 0 : i32
    %c0_i32_1 = arith.constant 0 : i32
    return %c0_i32, %c0_i32_0 : i32, i32
  }
  func.func @transform_6(%arg0: i32) -> (i32, i32) {
    %c0_i32 = arith.constant 0 : i32
    %c0_i32_0 = arith.constant 0 : i32
    return %arg0, %c0_i32 : i32, i32
  }
}

module attributes {stable_mosaic.version = 11 : i64} {
  func.func @_ffn_kernel(%arg0: i32, %arg1: i32, %arg2: memref<8x32xf32, #tpu.memory_space<vmem>>, %arg3: memref<8x32xf32, #tpu.memory_space<vmem>>, %arg4: memref<32x64xbf16, #tpu.memory_space<vmem>>, %arg5: memref<1x64xf32, #tpu.memory_space<vmem>>, %arg6: memref<64x32xbf16, #tpu.memory_space<vmem>>, %arg7: memref<1x32xf32, #tpu.memory_space<vmem>>, %arg8: memref<1x32xf32, #tpu.memory_space<vmem>>, %arg9: memref<1x32xf32, #tpu.memory_space<vmem>>, %arg10: memref<8x32xf32, #tpu.memory_space<vmem>>, %arg11: memref<8x32xf32, #tpu.memory_space<vmem>>, %arg12: memref<8x32xf32, #tpu.memory_space<vmem>>) attributes {dimension_semantics = [#tpu.dimension_semantics<parallel>, #tpu.dimension_semantics<arbitrary>], iteration_bounds = array<i64: 2, 1>, scalar_prefetch = 0 : i64, scratch_operands = 2 : i64, tpu.core_type = #tpu.core_type<tc>, window_params = [{transform_indices = @transform_0, window_bounds = array<i64: 8, 32>}, {transform_indices = @transform_1, window_bounds = array<i64: 8, 32>}, {transform_indices = @transform_2, window_bounds = array<i64: 32, 64>}, {transform_indices = @transform_3, window_bounds = array<i64: 1, 64>}, {transform_indices = @transform_4, window_bounds = array<i64: 64, 32>}, {pipeline_mode = #tpu.pipeline_mode<synchronous>, transform_indices = @transform_5, window_bounds = array<i64: 1, 32>}, {pipeline_mode = #tpu.pipeline_mode<synchronous>, transform_indices = @transform_6, window_bounds = array<i64: 1, 32>}, {pipeline_mode = #tpu.pipeline_mode<synchronous>, transform_indices = @transform_7, window_bounds = array<i64: 1, 32>}, {transform_indices = @transform_8, window_bounds = array<i64: 8, 32>}]} {
    %c0_i32 = arith.constant 0 : i32
    %0 = arith.cmpi eq, %arg1, %c0_i32 : i32
    %1 = arith.extui %0 : i1 to i32
    %c0_i32_0 = arith.constant 0 : i32
    %2 = arith.cmpi ne, %1, %c0_i32_0 : i32
    scf.if %2 {
      %c0_16 = arith.constant 0 : index
      %c0_17 = arith.constant 0 : index
      %21 = vector.load %arg2[%c0_16, %c0_17] : memref<8x32xf32, #tpu.memory_space<vmem>>, vector<8x32xf32>
      %c0_18 = arith.constant 0 : index
      %c0_19 = arith.constant 0 : index
      %22 = vector.load %arg3[%c0_18, %c0_19] : memref<8x32xf32, #tpu.memory_space<vmem>>, vector<8x32xf32>
      %23 = arith.addf %21, %22 : vector<8x32xf32>
      %cst_20 = arith.constant 5.000000e-01 : f32
      %24 = vector.broadcast %cst_20 : f32 to vector<8x32xf32>
      %25 = arith.mulf %23, %24 : vector<8x32xf32>
      %c0_21 = arith.constant 0 : index
      %c0_22 = arith.constant 0 : index
      %26 = vector.load %arg11[%c0_21, %c0_22] : memref<8x32xf32, #tpu.memory_space<vmem>>, vector<8x32xf32>
      tpu.vector_store %arg11[%c0_21, %c0_22], %25 {strides = array<i32>} : memref<8x32xf32, #tpu.memory_space<vmem>>, vector<8x32xf32>,
      %cst_23 = arith.constant 0.000000e+00 : f32
      %27 = vector.broadcast %cst_23 : f32 to vector<8x32xf32>
      %c0_24 = arith.constant 0 : index
      %c0_25 = arith.constant 0 : index
      %28 = vector.load %arg12[%c0_24, %c0_25] : memref<8x32xf32, #tpu.memory_space<vmem>>, vector<8x32xf32>
      tpu.vector_store %arg12[%c0_24, %c0_25], %27 {strides = array<i32>} : memref<8x32xf32, #tpu.memory_space<vmem>>, vector<8x32xf32>,
    } else {
    }
    %c0 = arith.constant 0 : index
    %c0_1 = arith.constant 0 : index
    %3 = vector.load %arg11[%c0, %c0_1] : memref<8x32xf32, #tpu.memory_space<vmem>>, vector<8x32xf32>
    %c0_2 = arith.constant 0 : index
    %c0_3 = arith.constant 0 : index
    %4 = vector.load %arg4[%c0_2, %c0_3] : memref<32x64xbf16, #tpu.memory_space<vmem>>, vector<32x64xbf16>
    %5 = arith.truncf %3 : vector<8x32xf32> to vector<8x32xbf16>
    %cst = arith.constant dense<0.000000e+00> : vector<8x64xf32>
    %6 = tpu.matmul %5, %4, %cst {dimension_numbers = #tpu.dot_dimension_numbers<[1], [0], [0], [1], [0, 0, 1, 1], [], []>} : vector<8x32xbf16>, vector<32x64xbf16>, vector<8x64xf32> -> vector<8x64xf32>
    %c0_4 = arith.constant 0 : index
    %c0_5 = arith.constant 0 : index
    %7 = vector.load %arg5[%c0_4, %c0_5] : memref<1x64xf32, #tpu.memory_space<vmem>>, vector<1x64xf32>
    %8 = vector.broadcast %7 : vector<1x64xf32> to vector<8x64xf32>
    %9 = arith.addf %6, %8 : vector<8x64xf32>
    %cst_6 = arith.constant 0.000000e+00 : f32
    %10 = vector.broadcast %cst_6 : f32 to vector<8x64xf32>
    %11 = arith.maximumf %9, %10 : vector<8x64xf32>
    %c0_7 = arith.constant 0 : index
    %c0_8 = arith.constant 0 : index
    %12 = vector.load %arg12[%c0_7, %c0_8] : memref<8x32xf32, #tpu.memory_space<vmem>>, vector<8x32xf32>
    %c0_9 = arith.constant 0 : index
    %c0_10 = arith.constant 0 : index
    %13 = vector.load %arg6[%c0_9, %c0_10] : memref<64x32xbf16, #tpu.memory_space<vmem>>, vector<64x32xbf16>
    %14 = arith.truncf %11 : vector<8x64xf32> to vector<8x64xbf16>
    %cst_11 = arith.constant dense<0.000000e+00> : vector<8x32xf32>
    %15 = tpu.matmul %14, %13, %cst_11 {dimension_numbers = #tpu.dot_dimension_numbers<[1], [0], [0], [1], [0, 0, 1, 1], [], []>} : vector<8x64xbf16>, vector<64x32xbf16>, vector<8x32xf32> -> vector<8x32xf32>
    %16 = arith.addf %12, %15 : vector<8x32xf32>
    %c0_12 = arith.constant 0 : index
    %c0_13 = arith.constant 0 : index
    %17 = vector.load %arg12[%c0_12, %c0_13] : memref<8x32xf32, #tpu.memory_space<vmem>>, vector<8x32xf32>
    tpu.vector_store %arg12[%c0_12, %c0_13], %16 {strides = array<i32>} : memref<8x32xf32, #tpu.memory_space<vmem>>, vector<8x32xf32>,
    %c0_i32_14 = arith.constant 0 : i32
    %18 = arith.cmpi eq, %arg1, %c0_i32_14 : i32
    %19 = arith.extui %18 : i1 to i32
    %c0_i32_15 = arith.constant 0 : i32
    %20 = arith.cmpi ne, %19, %c0_i32_15 : i32
    scf.if %20 {
      %c0_16 = arith.constant 0 : index
      %c0_17 = arith.constant 0 : index
      %21 = vector.load %arg12[%c0_16, %c0_17] : memref<8x32xf32, #tpu.memory_space<vmem>>, vector<8x32xf32>
      %c0_18 = arith.constant 0 : index
      %c0_19 = arith.constant 0 : index
      %22 = vector.load %arg7[%c0_18, %c0_19] : memref<1x32xf32, #tpu.memory_space<vmem>>, vector<1x32xf32>
      %23 = vector.broadcast %22 : vector<1x32xf32> to vector<8x32xf32>
      %24 = arith.addf %21, %23 : vector<8x32xf32>
      %c0_20 = arith.constant 0 : index
      %c0_21 = arith.constant 0 : index
      %25 = vector.load %arg11[%c0_20, %c0_21] : memref<8x32xf32, #tpu.memory_space<vmem>>, vector<8x32xf32>
      %26 = arith.addf %25, %24 : vector<8x32xf32>
      %c0_22 = arith.constant 0 : index
      %c0_23 = arith.constant 0 : index
      %27 = vector.load %arg8[%c0_22, %c0_23] : memref<1x32xf32, #tpu.memory_space<vmem>>, vector<1x32xf32>
      %c0_24 = arith.constant 0 : index
      %c0_25 = arith.constant 0 : index
      %28 = vector.load %arg9[%c0_24, %c0_25] : memref<1x32xf32, #tpu.memory_space<vmem>>, vector<1x32xf32>
      %cst_26 = arith.constant dense<0.000000e+00> : vector<8xf32>
      %29 = vector.multi_reduction <add>, %26, %cst_26 [1] : vector<8x32xf32> to vector<8xf32>
      %30 = vector.shape_cast %29 : vector<8xf32> to vector<8x1xf32>
      %cst_27 = arith.constant 3.200000e+01 : f32
      %31 = vector.broadcast %cst_27 : f32 to vector<8x1xf32>
      %32 = arith.divf %30, %31 : vector<8x1xf32>
      %33 = vector.broadcast %32 : vector<8x1xf32> to vector<8x32xf32>
      %34 = arith.subf %26, %33 : vector<8x32xf32>
      %35 = arith.mulf %34, %34 : vector<8x32xf32>
      %cst_28 = arith.constant dense<0.000000e+00> : vector<8xf32>
      %36 = vector.multi_reduction <add>, %35, %cst_28 [1] : vector<8x32xf32> to vector<8xf32>
      %37 = vector.shape_cast %36 : vector<8xf32> to vector<8x1xf32>
      %cst_29 = arith.constant 3.200000e+01 : f32
      %38 = vector.broadcast %cst_29 : f32 to vector<8x1xf32>
      %39 = arith.divf %37, %38 : vector<8x1xf32>
      %cst_30 = arith.constant 9.99999974E-6 : f32
      %40 = vector.broadcast %cst_30 : f32 to vector<8x1xf32>
      %41 = arith.addf %39, %40 : vector<8x1xf32>
      %42 = math.rsqrt %41 : vector<8x1xf32>
      %43 = vector.broadcast %42 : vector<8x1xf32> to vector<8x32xf32>
      %44 = arith.mulf %34, %43 : vector<8x32xf32>
      %45 = vector.broadcast %27 : vector<1x32xf32> to vector<8x32xf32>
      %46 = arith.mulf %44, %45 : vector<8x32xf32>
      %47 = vector.broadcast %28 : vector<1x32xf32> to vector<8x32xf32>
      %48 = arith.addf %46, %47 : vector<8x32xf32>
      %c0_31 = arith.constant 0 : index
      %c0_32 = arith.constant 0 : index
      %49 = vector.load %arg10[%c0_31, %c0_32] : memref<8x32xf32, #tpu.memory_space<vmem>>, vector<8x32xf32>
      tpu.vector_store %arg10[%c0_31, %c0_32], %48 {strides = array<i32>} : memref<8x32xf32, #tpu.memory_space<vmem>>, vector<8x32xf32>,
    } else {
    }
    return
  }
  func.func @transform_0(%arg0: i32, %arg1: i32) -> (i32, i32) {
    %c0_i32 = arith.constant 0 : i32
    %c0_i32_0 = arith.constant 0 : i32
    return %arg0, %c0_i32 : i32, i32
  }
  func.func @transform_1(%arg0: i32, %arg1: i32) -> (i32, i32) {
    %c2_i32 = arith.constant 2 : i32
    %0 = arith.addi %arg0, %c2_i32 : i32
    %c0_i32 = arith.constant 0 : i32
    %c0_i32_0 = arith.constant 0 : i32
    return %0, %c0_i32 : i32, i32
  }
  func.func @transform_2(%arg0: i32, %arg1: i32) -> (i32, i32) {
    %c0_i32 = arith.constant 0 : i32
    %c0_i32_0 = arith.constant 0 : i32
    return %c0_i32, %arg1 : i32, i32
  }
  func.func @transform_3(%arg0: i32, %arg1: i32) -> (i32, i32) {
    %c0_i32 = arith.constant 0 : i32
    %c0_i32_0 = arith.constant 0 : i32
    return %c0_i32, %arg1 : i32, i32
  }
  func.func @transform_4(%arg0: i32, %arg1: i32) -> (i32, i32) {
    %c0_i32 = arith.constant 0 : i32
    %c0_i32_0 = arith.constant 0 : i32
    return %arg1, %c0_i32 : i32, i32
  }
  func.func @transform_5(%arg0: i32, %arg1: i32) -> (i32, i32) {
    %c0_i32 = arith.constant 0 : i32
    %c0_i32_0 = arith.constant 0 : i32
    %c0_i32_1 = arith.constant 0 : i32
    return %c0_i32, %c0_i32_0 : i32, i32
  }
  func.func @transform_6(%arg0: i32, %arg1: i32) -> (i32, i32) {
    %c0_i32 = arith.constant 0 : i32
    %c0_i32_0 = arith.constant 0 : i32
    %c0_i32_1 = arith.constant 0 : i32
    return %c0_i32, %c0_i32_0 : i32, i32
  }
  func.func @transform_7(%arg0: i32, %arg1: i32) -> (i32, i32) {
    %c0_i32 = arith.constant 0 : i32
    %c0_i32_0 = arith.constant 0 : i32
    %c0_i32_1 = arith.constant 0 : i32
    return %c0_i32, %c0_i32_0 : i32, i32
  }
  func.func @transform_8(%arg0: i32, %arg1: i32) -> (i32, i32) {
    %c0_i32 = arith.constant 0 : i32
    %c0_i32_0 = arith.constant 0 : i32
    return %arg0, %c0_i32 : i32, i32
  }
}

module attributes {stable_mosaic.version = 11 : i64} {
  func.func @_ffn_kernel(%arg0: i32, %arg1: i32, %arg2: memref<8x32xf32, #tpu.memory_space<vmem>>, %arg3: memref<8x32xf32, #tpu.memory_space<vmem>>, %arg4: memref<32x64xbf16, #tpu.memory_space<vmem>>, %arg5: memref<1x64xf32, #tpu.memory_space<vmem>>, %arg6: memref<64x32xbf16, #tpu.memory_space<vmem>>, %arg7: memref<1x32xf32, #tpu.memory_space<vmem>>, %arg8: memref<1x32xf32, #tpu.memory_space<vmem>>, %arg9: memref<1x32xf32, #tpu.memory_space<vmem>>, %arg10: memref<8x32xf32, #tpu.memory_space<vmem>>, %arg11: memref<8x32xf32, #tpu.memory_space<vmem>>, %arg12: memref<8x32xf32, #tpu.memory_space<vmem>>) attributes {dimension_semantics = [#tpu.dimension_semantics<parallel>, #tpu.dimension_semantics<arbitrary>], iteration_bounds = array<i64: 2, 1>, scalar_prefetch = 0 : i64, scratch_operands = 2 : i64, tpu.core_type = #tpu.core_type<tc>, window_params = [{transform_indices = @transform_0, window_bounds = array<i64: 8, 32>}, {transform_indices = @transform_1, window_bounds = array<i64: 8, 32>}, {transform_indices = @transform_2, window_bounds = array<i64: 32, 64>}, {transform_indices = @transform_3, window_bounds = array<i64: 1, 64>}, {transform_indices = @transform_4, window_bounds = array<i64: 64, 32>}, {pipeline_mode = #tpu.pipeline_mode<synchronous>, transform_indices = @transform_5, window_bounds = array<i64: 1, 32>}, {pipeline_mode = #tpu.pipeline_mode<synchronous>, transform_indices = @transform_6, window_bounds = array<i64: 1, 32>}, {pipeline_mode = #tpu.pipeline_mode<synchronous>, transform_indices = @transform_7, window_bounds = array<i64: 1, 32>}, {transform_indices = @transform_8, window_bounds = array<i64: 8, 32>}]} {
    %c0_i32 = arith.constant 0 : i32
    %0 = arith.cmpi eq, %arg1, %c0_i32 : i32
    %1 = arith.extui %0 : i1 to i32
    %c0_i32_0 = arith.constant 0 : i32
    %2 = arith.cmpi ne, %1, %c0_i32_0 : i32
    scf.if %2 {
      %c0_16 = arith.constant 0 : index
      %c0_17 = arith.constant 0 : index
      %21 = vector.load %arg2[%c0_16, %c0_17] : memref<8x32xf32, #tpu.memory_space<vmem>>, vector<8x32xf32>
      %c0_18 = arith.constant 0 : index
      %c0_19 = arith.constant 0 : index
      %22 = vector.load %arg3[%c0_18, %c0_19] : memref<8x32xf32, #tpu.memory_space<vmem>>, vector<8x32xf32>
      %23 = arith.addf %21, %22 : vector<8x32xf32>
      %cst_20 = arith.constant 5.000000e-01 : f32
      %24 = vector.broadcast %cst_20 : f32 to vector<8x32xf32>
      %25 = arith.mulf %23, %24 : vector<8x32xf32>
      %c0_21 = arith.constant 0 : index
      %c0_22 = arith.constant 0 : index
      %26 = vector.load %arg11[%c0_21, %c0_22] : memref<8x32xf32, #tpu.memory_space<vmem>>, vector<8x32xf32>
      tpu.vector_store %arg11[%c0_21, %c0_22], %25 {strides = array<i32>} : memref<8x32xf32, #tpu.memory_space<vmem>>, vector<8x32xf32>,
      %cst_23 = arith.constant 0.000000e+00 : f32
      %27 = vector.broadcast %cst_23 : f32 to vector<8x32xf32>
      %c0_24 = arith.constant 0 : index
      %c0_25 = arith.constant 0 : index
      %28 = vector.load %arg12[%c0_24, %c0_25] : memref<8x32xf32, #tpu.memory_space<vmem>>, vector<8x32xf32>
      tpu.vector_store %arg12[%c0_24, %c0_25], %27 {strides = array<i32>} : memref<8x32xf32, #tpu.memory_space<vmem>>, vector<8x32xf32>,
    } else {
    }
    %c0 = arith.constant 0 : index
    %c0_1 = arith.constant 0 : index
    %3 = vector.load %arg11[%c0, %c0_1] : memref<8x32xf32, #tpu.memory_space<vmem>>, vector<8x32xf32>
    %c0_2 = arith.constant 0 : index
    %c0_3 = arith.constant 0 : index
    %4 = vector.load %arg4[%c0_2, %c0_3] : memref<32x64xbf16, #tpu.memory_space<vmem>>, vector<32x64xbf16>
    %5 = arith.truncf %3 : vector<8x32xf32> to vector<8x32xbf16>
    %cst = arith.constant dense<0.000000e+00> : vector<8x64xf32>
    %6 = tpu.matmul %5, %4, %cst {dimension_numbers = #tpu.dot_dimension_numbers<[1], [0], [0], [1], [0, 0, 1, 1], [], []>} : vector<8x32xbf16>, vector<32x64xbf16>, vector<8x64xf32> -> vector<8x64xf32>
    %c0_4 = arith.constant 0 : index
    %c0_5 = arith.constant 0 : index
    %7 = vector.load %arg5[%c0_4, %c0_5] : memref<1x64xf32, #tpu.memory_space<vmem>>, vector<1x64xf32>
    %8 = vector.broadcast %7 : vector<1x64xf32> to vector<8x64xf32>
    %9 = arith.addf %6, %8 : vector<8x64xf32>
    %cst_6 = arith.constant 0.000000e+00 : f32
    %10 = vector.broadcast %cst_6 : f32 to vector<8x64xf32>
    %11 = arith.maximumf %9, %10 : vector<8x64xf32>
    %c0_7 = arith.constant 0 : index
    %c0_8 = arith.constant 0 : index
    %12 = vector.load %arg12[%c0_7, %c0_8] : memref<8x32xf32, #tpu.memory_space<vmem>>, vector<8x32xf32>
    %c0_9 = arith.constant 0 : index
    %c0_10 = arith.constant 0 : index
    %13 = vector.load %arg6[%c0_9, %c0_10] : memref<64x32xbf16, #tpu.memory_space<vmem>>, vector<64x32xbf16>
    %14 = arith.truncf %11 : vector<8x64xf32> to vector<8x64xbf16>
    %cst_11 = arith.constant dense<0.000000e+00> : vector<8x32xf32>
    %15 = tpu.matmul %14, %13, %cst_11 {dimension_numbers = #tpu.dot_dimension_numbers<[1], [0], [0], [1], [0, 0, 1, 1], [], []>} : vector<8x64xbf16>, vector<64x32xbf16>, vector<8x32xf32> -> vector<8x32xf32>
    %16 = arith.addf %12, %15 : vector<8x32xf32>
    %c0_12 = arith.constant 0 : index
    %c0_13 = arith.constant 0 : index
    %17 = vector.load %arg12[%c0_12, %c0_13] : memref<8x32xf32, #tpu.memory_space<vmem>>, vector<8x32xf32>
    tpu.vector_store %arg12[%c0_12, %c0_13], %16 {strides = array<i32>} : memref<8x32xf32, #tpu.memory_space<vmem>>, vector<8x32xf32>,
    %c0_i32_14 = arith.constant 0 : i32
    %18 = arith.cmpi eq, %arg1, %c0_i32_14 : i32
    %19 = arith.extui %18 : i1 to i32
    %c0_i32_15 = arith.constant 0 : i32
    %20 = arith.cmpi ne, %19, %c0_i32_15 : i32
    scf.if %20 {
      %c0_16 = arith.constant 0 : index
      %c0_17 = arith.constant 0 : index
      %21 = vector.load %arg12[%c0_16, %c0_17] : memref<8x32xf32, #tpu.memory_space<vmem>>, vector<8x32xf32>
      %c0_18 = arith.constant 0 : index
      %c0_19 = arith.constant 0 : index
      %22 = vector.load %arg7[%c0_18, %c0_19] : memref<1x32xf32, #tpu.memory_space<vmem>>, vector<1x32xf32>
      %23 = vector.broadcast %22 : vector<1x32xf32> to vector<8x32xf32>
      %24 = arith.addf %21, %23 : vector<8x32xf32>
      %c0_20 = arith.constant 0 : index
      %c0_21 = arith.constant 0 : index
      %25 = vector.load %arg11[%c0_20, %c0_21] : memref<8x32xf32, #tpu.memory_space<vmem>>, vector<8x32xf32>
      %26 = arith.addf %25, %24 : vector<8x32xf32>
      %c0_22 = arith.constant 0 : index
      %c0_23 = arith.constant 0 : index
      %27 = vector.load %arg8[%c0_22, %c0_23] : memref<1x32xf32, #tpu.memory_space<vmem>>, vector<1x32xf32>
      %c0_24 = arith.constant 0 : index
      %c0_25 = arith.constant 0 : index
      %28 = vector.load %arg9[%c0_24, %c0_25] : memref<1x32xf32, #tpu.memory_space<vmem>>, vector<1x32xf32>
      %cst_26 = arith.constant dense<0.000000e+00> : vector<8xf32>
      %29 = vector.multi_reduction <add>, %26, %cst_26 [1] : vector<8x32xf32> to vector<8xf32>
      %30 = vector.shape_cast %29 : vector<8xf32> to vector<8x1xf32>
      %cst_27 = arith.constant 3.200000e+01 : f32
      %31 = vector.broadcast %cst_27 : f32 to vector<8x1xf32>
      %32 = arith.divf %30, %31 : vector<8x1xf32>
      %33 = vector.broadcast %32 : vector<8x1xf32> to vector<8x32xf32>
      %34 = arith.subf %26, %33 : vector<8x32xf32>
      %35 = arith.mulf %34, %34 : vector<8x32xf32>
      %cst_28 = arith.constant dense<0.000000e+00> : vector<8xf32>
      %36 = vector.multi_reduction <add>, %35, %cst_28 [1] : vector<8x32xf32> to vector<8xf32>
      %37 = vector.shape_cast %36 : vector<8xf32> to vector<8x1xf32>
      %cst_29 = arith.constant 3.200000e+01 : f32
      %38 = vector.broadcast %cst_29 : f32 to vector<8x1xf32>
      %39 = arith.divf %37, %38 : vector<8x1xf32>
      %cst_30 = arith.constant 9.99999974E-6 : f32
      %40 = vector.broadcast %cst_30 : f32 to vector<8x1xf32>
      %41 = arith.addf %39, %40 : vector<8x1xf32>
      %42 = math.rsqrt %41 : vector<8x1xf32>
      %43 = vector.broadcast %42 : vector<8x1xf32> to vector<8x32xf32>
      %44 = arith.mulf %34, %43 : vector<8x32xf32>
      %45 = vector.broadcast %27 : vector<1x32xf32> to vector<8x32xf32>
      %46 = arith.mulf %44, %45 : vector<8x32xf32>
      %47 = vector.broadcast %28 : vector<1x32xf32> to vector<8x32xf32>
      %48 = arith.addf %46, %47 : vector<8x32xf32>
      %c0_31 = arith.constant 0 : index
      %c0_32 = arith.constant 0 : index
      %49 = vector.load %arg10[%c0_31, %c0_32] : memref<8x32xf32, #tpu.memory_space<vmem>>, vector<8x32xf32>
      tpu.vector_store %arg10[%c0_31, %c0_32], %48 {strides = array<i32>} : memref<8x32xf32, #tpu.memory_space<vmem>>, vector<8x32xf32>,
    } else {
    }
    return
  }
  func.func @transform_0(%arg0: i32, %arg1: i32) -> (i32, i32) {
    %c0_i32 = arith.constant 0 : i32
    %c0_i32_0 = arith.constant 0 : i32
    return %arg0, %c0_i32 : i32, i32
  }
  func.func @transform_1(%arg0: i32, %arg1: i32) -> (i32, i32) {
    %c2_i32 = arith.constant 2 : i32
    %0 = arith.addi %arg0, %c2_i32 : i32
    %c0_i32 = arith.constant 0 : i32
    %c0_i32_0 = arith.constant 0 : i32
    return %0, %c0_i32 : i32, i32
  }
  func.func @transform_2(%arg0: i32, %arg1: i32) -> (i32, i32) {
    %c0_i32 = arith.constant 0 : i32
    %c0_i32_0 = arith.constant 0 : i32
    return %c0_i32, %arg1 : i32, i32
  }
  func.func @transform_3(%arg0: i32, %arg1: i32) -> (i32, i32) {
    %c0_i32 = arith.constant 0 : i32
    %c0_i32_0 = arith.constant 0 : i32
    return %c0_i32, %arg1 : i32, i32
  }
  func.func @transform_4(%arg0: i32, %arg1: i32) -> (i32, i32) {
    %c0_i32 = arith.constant 0 : i32
    %c0_i32_0 = arith.constant 0 : i32
    return %arg1, %c0_i32 : i32, i32
  }
  func.func @transform_5(%arg0: i32, %arg1: i32) -> (i32, i32) {
    %c0_i32 = arith.constant 0 : i32
    %c0_i32_0 = arith.constant 0 : i32
    %c0_i32_1 = arith.constant 0 : i32
    return %c0_i32, %c0_i32_0 : i32, i32
  }
  func.func @transform_6(%arg0: i32, %arg1: i32) -> (i32, i32) {
    %c0_i32 = arith.constant 0 : i32
    %c0_i32_0 = arith.constant 0 : i32
    %c0_i32_1 = arith.constant 0 : i32
    return %c0_i32, %c0_i32_0 : i32, i32
  }
  func.func @transform_7(%arg0: i32, %arg1: i32) -> (i32, i32) {
    %c0_i32 = arith.constant 0 : i32
    %c0_i32_0 = arith.constant 0 : i32
    %c0_i32_1 = arith.constant 0 : i32
    return %c0_i32, %c0_i32_0 : i32, i32
  }
  func.func @transform_8(%arg0: i32, %arg1: i32) -> (i32, i32) {
    %c0_i32 = arith.constant 0 : i32
    %c0_i32_0 = arith.constant 0 : i32
    return %arg0, %c0_i32 : i32, i32
  }
}

</mosaic_0001>

<llo_original>
// kernel: tpu_custom_call.1
$region0: #{tpu_custom_call.1}
  #allocation0 [shape = 'u32[]', space=smem, size = 0x4, offset = 0x4, fixed_abs, tag = 'smem constant byte address 0x4 - core index']
  #allocation1 [shape = 'u32[144,128]{1,0:T(1,128)}', space=vmem, size = 0x12000, scoped, tag = 'internal scratch']
  %s0 = inlined_call_operand.hbm [shape: f32[8,128], index: 0, kind: input, shape index: {}]
  %s1 = inlined_call_operand.hbm [shape: f32[8,128], index: 1, kind: output, shape index: {}]
  %s2 = sld [smem:[#allocation0]]
  $region41: #{tpu_custom_call.1} parent=0
    _
  %s4 = ssub.s32 1, %s2
  %s5 = scalar_select 0, %s4, %s2
  $region1: #{tpu_custom_call.1} parent=0
    #allocation2 [shape = 'u8[4096]{0}', space=vmem, size = 0x1000, scoped, tag = 'input window, operand 0, single buffered']
    #allocation3 [shape = 's32[2]{0}', space=sflag, size = 0x8, scoped, tag = 'scoped memory for tpu_custom_call.1']
    #allocation4 [shape = 's32[2]{0}', space=sflag, size = 0x8, scoped, tag = 'scoped memory for tpu_custom_call.1']
    #allocation5 [shape = 'u8[4096]{0}', space=vmem, size = 0x1000, scoped, tag = 'output window, operand 0, single buffered']
    %6 = vsyncpa [#allocation3], 0
    %7 = vsyncpa [#allocation4], 0
    loop: start=0, step=1, limit=4
    $region2: #{tpu_custom_call.1} parent=1 // loop_pre_header
      _
    $region3: #{tpu_custom_call.1} parent=1 // loop_header
      %s9 = sphi 0, %s13
      %p10 = scmp.ge.s32.totalorder %s9, 4
      %s17 = sphi 0, %s17
      %s19 = sphi 0, %s17
      %s20 = sphi 0, %s19
      %s34 = sphi 0, %s20
      %s38 = sphi 0, %s38
      %s40 = sphi 0, %s38
      %s41 = sphi 0, %s40
      %s55 = sphi 0, %s41
    $region4: #{tpu_custom_call.1} parent=1 // loop_header_branch
      %12 = sbr.rel (%p10) target = $region8
    $region5: #{tpu_custom_call.1} parent=1 // loop_body
      %s14 = ssub.s32 %s9, 1
      %s15 = ssub.s32 %s9, 2
      %s16 = sadd.s32 %s9, 1
      %s18 = sadd.s32 %s17, 1
      %p21 = scmp.eq.s32.totalorder %s9, 1
      %p22 = scmp.ne.s32.totalorder %s17, %s19
      %p23 = scmp.eq.s32.totalorder %s9, 0
      %p24 = por %p22, %p23
      %p25 = scmp.ne.s32.totalorder %s17, %s19
      %p26 = scmp.eq.s32.totalorder %s14, 1
      %p27 = por %p25, %p26
      %p28 = scmp.ne.s32.totalorder %s19, %s20
      %p29 = scmp.eq.s32.totalorder %s14, 0
      %p30 = por %p28, %p29
      %p31 = scmp.ne.s32.totalorder %s19, %s20
      %p32 = scmp.eq.s32.totalorder %s15, 1
      %p33 = por %p31, %p32
      %p35 = scmp.ne.s32.totalorder %s20, %s34
      %p36 = scmp.eq.s32.totalorder %s15, 0
      %p37 = por %p35, %p36
      %s39 = sadd.s32 %s38, 1
      %p42 = scmp.eq.s32.totalorder %s9, 1
      %p43 = scmp.ne.s32.totalorder %s38, %s40
      %p44 = scmp.eq.s32.totalorder %s9, 0
      %p45 = por %p43, %p44
      %p46 = scmp.ne.s32.totalorder %s38, %s40
      %p47 = scmp.eq.s32.totalorder %s14, 1
      %p48 = por %p46, %p47
      %p49 = scmp.ne.s32.totalorder %s40, %s41
      %p50 = scmp.eq.s32.totalorder %s14, 0
      %p51 = por %p49, %p50
      %p52 = scmp.ne.s32.totalorder %s40, %s41
      %p53 = scmp.eq.s32.totalorder %s15, 1
      %p54 = por %p52, %p53
      %p56 = scmp.ne.s32.totalorder %s41, %s55
      %p57 = scmp.eq.s32.totalorder %s15, 0
      %p58 = por %p56, %p57
      %p59 = scmp.le.s32.totalorder 1, %s9
      %p60 = scmp.lt.s32.totalorder %s9, 3
      %p61 = pnand %p59, %p60
      %p62 = pneg %p61
      // Predicated region
      $region9: #{tpu_custom_call.1} parent=5 // pred_check
        _
      $region10: #{tpu_custom_call.1} parent=5 // pred_check_branch
        %64 = sbr.rel (%p61) target = $region12
      $region11: #{tpu_custom_call.1} parent=5 // pred_region
        %s65 = ssub.s32 %s9, 1
        // Predicated region
        $region13: #{tpu_custom_call.1} parent=11 // pred_check
          %p66 = pneg %p30
        $region14: #{tpu_custom_call.1} parent=11 // pred_check_branch
          %68 = sbr.rel (%p66) target = $region16
        $region15: #{tpu_custom_call.1} parent=11 // pred_region
          %s70 = ssub.s32 128, 128
          %71 = vsyncadd [#allocation3], %s70
          %s73 = sshll.u32 [#allocation2], 4
          %s74 = int_to_ptr.vmem [resolvable:$true] %s73
          %76 = dma.hbm_to_vmem [thread:$0]  %s0, 128, %s74, [#allocation3]
        $region16: #{tpu_custom_call.1} parent=11 // pred_fallthru
          _
      $region12: #{tpu_custom_call.1} parent=5 // pred_fallthru
        _
      %p77 = scmp.lt.s32.totalorder %s9, 2
      // Predicated region
      $region17: #{tpu_custom_call.1} parent=5 // pred_check
        %p78 = pneg %p77
      $region18: #{tpu_custom_call.1} parent=5 // pred_check_branch
        %80 = sbr.rel (%p78) target = $region20
      $region19: #{tpu_custom_call.1} parent=5 // pred_region
        _
      $region20: #{tpu_custom_call.1} parent=5 // pred_fallthru
        _
      %p81 = scmp.le.s32.totalorder 1, %s9
      %p82 = scmp.lt.s32.totalorder %s9, 3
      %p83 = pnand %p81, %p82
      %p84 = pneg %p83
      // Predicated region
      $region21: #{tpu_custom_call.1} parent=5 // pred_check
        _
      $region22: #{tpu_custom_call.1} parent=5 // pred_check_branch
        %86 = sbr.rel (%p83) target = $region24
      $region23: #{tpu_custom_call.1} parent=5 // pred_region
        %s87 = ssub.s32 %s9, 1
        // Predicated region
        $region25: #{tpu_custom_call.1} parent=23 // pred_check
          %p88 = pneg %p30
        $region26: #{tpu_custom_call.1} parent=23 // pred_check_branch
          %90 = sbr.rel (%p88) target = $region28
        $region27: #{tpu_custom_call.1} parent=23 // pred_region
          %91 = dma.done [#allocation3], 128
        $region28: #{tpu_custom_call.1} parent=23 // pred_fallthru
          _
        %p92 = pneg %p30
        %p93 = pneg %p27
        %p94 = pneg %p51
        %p95 = pneg %p48
        %v96 = vld [vmem:[#allocation2] sm:$0xff]
        %v97 = vadd.f32 %v96, 1.0
        %98 = vst [vmem:[#allocation5] sm:$0xff] %v97
        // Predicated region
        $region29: #{tpu_custom_call.1} parent=23 // pred_check
          %p99 = pneg %p48
        $region30: #{tpu_custom_call.1} parent=23 // pred_check_branch
          %101 = sbr.rel (%p99) target = $region32
        $region31: #{tpu_custom_call.1} parent=23 // pred_region
          %s103 = ssub.s32 128, 128
          %104 = vsyncadd [#allocation4], %s103
          %s106 = sshll.u32 [#allocation5], 4
          %s107 = int_to_ptr.vmem [resolvable:$true] %s106
          %109 = dma.vmem_to_hbm [thread:$0]  %s107, 128, %s1, [#allocation4]
        $region32: #{tpu_custom_call.1} parent=23 // pred_fallthru
          _
        // Predicated region
        $region33: #{tpu_custom_call.1} parent=23 // pred_check
          %p110 = pneg %p48
        $region34: #{tpu_custom_call.1} parent=23 // pred_check_branch
          %112 = sbr.rel (%p110) target = $region36
        $region35: #{tpu_custom_call.1} parent=23 // pred_region
          %113 = dma.done [#allocation4], 128
        $region36: #{tpu_custom_call.1} parent=23 // pred_fallthru
          _
      $region24: #{tpu_custom_call.1} parent=5 // pred_fallthru
        _
      %p114 = scmp.le.s32.totalorder 2, %s9
      // Predicated region
      $region37: #{tpu_custom_call.1} parent=5 // pred_check
        %p115 = pneg %p114
      $region38: #{tpu_custom_call.1} parent=5 // pred_check_branch
        %117 = sbr.rel (%p115) target = $region40
      $region39: #{tpu_custom_call.1} parent=5 // pred_region
        %s118 = ssub.s32 %s9, 2
      $region40: #{tpu_custom_call.1} parent=5 // pred_fallthru
        _
    $region6: #{tpu_custom_call.1} parent=1 // loop_footer
      %s13 = sadd.s32 1, %s9
    $region7: #{tpu_custom_call.1} parent=1 // loop_footer_branch
      %8 = sbr.rel target = $region3
    $region8: #{tpu_custom_call.1} parent=1 // loop_exit
      _
    %119 = vsyncpa [#allocation3], 1
    %s120 = scalar_lea.sflag [#allocation3], 1
    %121 = vsyncpa %s120, 1
    %122 = vsyncpa [#allocation4], 1
    %s123 = scalar_lea.sflag [#allocation4], 1
    %124 = vsyncpa %s123, 1

// kernel: transformer_decoder.17
$region0: #{transformer_decoder.17}
  #allocation0 [shape = 'u32[]', space=smem, size = 0x4, offset = 0x4, fixed_abs, tag = 'smem constant byte address 0x4 - core index']
  #allocation1 [shape = 'u32[144,128]{1,0:T(1,128)}', space=vmem, size = 0x12000, scoped, tag = 'internal scratch']
  %s0 = inlined_call_operand.vmem [shape: bf16[2,4,8,8], index: 0, kind: input, shape index: {}]
  %s1 = inlined_call_operand.vmem [shape: bf16[2,4,8,8], index: 1, kind: input, shape index: {}]
  %s2 = inlined_call_operand.vmem [shape: bf16[2,4,8,8], index: 2, kind: input, shape index: {}]
  %s3 = inlined_call_operand.vmem [shape: bf16[2,4,8,8], index: 3, kind: output, shape index: {}]
  %s4 = sld [smem:[#allocation0]]
  $region45: #{transformer_decoder.17} parent=0
    _
  %s6 = ssub.s32 1, %s4
  %s7 = scalar_select 0, %s6, %s4
  loop: start=0, step=1, limit=10
  $region2: #{transformer_decoder.17} parent=0 // loop_pre_header
    _
  $region3: #{transformer_decoder.17} parent=0 // loop_header
    %s9 = sphi 0, %s13
    %p10 = scmp.ge.s32.totalorder %s9, 10
    %s16 = sphi 0, %s28
    %s17 = sphi 0, %s24
    %s18 = sphi 0, %s16
    %s19 = sphi 0, %s17
    %s20 = sphi 0, %s18
    %s21 = sphi 0, %s19
    %s33 = sphi 0, %s35
    %s36 = sphi 0, %s33
    %s37 = sphi 0, %s36
    %s53 = sphi 0, %s37
    %s61 = sphi 0, %s63
    %s64 = sphi 0, %s61
    %s65 = sphi 0, %s64
    %s81 = sphi 0, %s65
    %s89 = sphi 0, %s91
    %s92 = sphi 0, %s89
    %s93 = sphi 0, %s92
    %s109 = sphi 0, %s93
    %s117 = sphi 0, %s119
    %s120 = sphi 0, %s117
    %s121 = sphi 0, %s120
    %s137 = sphi 0, %s121
  $region4: #{transformer_decoder.17} parent=0 // loop_header_branch
    %12 = sbr.rel (%p10) target = $region8
  $region5: #{transformer_decoder.17} parent=0 // loop_body
    %s14 = ssub.s32 %s9, 1
    %s15 = ssub.s32 %s9, 2
    %s22 = sadd.s32 1, %s17
    %p23 = scmp.ge.s32.totalorder %s22, 4
    %s24 = scalar_select %p23, 0, %s22
    %s25 = sadd.s32 1, %s16
    %s26 = scalar_select %p23, %s25, %s16
    %p27 = scmp.ge.s32.totalorder %s26, 2
    %s28 = scalar_select %p27, 0, %s26
    %s29 = ssub.s32 %s16, %s28
    %s30 = ssub.s32 %s17, %s24
    %s31 = sor.u32 %s29, %s30
    %p32 = scmp.eq.s32.totalorder %s31, 0
    %s34 = sadd.s32 %s33, 1
    %s35 = scalar_select %p32, %s33, %s34
    %p38 = pneg %p32
    %p39 = scmp.eq.s32.totalorder %s9, 7
    %p40 = por %p38, %p39
    %p41 = scmp.ne.s32.totalorder %s33, %s36
    %p42 = scmp.eq.s32.totalorder %s9, 0
    %p43 = por %p41, %p42
    %p44 = scmp.ne.s32.totalorder %s33, %s36
    %p45 = scmp.eq.s32.totalorder %s14, 7
    %p46 = por %p44, %p45
    %p47 = scmp.ne.s32.totalorder %s36, %s37
    %p48 = scmp.eq.s32.totalorder %s14, 0
    %p49 = por %p47, %p48
    %p50 = scmp.ne.s32.totalorder %s36, %s37
    %p51 = scmp.eq.s32.totalorder %s15, 7
    %p52 = por %p50, %p51
    %p54 = scmp.ne.s32.totalorder %s37, %s53
    %p55 = scmp.eq.s32.totalorder %s15, 0
    %p56 = por %p54, %p55
    %s57 = ssub.s32 %s16, %s28
    %s58 = ssub.s32 %s17, %s24
    %s59 = sor.u32 %s57, %s58
    %p60 = scmp.eq.s32.totalorder %s59, 0
    %s62 = sadd.s32 %s61, 1
    %s63 = scalar_select %p60, %s61, %s62
    %p66 = pneg %p60
    %p67 = scmp.eq.s32.totalorder %s9, 7
    %p68 = por %p66, %p67
    %p69 = scmp.ne.s32.totalorder %s61, %s64
    %p70 = scmp.eq.s32.totalorder %s9, 0
    %p71 = por %p69, %p70
    %p72 = scmp.ne.s32.totalorder %s61, %s64
    %p73 = scmp.eq.s32.totalorder %s14, 7
    %p74 = por %p72, %p73
    %p75 = scmp.ne.s32.totalorder %s64, %s65
    %p76 = scmp.eq.s32.totalorder %s14, 0
    %p77 = por %p75, %p76
    %p78 = scmp.ne.s32.totalorder %s64, %s65
    %p79 = scmp.eq.s32.totalorder %s15, 7
    %p80 = por %p78, %p79
    %p82 = scmp.ne.s32.totalorder %s65, %s81
    %p83 = scmp.eq.s32.totalorder %s15, 0
    %p84 = por %p82, %p83
    %s85 = ssub.s32 %s16, %s28
    %s86 = ssub.s32 %s17, %s24
    %s87 = sor.u32 %s85, %s86
    %p88 = scmp.eq.s32.totalorder %s87, 0
    %s90 = sadd.s32 %s89, 1
    %s91 = scalar_select %p88, %s89, %s90
    %p94 = pneg %p88
    %p95 = scmp.eq.s32.totalorder %s9, 7
    %p96 = por %p94, %p95
    %p97 = scmp.ne.s32.totalorder %s89, %s92
    %p98 = scmp.eq.s32.totalorder %s9, 0
    %p99 = por %p97, %p98
    %p100 = scmp.ne.s32.totalorder %s89, %s92
    %p101 = scmp.eq.s32.totalorder %s14, 7
    %p102 = por %p100, %p101
    %p103 = scmp.ne.s32.totalorder %s92, %s93
    %p104 = scmp.eq.s32.totalorder %s14, 0
    %p105 = por %p103, %p104
    %p106 = scmp.ne.s32.totalorder %s92, %s93
    %p107 = scmp.eq.s32.totalorder %s15, 7
    %p108 = por %p106, %p107
    %p110 = scmp.ne.s32.totalorder %s93, %s109
    %p111 = scmp.eq.s32.totalorder %s15, 0
    %p112 = por %p110, %p111
    %s113 = ssub.s32 %s16, %s28
    %s114 = ssub.s32 %s17, %s24
    %s115 = sor.u32 %s113, %s114
    %p116 = scmp.eq.s32.totalorder %s115, 0
    %s118 = sadd.s32 %s117, 1
    %s119 = scalar_select %p116, %s117, %s118
    %p122 = pneg %p116
    %p123 = scmp.eq.s32.totalorder %s9, 7
    %p124 = por %p122, %p123
    %p125 = scmp.ne.s32.totalorder %s117, %s120
    %p126 = scmp.eq.s32.totalorder %s9, 0
    %p127 = por %p125, %p126
    %p128 = scmp.ne.s32.totalorder %s117, %s120
    %p129 = scmp.eq.s32.totalorder %s14, 7
    %p130 = por %p128, %p129
    %p131 = scmp.ne.s32.totalorder %s120, %s121
    %p132 = scmp.eq.s32.totalorder %s14, 0
    %p133 = por %p131, %p132
    %p134 = scmp.ne.s32.totalorder %s120, %s121
    %p135 = scmp.eq.s32.totalorder %s15, 7
    %p136 = por %p134, %p135
    %p138 = scmp.ne.s32.totalorder %s121, %s137
    %p139 = scmp.eq.s32.totalorder %s15, 0
    %p140 = por %p138, %p139
    %p141 = scmp.le.s32.totalorder 1, %s9
    %p142 = scmp.lt.s32.totalorder %s9, 9
    %p143 = pnand %p141, %p142
    %p144 = pneg %p143
    // Predicated region
    $region9: #{transformer_decoder.17} parent=5 // pred_check
      _
    $region10: #{transformer_decoder.17} parent=5 // pred_check_branch
      %146 = sbr.rel (%p143) target = $region12
    $region11: #{transformer_decoder.17} parent=5 // pred_region
      %s147 = ssub.s32 %s9, 1
    $region12: #{transformer_decoder.17} parent=5 // pred_fallthru
      _
    %p148 = scmp.lt.s32.totalorder %s9, 8
    // Predicated region
    $region13: #{transformer_decoder.17} parent=5 // pred_check
      %p149 = pneg %p148
    $region14: #{transformer_decoder.17} parent=5 // pred_check_branch
      %151 = sbr.rel (%p149) target = $region16
    $region15: #{transformer_decoder.17} parent=5 // pred_region
      // Predicated region
      $region17: #{transformer_decoder.17} parent=15 // pred_check
        %p152 = pneg %p43
      $region18: #{transformer_decoder.17} parent=15 // pred_check_branch
        %154 = sbr.rel (%p152) target = $region20
      $region19: #{transformer_decoder.17} parent=15 // pred_region
        %p155 = scmp.lt.s32.totalorder %s16, 1
        %s156 = scalar_select %p155, %s16, 1
        %p157 = scmp.lt.s32.totalorder %s17, 3
        %s158 = scalar_select %p157, %s17, 3
        %s159 = smul.addr %s156, 4
        %s160 = sadd.s32 %s158, %s159
        %s161 = smul.addr %s160, 4
        %s162 = scalar_lea.vmem %s0, %s161
      $region20: #{transformer_decoder.17} parent=15 // pred_fallthru
        _
      // Predicated region
      $region21: #{transformer_decoder.17} parent=15 // pred_check
        %p163 = pneg %p71
      $region22: #{transformer_decoder.17} parent=15 // pred_check_branch
        %165 = sbr.rel (%p163) target = $region24
      $region23: #{transformer_decoder.17} parent=15 // pred_region
        %p166 = scmp.lt.s32.totalorder %s16, 1
        %s167 = scalar_select %p166, %s16, 1
        %p168 = scmp.lt.s32.totalorder %s17, 3
        %s169 = scalar_select %p168, %s17, 3
        %s170 = smul.addr %s167, 4
        %s171 = sadd.s32 %s169, %s170
        %s172 = smul.addr %s171, 4
        %s173 = scalar_lea.vmem %s1, %s172
      $region24: #{transformer_decoder.17} parent=15 // pred_fallthru
        _
      // Predicated region
      $region25: #{transformer_decoder.17} parent=15 // pred_check
        %p174 = pneg %p99
      $region26: #{transformer_decoder.17} parent=15 // pred_check_branch
        %176 = sbr.rel (%p174) target = $region28
      $region27: #{transformer_decoder.17} parent=15 // pred_region
        %p177 = scmp.lt.s32.totalorder %s16, 1
        %s178 = scalar_select %p177, %s16, 1
        %p179 = scmp.lt.s32.totalorder %s17, 3
        %s180 = scalar_select %p179, %s17, 3
        %s181 = smul.addr %s178, 4
        %s182 = sadd.s32 %s180, %s181
        %s183 = smul.addr %s182, 4
        %s184 = scalar_lea.vmem %s2, %s183
      $region28: #{transformer_decoder.17} parent=15 // pred_fallthru
        _
    $region16: #{transformer_decoder.17} parent=5 // pred_fallthru
      _
    %p185 = scmp.le.s32.totalorder 1, %s9
    %p186 = scmp.lt.s32.totalorder %s9, 9
    %p187 = pnand %p185, %p186
    %p188 = pneg %p187
    // Predicated region
    $region29: #{transformer_decoder.17} parent=5 // pred_check
      _
    $region30: #{transformer_decoder.17} parent=5 // pred_check_branch
      %190 = sbr.rel (%p187) target = $region32
    $region31: #{transformer_decoder.17} parent=5 // pred_region
      %s191 = ssub.s32 %s9, 1
      %p192 = scmp.lt.s32.totalorder %s18, 1
      %s193 = scalar_select %p192, %s18, 1
      %p194 = scmp.lt.s32.totalorder %s19, 3
      %s195 = scalar_select %p194, %s19, 3
      %s196 = smul.addr %s193, 4
      %s197 = sadd.s32 %s195, %s196
      %s198 = smul.addr %s197, 4
      %s199 = scalar_lea.vmem %s0, %s198
      %p200 = pneg %p49
      %p201 = pneg %p46
      %p202 = scmp.lt.s32.totalorder %s18, 1
      %s203 = scalar_select %p202, %s18, 1
      %p204 = scmp.lt.s32.totalorder %s19, 3
      %s205 = scalar_select %p204, %s19, 3
      %s206 = smul.addr %s203, 4
      %s207 = sadd.s32 %s205, %s206
      %s208 = smul.addr %s207, 4
      %s209 = scalar_lea.vmem %s1, %s208
      %p210 = pneg %p77
      %p211 = pneg %p74
      %p212 = scmp.lt.s32.totalorder %s18, 1
      %s213 = scalar_select %p212, %s18, 1
      %p214 = scmp.lt.s32.totalorder %s19, 3
      %s215 = scalar_select %p214, %s19, 3
      %s216 = smul.addr %s213, 4
      %s217 = sadd.s32 %s215, %s216
      %s218 = smul.addr %s217, 4
      %s219 = scalar_lea.vmem %s2, %s218
      %p220 = pneg %p105
      %p221 = pneg %p102
      %p222 = pneg %p133
      %p223 = pneg %p130
      %p224 = scmp.lt.s32.totalorder %s18, 1
      %s225 = scalar_select %p224, %s18, 1
      %p226 = scmp.lt.s32.totalorder %s19, 3
      %s227 = scalar_select %p226, %s19, 3
      %s228 = smul.addr %s225, 4
      %s229 = sadd.s32 %s227, %s228
      %s230 = smul.addr %s229, 4
      %s231 = scalar_lea.vmem %s3, %s230
      %p232 = scmp.lt.s32.totalorder %s18, 1
      %s233 = scalar_select %p232, %s18, 1
      %p234 = scmp.lt.s32.totalorder %s19, 3
      %s235 = scalar_select %p234, %s19, 3
      %s236 = smul.addr %s233, 4
      %s237 = sadd.s32 %s235, %s236
      %s238 = smul.addr %s237, 4
      %s239 = scalar_lea.vmem %s0, %s238
      %p240 = scmp.lt.s32.totalorder %s18, 1
      %s241 = scalar_select %p240, %s18, 1
      %p242 = scmp.lt.s32.totalorder %s19, 3
      %s243 = scalar_select %p242, %s19, 3
      %s244 = smul.addr %s241, 4
      %s245 = sadd.s32 %s243, %s244
      %s246 = smul.addr %s245, 4
      %s247 = scalar_lea.vmem %s1, %s246
      %p248 = scmp.lt.s32.totalorder %s18, 1
      %s249 = scalar_select %p248, %s18, 1
      %p250 = scmp.lt.s32.totalorder %s19, 3
      %s251 = scalar_select %p250, %s19, 3
      %s252 = smul.addr %s249, 4
      %s253 = sadd.s32 %s251, %s252
      %s254 = smul.addr %s253, 4
      %s255 = scalar_lea.vmem %s2, %s254
      %p256 = scmp.lt.s32.totalorder %s18, 1
      %s257 = scalar_select %p256, %s18, 1
      %p258 = scmp.lt.s32.totalorder %s19, 3
      %s259 = scalar_select %p258, %s19, 3
      %s260 = smul.addr %s257, 4
      %s261 = sadd.s32 %s259, %s260
      %s262 = smul.addr %s261, 4
      %s263 = scalar_lea.vmem %s3, %s262
      %v265 = vld [vmem:[%s239] sm:$0xf]
      %v266 = vld [vmem:[%s247] sm:$0xf]
      %v267 = vld [vmem:[%s255] sm:$0xf]
      %vm268 = vcmask 64512
      %v270 = vsel %vm268, %v265, 0
      %v273 = vsel %vm268, %v266, 0
      %275 = vmatprep.subr.bf16.mxu0 0
      %276 = vmatpush1.bf16.xpose.msra.mxu0 %v273
      %277 = vmatprep.subr.bf16.mxu0 0
      %278 = vmatpush1.bf16.xpose.msra.mxu0 0
      %279 = vmatprep.subr.bf16.mxu0 0
      %280 = vmatpush1.bf16.xpose.msra.mxu0 0
      %281 = vmatprep.subr.bf16.mxu0 0
      %282 = vmatpush1.bf16.xpose.msra.mxu0 0
      %283 = vmatprep.subr.bf16.mxu0 0
      %284 = vmatpush1.bf16.xpose.msra.mxu0 0
      %285 = vmatprep.subr.bf16.mxu0 0
      %286 = vmatpush1.bf16.xpose.msra.mxu0 0
      %287 = vmatprep.subr.bf16.mxu0 0
      %288 = vmatpush1.bf16.xpose.msra.mxu0 0
      %289 = vmatprep.subr.bf16.mxu0 0
      %290 = vmatpush1.bf16.xpose.msra.mxu0 0
      %291 = vmatprep.subr.bf16.mxu0 0
      %292 = vmatpush1.bf16.xpose.msra.mxu0 0
      %293 = vmatprep.subr.bf16.mxu0 0
      %294 = vmatpush1.bf16.xpose.msra.mxu0 0
      %295 = vmatprep.subr.bf16.mxu0 0
      %296 = vmatpush1.bf16.xpose.msra.mxu0 0
      %297 = vmatprep.subr.bf16.mxu0 0
      %298 = vmatpush1.bf16.xpose.msra.mxu0 0
      %299 = vmatprep.subr.bf16.mxu0 0
      %300 = vmatpush1.bf16.xpose.msra.mxu0 0
      %301 = vmatprep.subr.bf16.mxu0 0
      %302 = vmatpush1.bf16.xpose.msra.mxu0 0
      %303 = vmatprep.subr.bf16.mxu0 0
      %304 = vmatpush1.bf16.xpose.msra.mxu0 0
      %305 = vmatprep.subr.bf16.mxu0 0
      %306 = vmatpush1.bf16.xpose.msra.mxu0 0
      %307 = vmatprep.mubr.bf16.mxu0 0
      %308 = vmatmul.mubr.bf16.gmra.mrb[0].mxu0 %v270
      %v309 = vpop.f32.mrb[0].mxu0
      %v310 = vadd.f32 0.0, %v309
      %v311 = vpop.f32.mrb[0].mxu0
      %v312 = vpop.f32.mrb[0].mxu0
      %v313 = vpop.f32.mrb[0].mxu0
      %314 = vdwg.mxu0
      %v315 = vmul.f32 %v310, 0.35355338
      %v316 = vsel %vm268, %v315, -inf
      %317 = vmax.xlane.f32.xlu0 %v316
      %v318 = vpop.xlane.xlu0 %317
      %v319 = vsub.f32 %v315, %v318
      %v320 = vmul.f32 %v319, 1.442695
      %v321 = vpow.pop %v320
      %v322 = vsel %vm268, %v321, 0.0
      %323 = vadd.xlane.f32.xlu0 %v322
      %v324 = vpop.xlane.xlu0 %323
      %v325 = vrcp.pop %v324
      %v326 = vmul.f32 %v321, %v325
      %v327 = vpack.c.bf16 %v326, %v326
      %v329 = vsel %vm268, %v327, 0
      %vm331 = vcmask 1043456
      %v333 = vsel %vm331, %v267, 0
      %335 = vmatprep.subr.bf16.mxu0 0
      %336 = vmatpush1.bf16.msra.mxu0 %v333
      %337 = vmatprep.subr.bf16.mxu0 0
      %338 = vmatpush1.bf16.msra.mxu0 0
      %339 = vmatprep.subr.bf16.mxu0 0
      %340 = vmatpush1.bf16.msra.mxu0 0
      %341 = vmatprep.subr.bf16.mxu0 0
      %342 = vmatpush1.bf16.msra.mxu0 0
      %343 = vmatprep.subr.bf16.mxu0 0
      %344 = vmatpush1.bf16.msra.mxu0 0
      %345 = vmatprep.subr.bf16.mxu0 0
      %346 = vmatpush1.bf16.msra.mxu0 0
      %347 = vmatprep.subr.bf16.mxu0 0
      %348 = vmatpush1.bf16.msra.mxu0 0
      %349 = vmatprep.subr.bf16.mxu0 0
      %350 = vmatpush1.bf16.msra.mxu0 0
      %351 = vmatprep.subr.bf16.mxu0 0
      %352 = vmatpush1.bf16.msra.mxu0 0
      %353 = vmatprep.subr.bf16.mxu0 0
      %354 = vmatpush1.bf16.msra.mxu0 0
      %355 = vmatprep.subr.bf16.mxu0 0
      %356 = vmatpush1.bf16.msra.mxu0 0
      %357 = vmatprep.subr.bf16.mxu0 0
      %358 = vmatpush1.bf16.msra.mxu0 0
      %359 = vmatprep.subr.bf16.mxu0 0
      %360 = vmatpush1.bf16.msra.mxu0 0
      %361 = vmatprep.subr.bf16.mxu0 0
      %362 = vmatpush1.bf16.msra.mxu0 0
      %363 = vmatprep.subr.bf16.mxu0 0
      %364 = vmatpush1.bf16.msra.mxu0 0
      %365 = vmatprep.subr.bf16.mxu0 0
      %366 = vmatpush1.bf16.msra.mxu0 0
      %367 = vmatprep.mubr.bf16.mxu0 0
      %368 = vmatmul.mubr.bf16.gmra.mrb[0].mxu0 %v329
      %v369 = vpop.f32.mrb[0].mxu0
      %v370 = vadd.f32 0.0, %v369
      %v371 = vpop.f32.mrb[0].mxu0
      %v372 = vpop.f32.mrb[0].mxu0
      %v373 = vpop.f32.mrb[0].mxu0
      %374 = vdwg.mxu0
      %v375 = vpack.c.bf16 %v370, %v370
      %vm376 = vcmask 60416
      %377 = vst.msk [vmem:[%s263] sm:$0xf] %vm376, %v375
      %p378 = scmp.lt.s32.totalorder %s18, 1
      %s379 = scalar_select %p378, %s18, 1
      %p380 = scmp.lt.s32.totalorder %s19, 3
      %s381 = scalar_select %p380, %s19, 3
      %s382 = smul.addr %s379, 4
      %s383 = sadd.s32 %s381, %s382
      %s384 = smul.addr %s383, 4
      %s385 = scalar_lea.vmem %s3, %s384
      // Predicated region
      $region33: #{transformer_decoder.17} parent=31 // pred_check
        %p386 = pneg %p130
      $region34: #{transformer_decoder.17} parent=31 // pred_check_branch
        %388 = sbr.rel (%p386) target = $region36
      $region35: #{transformer_decoder.17} parent=31 // pred_region
        _
      $region36: #{transformer_decoder.17} parent=31 // pred_fallthru
        _
    $region32: #{transformer_decoder.17} parent=5 // pred_fallthru
      _
    %p389 = scmp.le.s32.totalorder 2, %s9
    // Predicated region
    $region37: #{transformer_decoder.17} parent=5 // pred_check
      %p390 = pneg %p389
    $region38: #{transformer_decoder.17} parent=5 // pred_check_branch
      %392 = sbr.rel (%p390) target = $region40
    $region39: #{transformer_decoder.17} parent=5 // pred_region
      %s393 = ssub.s32 %s9, 2
      // Predicated region
      $region41: #{transformer_decoder.17} parent=39 // pred_check
        %p394 = pneg %p136
      $region42: #{transformer_decoder.17} parent=39 // pred_check_branch
        %396 = sbr.rel (%p394) target = $region44
      $region43: #{transformer_decoder.17} parent=39 // pred_region
        %p397 = scmp.lt.s32.totalorder %s20, 1
        %s398 = scalar_select %p397, %s20, 1
        %p399 = scmp.lt.s32.totalorder %s21, 3
        %s400 = scalar_select %p399, %s21, 3
        %s401 = smul.addr %s398, 4
        %s402 = sadd.s32 %s400, %s401
        %s403 = smul.addr %s402, 4
        %s404 = scalar_lea.vmem %s3, %s403
      $region44: #{transformer_decoder.17} parent=39 // pred_fallthru
        _
    $region40: #{transformer_decoder.17} parent=5 // pred_fallthru
      _
  $region6: #{transformer_decoder.17} parent=0 // loop_footer
    %s13 = sadd.s32 1, %s9
  $region7: #{transformer_decoder.17} parent=0 // loop_footer_branch
    %8 = sbr.rel target = $region3
  $region8: #{transformer_decoder.17} parent=0 // loop_exit
    _

// kernel: transformer_decoder.15
$region0: #{transformer_decoder.15}
  #allocation0 [shape = 'u32[]', space=smem, size = 0x4, offset = 0x4, fixed_abs, tag = 'smem constant byte address 0x4 - core index']
  #allocation1 [shape = 'u32[144,128]{1,0:T(1,128)}', space=vmem, size = 0x12000, scoped, tag = 'internal scratch']
  %s0 = inlined_call_operand.vmem [shape: f32[32,32], index: 0, kind: input, shape index: {}]
  %s1 = inlined_call_operand.vmem [shape: f32[1,32], index: 1, kind: input, shape index: {}]
  %s2 = inlined_call_operand.vmem [shape: f32[1,32], index: 2, kind: input, shape index: {}]
  %s3 = inlined_call_operand.vmem [shape: bf16[32,32], index: 3, kind: output, shape index: {}]
  %s4 = sld [smem:[#allocation0]]
  $region45: #{transformer_decoder.15} parent=0
    _
  %s6 = ssub.s32 1, %s4
  %s7 = scalar_select 0, %s6, %s4
  loop: start=0, step=1, limit=4
  $region2: #{transformer_decoder.15} parent=0 // loop_pre_header
    _
  $region3: #{transformer_decoder.15} parent=0 // loop_header
    %s9 = sphi 0, %s13
    %p10 = scmp.ge.s32.totalorder %s9, 4
    %s19 = sphi 0, %s21
    %s22 = sphi 0, %s19
    %s23 = sphi 0, %s22
    %s39 = sphi 0, %s23
    %s43 = sphi 0, %s43
    %s45 = sphi 0, %s43
    %s46 = sphi 0, %s45
    %s60 = sphi 0, %s46
    %s64 = sphi 0, %s64
    %s66 = sphi 0, %s64
    %s67 = sphi 0, %s66
    %s81 = sphi 0, %s67
    %s87 = sphi 0, %s89
    %s90 = sphi 0, %s87
    %s91 = sphi 0, %s90
    %s107 = sphi 0, %s91
  $region4: #{transformer_decoder.15} parent=0 // loop_header_branch
    %12 = sbr.rel (%p10) target = $region8
  $region5: #{transformer_decoder.15} parent=0 // loop_body
    %s14 = ssub.s32 %s9, 1
    %s15 = ssub.s32 %s9, 2
    %s16 = sadd.s32 %s9, 1
    %s17 = ssub.s32 %s9, %s16
    %p18 = scmp.eq.s32.totalorder %s17, 0
    %s20 = sadd.s32 %s19, 1
    %s21 = scalar_select %p18, %s19, %s20
    %p24 = pneg %p18
    %p25 = scmp.eq.s32.totalorder %s9, 1
    %p26 = por %p24, %p25
    %p27 = scmp.ne.s32.totalorder %s19, %s22
    %p28 = scmp.eq.s32.totalorder %s9, 0
    %p29 = por %p27, %p28
    %p30 = scmp.ne.s32.totalorder %s19, %s22
    %p31 = scmp.eq.s32.totalorder %s14, 1
    %p32 = por %p30, %p31
    %p33 = scmp.ne.s32.totalorder %s22, %s23
    %p34 = scmp.eq.s32.totalorder %s14, 0
    %p35 = por %p33, %p34
    %p36 = scmp.ne.s32.totalorder %s22, %s23
    %p37 = scmp.eq.s32.totalorder %s15, 1
    %p38 = por %p36, %p37
    %p40 = scmp.ne.s32.totalorder %s23, %s39
    %p41 = scmp.eq.s32.totalorder %s15, 0
    %p42 = por %p40, %p41
    %s44 = sadd.s32 %s43, 1
    %p47 = scmp.eq.s32.totalorder %s9, 1
    %p48 = scmp.ne.s32.totalorder %s43, %s45
    %p49 = scmp.eq.s32.totalorder %s9, 0
    %p50 = por %p48, %p49
    %p51 = scmp.ne.s32.totalorder %s43, %s45
    %p52 = scmp.eq.s32.totalorder %s14, 1
    %p53 = por %p51, %p52
    %p54 = scmp.ne.s32.totalorder %s45, %s46
    %p55 = scmp.eq.s32.totalorder %s14, 0
    %p56 = por %p54, %p55
    %p57 = scmp.ne.s32.totalorder %s45, %s46
    %p58 = scmp.eq.s32.totalorder %s15, 1
    %p59 = por %p57, %p58
    %p61 = scmp.ne.s32.totalorder %s46, %s60
    %p62 = scmp.eq.s32.totalorder %s15, 0
    %p63 = por %p61, %p62
    %s65 = sadd.s32 %s64, 1
    %p68 = scmp.eq.s32.totalorder %s9, 1
    %p69 = scmp.ne.s32.totalorder %s64, %s66
    %p70 = scmp.eq.s32.totalorder %s9, 0
    %p71 = por %p69, %p70
    %p72 = scmp.ne.s32.totalorder %s64, %s66
    %p73 = scmp.eq.s32.totalorder %s14, 1
    %p74 = por %p72, %p73
    %p75 = scmp.ne.s32.totalorder %s66, %s67
    %p76 = scmp.eq.s32.totalorder %s14, 0
    %p77 = por %p75, %p76
    %p78 = scmp.ne.s32.totalorder %s66, %s67
    %p79 = scmp.eq.s32.totalorder %s15, 1
    %p80 = por %p78, %p79
    %p82 = scmp.ne.s32.totalorder %s67, %s81
    %p83 = scmp.eq.s32.totalorder %s15, 0
    %p84 = por %p82, %p83
    %s85 = ssub.s32 %s9, %s16
    %p86 = scmp.eq.s32.totalorder %s85, 0
    %s88 = sadd.s32 %s87, 1
    %s89 = scalar_select %p86, %s87, %s88
    %p92 = pneg %p86
    %p93 = scmp.eq.s32.totalorder %s9, 1
    %p94 = por %p92, %p93
    %p95 = scmp.ne.s32.totalorder %s87, %s90
    %p96 = scmp.eq.s32.totalorder %s9, 0
    %p97 = por %p95, %p96
    %p98 = scmp.ne.s32.totalorder %s87, %s90
    %p99 = scmp.eq.s32.totalorder %s14, 1
    %p100 = por %p98, %p99
    %p101 = scmp.ne.s32.totalorder %s90, %s91
    %p102 = scmp.eq.s32.totalorder %s14, 0
    %p103 = por %p101, %p102
    %p104 = scmp.ne.s32.totalorder %s90, %s91
    %p105 = scmp.eq.s32.totalorder %s15, 1
    %p106 = por %p104, %p105
    %p108 = scmp.ne.s32.totalorder %s91, %s107
    %p109 = scmp.eq.s32.totalorder %s15, 0
    %p110 = por %p108, %p109
    %p111 = scmp.le.s32.totalorder 1, %s9
    %p112 = scmp.lt.s32.totalorder %s9, 3
    %p113 = pnand %p111, %p112
    %p114 = pneg %p113
    // Predicated region
    $region9: #{transformer_decoder.15} parent=5 // pred_check
      _
    $region10: #{transformer_decoder.15} parent=5 // pred_check_branch
      %116 = sbr.rel (%p113) target = $region12
    $region11: #{transformer_decoder.15} parent=5 // pred_region
      %s117 = ssub.s32 %s9, 1
      // Predicated region
      $region13: #{transformer_decoder.15} parent=11 // pred_check
        %p118 = pneg %p56
      $region14: #{transformer_decoder.15} parent=11 // pred_check_branch
        %120 = sbr.rel (%p118) target = $region16
      $region15: #{transformer_decoder.15} parent=11 // pred_region
        _
      $region16: #{transformer_decoder.15} parent=11 // pred_fallthru
        _
      // Predicated region
      $region17: #{transformer_decoder.15} parent=11 // pred_check
        %p121 = pneg %p77
      $region18: #{transformer_decoder.15} parent=11 // pred_check_branch
        %123 = sbr.rel (%p121) target = $region20
      $region19: #{transformer_decoder.15} parent=11 // pred_region
        _
      $region20: #{transformer_decoder.15} parent=11 // pred_fallthru
        _
    $region12: #{transformer_decoder.15} parent=5 // pred_fallthru
      _
    %p124 = scmp.lt.s32.totalorder %s9, 2
    // Predicated region
    $region21: #{transformer_decoder.15} parent=5 // pred_check
      %p125 = pneg %p124
    $region22: #{transformer_decoder.15} parent=5 // pred_check_branch
      %127 = sbr.rel (%p125) target = $region24
    $region23: #{transformer_decoder.15} parent=5 // pred_region
      // Predicated region
      $region25: #{transformer_decoder.15} parent=23 // pred_check
        %p128 = pneg %p29
      $region26: #{transformer_decoder.15} parent=23 // pred_check_branch
        %130 = sbr.rel (%p128) target = $region28
      $region27: #{transformer_decoder.15} parent=23 // pred_region
        %s131 = smul.u32 2, %s9
        %p132 = scmp.lt.s32.totalorder %s131, 3
        %s133 = scalar_select %p132, %s131, 3
        %s134 = smul.addr %s133, 8
        %s135 = scalar_lea.vmem %s0, %s134
        %s136 = smul.u32 2, %s9
      $region28: #{transformer_decoder.15} parent=23 // pred_fallthru
        _
    $region24: #{transformer_decoder.15} parent=5 // pred_fallthru
      _
    %p137 = scmp.le.s32.totalorder 1, %s9
    %p138 = scmp.lt.s32.totalorder %s9, 3
    %p139 = pnand %p137, %p138
    %p140 = pneg %p139
    // Predicated region
    $region29: #{transformer_decoder.15} parent=5 // pred_check
      _
    $region30: #{transformer_decoder.15} parent=5 // pred_check_branch
      %142 = sbr.rel (%p139) target = $region32
    $region31: #{transformer_decoder.15} parent=5 // pred_region
      %s143 = ssub.s32 %s9, 1
      %s144 = smul.u32 2, %s14
      %p145 = scmp.lt.s32.totalorder %s144, 3
      %s146 = scalar_select %p145, %s144, 3
      %s147 = smul.addr %s146, 8
      %s148 = scalar_lea.vmem %s0, %s147
      %p149 = pneg %p35
      %p150 = pneg %p32
      %p151 = pneg %p56
      %p152 = pneg %p53
      %p153 = pneg %p77
      %p154 = pneg %p74
      %p155 = pneg %p103
      %p156 = pneg %p100
      %s157 = smul.u32 2, %s14
      %p158 = scmp.lt.s32.totalorder %s157, 3
      %s159 = scalar_select %p158, %s157, 3
      %s160 = smul.addr %s159, 4
      %s161 = scalar_lea.vmem %s3, %s160
      %s162 = smul.u32 2, %s14
      %p163 = scmp.lt.s32.totalorder %s162, 3
      %s164 = scalar_select %p163, %s162, 3
      %s165 = smul.addr %s164, 8
      %s166 = scalar_lea.vmem %s0, %s165
      %s167 = smul.u32 2, %s14
      %s168 = smul.u32 2, %s14
      %p169 = scmp.lt.s32.totalorder %s168, 3
      %s170 = scalar_select %p169, %s168, 3
      %s171 = smul.addr %s170, 4
      %s172 = scalar_lea.vmem %s3, %s171
      %s173 = smul.u32 2, %s14
      %v174 = vld [vmem:[%s166] sm:$0xff]
      %v175 = vld [vmem:[%s166 + $0x8] sm:$0xff]
      %v176 = vld [vmem:[%s1] sm:$0x1]
      %v177 = vld [vmem:[%s2] sm:$0x1]
      %vm178 = vcmask 261120
      %v179 = vsel %vm178, %v174, 0.0
      %180 = vadd.xlane.f32.xlu0 %v179
      %v181 = vpop.xlane.xlu0 %180
      %v182 = vsel %vm178, %v175, 0.0
      %183 = vadd.xlane.f32.xlu0 %v182
      %v184 = vpop.xlane.xlu0 %183
      %v185 = vrcp.pop 32.0
      %v186 = vmul.f32 %v181, %v185
      %v187 = vmul.f32 %v184, %v185
      %v188 = vsub.f32 %v174, %v186
      %v189 = vsub.f32 %v175, %v187
      %v190 = vmul.f32 %v188, %v188
      %v191 = vmul.f32 %v189, %v189
      %v192 = vsel %vm178, %v190, 0.0
      %193 = vadd.xlane.f32.xlu0 %v192
      %v194 = vpop.xlane.xlu0 %193
      %v195 = vsel %vm178, %v191, 0.0
      %196 = vadd.xlane.f32.xlu0 %v195
      %v197 = vpop.xlane.xlu0 %196
      %v198 = vmul.f32 %v194, %v185
      %v199 = vmul.f32 %v197, %v185
      %v200 = vadd.f32 %v198, 1e-05
      %v201 = vadd.f32 %v199, 1e-05
      %v202 = vrsqrt.pop %v200
      %v203 = vrsqrt.pop %v201
      %v204 = vmul.f32 %v188, %v202
      %v205 = vmul.f32 %v189, %v203
      %v207 = vlaneseq
      %v208 = vshrl.u32 %v207, 7
      %v209 = vsub.s32 0, %v208
      %v210 = vrot.slane %v176, %v209
      %v212 = vmul.f32 %v204, %v210
      %v213 = vmul.f32 %v205, %v210
      %v215 = vlaneseq
      %v216 = vshrl.u32 %v215, 7
      %v217 = vsub.s32 0, %v216
      %v218 = vrot.slane %v177, %v217
      %v220 = vadd.f32 %v212, %v218
      %v221 = vadd.f32 %v213, %v218
      %v222 = vpack.c.bf16 %v221, %v220
      %v224 = vunpack.c.l.b16 %v222
      %v225 = vunpack.c.h.b16 %v222
      %v226 = vpack.c.b16 %v224, %v224
      %v227 = vpack.c.b16 %v225, %v225
      %vm230 = vcmask 257024
      %231 = vst.msk [vmem:[%s172] sm:$0xf] %vm230, %v226
      %232 = vst.msk [vmem:[%s172 + $0x4] sm:$0xf] %vm230, %v227
      %s233 = smul.u32 2, %s14
      %p234 = scmp.lt.s32.totalorder %s233, 3
      %s235 = scalar_select %p234, %s233, 3
      %s236 = smul.addr %s235, 4
      %s237 = scalar_lea.vmem %s3, %s236
      // Predicated region
      $region33: #{transformer_decoder.15} parent=31 // pred_check
        %p238 = pneg %p100
      $region34: #{transformer_decoder.15} parent=31 // pred_check_branch
        %240 = sbr.rel (%p238) target = $region36
      $region35: #{transformer_decoder.15} parent=31 // pred_region
        %s241 = smul.u32 2, %s14
      $region36: #{transformer_decoder.15} parent=31 // pred_fallthru
        _
    $region32: #{transformer_decoder.15} parent=5 // pred_fallthru
      _
    %p242 = scmp.le.s32.totalorder 2, %s9
    // Predicated region
    $region37: #{transformer_decoder.15} parent=5 // pred_check
      %p243 = pneg %p242
    $region38: #{transformer_decoder.15} parent=5 // pred_check_branch
      %245 = sbr.rel (%p243) target = $region40
    $region39: #{transformer_decoder.15} parent=5 // pred_region
      %s246 = ssub.s32 %s9, 2
      // Predicated region
      $region41: #{transformer_decoder.15} parent=39 // pred_check
        %p247 = pneg %p106
      $region42: #{transformer_decoder.15} parent=39 // pred_check_branch
        %249 = sbr.rel (%p247) target = $region44
      $region43: #{transformer_decoder.15} parent=39 // pred_region
        %s250 = smul.u32 2, %s15
        %p251 = scmp.lt.s32.totalorder %s250, 3
        %s252 = scalar_select %p251, %s250, 3
        %s253 = smul.addr %s252, 4
        %s254 = scalar_lea.vmem %s3, %s253
      $region44: #{transformer_decoder.15} parent=39 // pred_fallthru
        _
    $region40: #{transformer_decoder.15} parent=5 // pred_fallthru
      _
  $region6: #{transformer_decoder.15} parent=0 // loop_footer
    %s13 = sadd.s32 1, %s9
  $region7: #{transformer_decoder.15} parent=0 // loop_footer_branch
    %8 = sbr.rel target = $region3
  $region8: #{transformer_decoder.15} parent=0 // loop_exit
    _

// kernel: transformer_decoder.16
$region0: #{transformer_decoder.16}
  #allocation0 [shape = 'u32[]', space=smem, size = 0x4, offset = 0x4, fixed_abs, tag = 'smem constant byte address 0x4 - core index']
  #allocation1 [shape = 'u32[144,128]{1,0:T(1,128)}', space=vmem, size = 0x12000, scoped, tag = 'internal scratch']
  %s0 = inlined_call_operand.vmem [shape: f32[16,32], index: 0, kind: input, shape index: {}]
  %s1 = inlined_call_operand.vmem [shape: f32[16,32], index: 1, kind: input, shape index: {}]
  %s2 = inlined_call_operand.vmem [shape: f32[1,32], index: 2, kind: input, shape index: {}]
  %s3 = inlined_call_operand.vmem [shape: f32[1,32], index: 3, kind: input, shape index: {}]
  %s4 = inlined_call_operand.vmem [shape: bf16[32,96], index: 4, kind: input, shape index: {}]
  %s5 = inlined_call_operand.vmem [shape: f32[1,96], index: 5, kind: input, shape index: {}]
  %s6 = inlined_call_operand.vmem [shape: f32[16,32], index: 6, kind: output, shape index: {0}]
  %s7 = inlined_call_operand.vmem [shape: bf16[16,96], index: 7, kind: output, shape index: {1}]
  %8 = xla_tuple %s6, %s7
  %s9 = sld [smem:[#allocation0]]
  $region65: #{transformer_decoder.16} parent=0
    _
  %s11 = ssub.s32 1, %s9
  %s12 = scalar_select 0, %s11, %s9
  loop: start=0, step=1, limit=4
  $region2: #{transformer_decoder.16} parent=0 // loop_pre_header
    _
  $region3: #{transformer_decoder.16} parent=0 // loop_header
    %s14 = sphi 0, %s18
    %p15 = scmp.ge.s32.totalorder %s14, 4
    %s24 = sphi 0, %s26
    %s27 = sphi 0, %s24
    %s28 = sphi 0, %s27
    %s44 = sphi 0, %s28
    %s50 = sphi 0, %s52
    %s53 = sphi 0, %s50
    %s54 = sphi 0, %s53
    %s70 = sphi 0, %s54
    %s74 = sphi 0, %s74
    %s76 = sphi 0, %s74
    %s77 = sphi 0, %s76
    %s91 = sphi 0, %s77
    %s95 = sphi 0, %s95
    %s97 = sphi 0, %s95
    %s98 = sphi 0, %s97
    %s112 = sphi 0, %s98
    %s116 = sphi 0, %s116
    %s118 = sphi 0, %s116
    %s119 = sphi 0, %s118
    %s133 = sphi 0, %s119
    %s137 = sphi 0, %s137
    %s139 = sphi 0, %s137
    %s140 = sphi 0, %s139
    %s154 = sphi 0, %s140
    %s160 = sphi 0, %s162
    %s163 = sphi 0, %s160
    %s164 = sphi 0, %s163
    %s180 = sphi 0, %s164
    %s186 = sphi 0, %s188
    %s189 = sphi 0, %s186
    %s190 = sphi 0, %s189
    %s206 = sphi 0, %s190
  $region4: #{transformer_decoder.16} parent=0 // loop_header_branch
    %17 = sbr.rel (%p15) target = $region8
  $region5: #{transformer_decoder.16} parent=0 // loop_body
    %s19 = ssub.s32 %s14, 1
    %s20 = ssub.s32 %s14, 2
    %s21 = sadd.s32 %s14, 1
    %s22 = ssub.s32 %s14, %s21
    %p23 = scmp.eq.s32.totalorder %s22, 0
    %s25 = sadd.s32 %s24, 1
    %s26 = scalar_select %p23, %s24, %s25
    %p29 = pneg %p23
    %p30 = scmp.eq.s32.totalorder %s14, 1
    %p31 = por %p29, %p30
    %p32 = scmp.ne.s32.totalorder %s24, %s27
    %p33 = scmp.eq.s32.totalorder %s14, 0
    %p34 = por %p32, %p33
    %p35 = scmp.ne.s32.totalorder %s24, %s27
    %p36 = scmp.eq.s32.totalorder %s19, 1
    %p37 = por %p35, %p36
    %p38 = scmp.ne.s32.totalorder %s27, %s28
    %p39 = scmp.eq.s32.totalorder %s19, 0
    %p40 = por %p38, %p39
    %p41 = scmp.ne.s32.totalorder %s27, %s28
    %p42 = scmp.eq.s32.totalorder %s20, 1
    %p43 = por %p41, %p42
    %p45 = scmp.ne.s32.totalorder %s28, %s44
    %p46 = scmp.eq.s32.totalorder %s20, 0
    %p47 = por %p45, %p46
    %s48 = ssub.s32 %s14, %s21
    %p49 = scmp.eq.s32.totalorder %s48, 0
    %s51 = sadd.s32 %s50, 1
    %s52 = scalar_select %p49, %s50, %s51
    %p55 = pneg %p49
    %p56 = scmp.eq.s32.totalorder %s14, 1
    %p57 = por %p55, %p56
    %p58 = scmp.ne.s32.totalorder %s50, %s53
    %p59 = scmp.eq.s32.totalorder %s14, 0
    %p60 = por %p58, %p59
    %p61 = scmp.ne.s32.totalorder %s50, %s53
    %p62 = scmp.eq.s32.totalorder %s19, 1
    %p63 = por %p61, %p62
    %p64 = scmp.ne.s32.totalorder %s53, %s54
    %p65 = scmp.eq.s32.totalorder %s19, 0
    %p66 = por %p64, %p65
    %p67 = scmp.ne.s32.totalorder %s53, %s54
    %p68 = scmp.eq.s32.totalorder %s20, 1
    %p69 = por %p67, %p68
    %p71 = scmp.ne.s32.totalorder %s54, %s70
    %p72 = scmp.eq.s32.totalorder %s20, 0
    %p73 = por %p71, %p72
    %s75 = sadd.s32 %s74, 1
    %p78 = scmp.eq.s32.totalorder %s14, 1
    %p79 = scmp.ne.s32.totalorder %s74, %s76
    %p80 = scmp.eq.s32.totalorder %s14, 0
    %p81 = por %p79, %p80
    %p82 = scmp.ne.s32.totalorder %s74, %s76
    %p83 = scmp.eq.s32.totalorder %s19, 1
    %p84 = por %p82, %p83
    %p85 = scmp.ne.s32.totalorder %s76, %s77
    %p86 = scmp.eq.s32.totalorder %s19, 0
    %p87 = por %p85, %p86
    %p88 = scmp.ne.s32.totalorder %s76, %s77
    %p89 = scmp.eq.s32.totalorder %s20, 1
    %p90 = por %p88, %p89
    %p92 = scmp.ne.s32.totalorder %s77, %s91
    %p93 = scmp.eq.s32.totalorder %s20, 0
    %p94 = por %p92, %p93
    %s96 = sadd.s32 %s95, 1
    %p99 = scmp.eq.s32.totalorder %s14, 1
    %p100 = scmp.ne.s32.totalorder %s95, %s97
    %p101 = scmp.eq.s32.totalorder %s14, 0
    %p102 = por %p100, %p101
    %p103 = scmp.ne.s32.totalorder %s95, %s97
    %p104 = scmp.eq.s32.totalorder %s19, 1
    %p105 = por %p103, %p104
    %p106 = scmp.ne.s32.totalorder %s97, %s98
    %p107 = scmp.eq.s32.totalorder %s19, 0
    %p108 = por %p106, %p107
    %p109 = scmp.ne.s32.totalorder %s97, %s98
    %p110 = scmp.eq.s32.totalorder %s20, 1
    %p111 = por %p109, %p110
    %p113 = scmp.ne.s32.totalorder %s98, %s112
    %p114 = scmp.eq.s32.totalorder %s20, 0
    %p115 = por %p113, %p114
    %s117 = sadd.s32 %s116, 1
    %p120 = scmp.eq.s32.totalorder %s14, 1
    %p121 = scmp.ne.s32.totalorder %s116, %s118
    %p122 = scmp.eq.s32.totalorder %s14, 0
    %p123 = por %p121, %p122
    %p124 = scmp.ne.s32.totalorder %s116, %s118
    %p125 = scmp.eq.s32.totalorder %s19, 1
    %p126 = por %p124, %p125
    %p127 = scmp.ne.s32.totalorder %s118, %s119
    %p128 = scmp.eq.s32.totalorder %s19, 0
    %p129 = por %p127, %p128
    %p130 = scmp.ne.s32.totalorder %s118, %s119
    %p131 = scmp.eq.s32.totalorder %s20, 1
    %p132 = por %p130, %p131
    %p134 = scmp.ne.s32.totalorder %s119, %s133
    %p135 = scmp.eq.s32.totalorder %s20, 0
    %p136 = por %p134, %p135
    %s138 = sadd.s32 %s137, 1
    %p141 = scmp.eq.s32.totalorder %s14, 1
    %p142 = scmp.ne.s32.totalorder %s137, %s139
    %p143 = scmp.eq.s32.totalorder %s14, 0
    %p144 = por %p142, %p143
    %p145 = scmp.ne.s32.totalorder %s137, %s139
    %p146 = scmp.eq.s32.totalorder %s19, 1
    %p147 = por %p145, %p146
    %p148 = scmp.ne.s32.totalorder %s139, %s140
    %p149 = scmp.eq.s32.totalorder %s19, 0
    %p150 = por %p148, %p149
    %p151 = scmp.ne.s32.totalorder %s139, %s140
    %p152 = scmp.eq.s32.totalorder %s20, 1
    %p153 = por %p151, %p152
    %p155 = scmp.ne.s32.totalorder %s140, %s154
    %p156 = scmp.eq.s32.totalorder %s20, 0
    %p157 = por %p155, %p156
    %s158 = ssub.s32 %s14, %s21
    %p159 = scmp.eq.s32.totalorder %s158, 0
    %s161 = sadd.s32 %s160, 1
    %s162 = scalar_select %p159, %s160, %s161
    %p165 = pneg %p159
    %p166 = scmp.eq.s32.totalorder %s14, 1
    %p167 = por %p165, %p166
    %p168 = scmp.ne.s32.totalorder %s160, %s163
    %p169 = scmp.eq.s32.totalorder %s14, 0
    %p170 = por %p168, %p169
    %p171 = scmp.ne.s32.totalorder %s160, %s163
    %p172 = scmp.eq.s32.totalorder %s19, 1
    %p173 = por %p171, %p172
    %p174 = scmp.ne.s32.totalorder %s163, %s164
    %p175 = scmp.eq.s32.totalorder %s19, 0
    %p176 = por %p174, %p175
    %p177 = scmp.ne.s32.totalorder %s163, %s164
    %p178 = scmp.eq.s32.totalorder %s20, 1
    %p179 = por %p177, %p178
    %p181 = scmp.ne.s32.totalorder %s164, %s180
    %p182 = scmp.eq.s32.totalorder %s20, 0
    %p183 = por %p181, %p182
    %s184 = ssub.s32 %s14, %s21
    %p185 = scmp.eq.s32.totalorder %s184, 0
    %s187 = sadd.s32 %s186, 1
    %s188 = scalar_select %p185, %s186, %s187
    %p191 = pneg %p185
    %p192 = scmp.eq.s32.totalorder %s14, 1
    %p193 = por %p191, %p192
    %p194 = scmp.ne.s32.totalorder %s186, %s189
    %p195 = scmp.eq.s32.totalorder %s14, 0
    %p196 = por %p194, %p195
    %p197 = scmp.ne.s32.totalorder %s186, %s189
    %p198 = scmp.eq.s32.totalorder %s19, 1
    %p199 = por %p197, %p198
    %p200 = scmp.ne.s32.totalorder %s189, %s190
    %p201 = scmp.eq.s32.totalorder %s19, 0
    %p202 = por %p200, %p201
    %p203 = scmp.ne.s32.totalorder %s189, %s190
    %p204 = scmp.eq.s32.totalorder %s20, 1
    %p205 = por %p203, %p204
    %p207 = scmp.ne.s32.totalorder %s190, %s206
    %p208 = scmp.eq.s32.totalorder %s20, 0
    %p209 = por %p207, %p208
    %p210 = scmp.le.s32.totalorder 1, %s14
    %p211 = scmp.lt.s32.totalorder %s14, 3
    %p212 = pnand %p210, %p211
    %p213 = pneg %p212
    // Predicated region
    $region9: #{transformer_decoder.16} parent=5 // pred_check
      _
    $region10: #{transformer_decoder.16} parent=5 // pred_check_branch
      %215 = sbr.rel (%p212) target = $region12
    $region11: #{transformer_decoder.16} parent=5 // pred_region
      %s216 = ssub.s32 %s14, 1
      // Predicated region
      $region13: #{transformer_decoder.16} parent=11 // pred_check
        %p217 = pneg %p87
      $region14: #{transformer_decoder.16} parent=11 // pred_check_branch
        %219 = sbr.rel (%p217) target = $region16
      $region15: #{transformer_decoder.16} parent=11 // pred_region
        _
      $region16: #{transformer_decoder.16} parent=11 // pred_fallthru
        _
      // Predicated region
      $region17: #{transformer_decoder.16} parent=11 // pred_check
        %p220 = pneg %p108
      $region18: #{transformer_decoder.16} parent=11 // pred_check_branch
        %222 = sbr.rel (%p220) target = $region20
      $region19: #{transformer_decoder.16} parent=11 // pred_region
        _
      $region20: #{transformer_decoder.16} parent=11 // pred_fallthru
        _
      // Predicated region
      $region21: #{transformer_decoder.16} parent=11 // pred_check
        %p223 = pneg %p129
      $region22: #{transformer_decoder.16} parent=11 // pred_check_branch
        %225 = sbr.rel (%p223) target = $region24
      $region23: #{transformer_decoder.16} parent=11 // pred_region
        _
      $region24: #{transformer_decoder.16} parent=11 // pred_fallthru
        _
      // Predicated region
      $region25: #{transformer_decoder.16} parent=11 // pred_check
        %p226 = pneg %p150
      $region26: #{transformer_decoder.16} parent=11 // pred_check_branch
        %228 = sbr.rel (%p226) target = $region28
      $region27: #{transformer_decoder.16} parent=11 // pred_region
        _
      $region28: #{transformer_decoder.16} parent=11 // pred_fallthru
        _
    $region12: #{transformer_decoder.16} parent=5 // pred_fallthru
      _
    %p229 = scmp.lt.s32.totalorder %s14, 2
    // Predicated region
    $region29: #{transformer_decoder.16} parent=5 // pred_check
      %p230 = pneg %p229
    $region30: #{transformer_decoder.16} parent=5 // pred_check_branch
      %232 = sbr.rel (%p230) target = $region32
    $region31: #{transformer_decoder.16} parent=5 // pred_region
      // Predicated region
      $region33: #{transformer_decoder.16} parent=31 // pred_check
        %p233 = pneg %p34
      $region34: #{transformer_decoder.16} parent=31 // pred_check_branch
        %235 = sbr.rel (%p233) target = $region36
      $region35: #{transformer_decoder.16} parent=31 // pred_region
        %p236 = scmp.lt.s32.totalorder %s14, 1
        %s237 = scalar_select %p236, %s14, 1
        %s238 = smul.addr %s237, 8
        %s239 = scalar_lea.vmem %s0, %s238
      $region36: #{transformer_decoder.16} parent=31 // pred_fallthru
        _
      // Predicated region
      $region37: #{transformer_decoder.16} parent=31 // pred_check
        %p240 = pneg %p60
      $region38: #{transformer_decoder.16} parent=31 // pred_check_branch
        %242 = sbr.rel (%p240) target = $region40
      $region39: #{transformer_decoder.16} parent=31 // pred_region
        %p243 = scmp.lt.s32.totalorder %s14, 1
        %s244 = scalar_select %p243, %s14, 1
        %s245 = smul.addr %s244, 8
        %s246 = scalar_lea.vmem %s1, %s245
      $region40: #{transformer_decoder.16} parent=31 // pred_fallthru
        _
    $region32: #{transformer_decoder.16} parent=5 // pred_fallthru
      _
    %p247 = scmp.le.s32.totalorder 1, %s14
    %p248 = scmp.lt.s32.totalorder %s14, 3
    %p249 = pnand %p247, %p248
    %p250 = pneg %p249
    // Predicated region
    $region41: #{transformer_decoder.16} parent=5 // pred_check
      _
    $region42: #{transformer_decoder.16} parent=5 // pred_check_branch
      %252 = sbr.rel (%p249) target = $region44
    $region43: #{transformer_decoder.16} parent=5 // pred_region
      %s253 = ssub.s32 %s14, 1
      %p254 = scmp.lt.s32.totalorder %s19, 1
      %s255 = scalar_select %p254, %s19, 1
      %s256 = smul.addr %s255, 8
      %s257 = scalar_lea.vmem %s0, %s256
      %p258 = pneg %p40
      %p259 = pneg %p37
      %p260 = scmp.lt.s32.totalorder %s19, 1
      %s261 = scalar_select %p260, %s19, 1
      %s262 = smul.addr %s261, 8
      %s263 = scalar_lea.vmem %s1, %s262
      %p264 = pneg %p66
      %p265 = pneg %p63
      %p266 = pneg %p87
      %p267 = pneg %p84
      %p268 = pneg %p108
      %p269 = pneg %p105
      %p270 = pneg %p129
      %p271 = pneg %p126
      %p272 = pneg %p150
      %p273 = pneg %p147
      %p274 = pneg %p176
      %p275 = pneg %p173
      %p276 = scmp.lt.s32.totalorder %s19, 1
      %s277 = scalar_select %p276, %s19, 1
      %s278 = smul.addr %s277, 8
      %s279 = scalar_lea.vmem %s6, %s278
      %p280 = pneg %p202
      %p281 = pneg %p199
      %p282 = scmp.lt.s32.totalorder %s19, 1
      %s283 = scalar_select %p282, %s19, 1
      %s284 = smul.addr %s283, 4
      %s285 = scalar_lea.vmem %s7, %s284
      %p286 = scmp.lt.s32.totalorder %s19, 1
      %s287 = scalar_select %p286, %s19, 1
      %s288 = smul.addr %s287, 8
      %s289 = scalar_lea.vmem %s0, %s288
      %p290 = scmp.lt.s32.totalorder %s19, 1
      %s291 = scalar_select %p290, %s19, 1
      %s292 = smul.addr %s291, 8
      %s293 = scalar_lea.vmem %s1, %s292
      %p294 = scmp.lt.s32.totalorder %s19, 1
      %s295 = scalar_select %p294, %s19, 1
      %s296 = smul.addr %s295, 8
      %s297 = scalar_lea.vmem %s6, %s296
      %p298 = scmp.lt.s32.totalorder %s19, 1
      %s299 = scalar_select %p298, %s19, 1
      %s300 = smul.addr %s299, 4
      %s301 = scalar_lea.vmem %s7, %s300
      %v303 = vld [vmem:[%s289] sm:$0xff]
      %v304 = vld [vmem:[%s293] sm:$0xff]
      %v305 = vadd.f32 %v303, %v304
      %v306 = vld [vmem:[%s2] sm:$0x1]
      %v307 = vld [vmem:[%s3] sm:$0x1]
      %vm308 = vcmask 261120
      %v309 = vsel %vm308, %v305, 0.0
      %310 = vadd.xlane.f32.xlu0 %v309
      %v311 = vpop.xlane.xlu0 %310
      %v312 = vrcp.pop 32.0
      %v313 = vmul.f32 %v311, %v312
      %v314 = vsub.f32 %v305, %v313
      %v315 = vmul.f32 %v314, %v314
      %v316 = vsel %vm308, %v315, 0.0
      %317 = vadd.xlane.f32.xlu0 %v316
      %v318 = vpop.xlane.xlu0 %317
      %v319 = vmul.f32 %v318, %v312
      %v320 = vadd.f32 %v319, 1e-05
      %v321 = vrsqrt.pop %v320
      %v322 = vmul.f32 %v314, %v321
      %v324 = vlaneseq
      %v325 = vshrl.u32 %v324, 7
      %v326 = vsub.s32 0, %v325
      %v327 = vrot.slane %v306, %v326
      %v329 = vmul.f32 %v322, %v327
      %v331 = vlaneseq
      %v332 = vshrl.u32 %v331, 7
      %v333 = vsub.s32 0, %v332
      %v334 = vrot.slane %v307, %v333
      %v336 = vadd.f32 %v329, %v334
      %337 = vst.msk [vmem:[%s297] sm:$0xff] %vm308, %v336
      %v338 = vld [vmem:[%s4] sm:$0xf]
      %v339 = vld [vmem:[%s4 + $0x4] sm:$0xf]
      %v340 = vld [vmem:[%s4 + $0x8] sm:$0xf]
      %v341 = vld [vmem:[%s4 + $0xc] sm:$0xf]
      %v342 = vpack.c.bf16 %v336, %v336
      %v343 = vld [vmem:[%s5] sm:$0x1]
      %v345 = vlaneseq
      %v346 = vshrl.u32 %v345, 7
      %v347 = vsub.s32 0, %v346
      %v348 = vrot.slane %v343, %v347
      %v354 = vunpack.c.l.b16 %v338
      %v355 = vunpack.c.l.b16 %v339
      %v356 = vunpack.c.l.b16 %v340
      %v357 = vunpack.c.l.b16 %v341
      %v358 = vpack.c.b16 %v355, %v354
      %v359 = vpack.c.b16 %v357, %v356
      %v363 = vsel %vm308, %v342, 0
      %365 = vmatprep.subr.bf16.mxu0 0
      %366 = vmatpush1.bf16.msra.mxu0 %v358
      %367 = vmatprep.subr.bf16.mxu0 0
      %368 = vmatpush1.bf16.msra.mxu0 %v359
      %369 = vmatprep.subr.bf16.mxu0 0
      %370 = vmatpush1.bf16.msra.mxu0 0
      %371 = vmatprep.subr.bf16.mxu0 0
      %372 = vmatpush1.bf16.msra.mxu0 0
      %373 = vmatprep.subr.bf16.mxu0 0
      %374 = vmatpush1.bf16.msra.mxu0 0
      %375 = vmatprep.subr.bf16.mxu0 0
      %376 = vmatpush1.bf16.msra.mxu0 0
      %377 = vmatprep.subr.bf16.mxu0 0
      %378 = vmatpush1.bf16.msra.mxu0 0
      %379 = vmatprep.subr.bf16.mxu0 0
      %380 = vmatpush1.bf16.msra.mxu0 0
      %381 = vmatprep.subr.bf16.mxu0 0
      %382 = vmatpush1.bf16.msra.mxu0 0
      %383 = vmatprep.subr.bf16.mxu0 0
      %384 = vmatpush1.bf16.msra.mxu0 0
      %385 = vmatprep.subr.bf16.mxu0 0
      %386 = vmatpush1.bf16.msra.mxu0 0
      %387 = vmatprep.subr.bf16.mxu0 0
      %388 = vmatpush1.bf16.msra.mxu0 0
      %389 = vmatprep.subr.bf16.mxu0 0
      %390 = vmatpush1.bf16.msra.mxu0 0
      %391 = vmatprep.subr.bf16.mxu0 0
      %392 = vmatpush1.bf16.msra.mxu0 0
      %393 = vmatprep.subr.bf16.mxu0 0
      %394 = vmatpush1.bf16.msra.mxu0 0
      %395 = vmatprep.subr.bf16.mxu0 0
      %396 = vmatpush1.bf16.msra.mxu0 0
      %397 = vmatprep.mubr.bf16.mxu0 0
      %398 = vmatmul.mubr.bf16.gmra.mrb[0].mxu0 %v363
      %v399 = vpop.f32.mrb[0].mxu0
      %v400 = vadd.f32 %v348, %v399
      %v401 = vpop.f32.mrb[0].mxu0
      %v402 = vpop.f32.mrb[0].mxu0
      %v403 = vpop.f32.mrb[0].mxu0
      %404 = vdwg.mxu0
      %v405 = vpack.c.bf16 %v400, %v400
      %vm406 = vcmask 781312
      %407 = vst.msk [vmem:[%s301] sm:$0xf] %vm406, %v405
      %p408 = scmp.lt.s32.totalorder %s19, 1
      %s409 = scalar_select %p408, %s19, 1
      %s410 = smul.addr %s409, 8
      %s411 = scalar_lea.vmem %s6, %s410
      %p412 = scmp.lt.s32.totalorder %s19, 1
      %s413 = scalar_select %p412, %s19, 1
      %s414 = smul.addr %s413, 4
      %s415 = scalar_lea.vmem %s7, %s414
      // Predicated region
      $region45: #{transformer_decoder.16} parent=43 // pred_check
        %p416 = pneg %p173
      $region46: #{transformer_decoder.16} parent=43 // pred_check_branch
        %418 = sbr.rel (%p416) target = $region48
      $region47: #{transformer_decoder.16} parent=43 // pred_region
        _
      $region48: #{transformer_decoder.16} parent=43 // pred_fallthru
        _
      // Predicated region
      $region49: #{transformer_decoder.16} parent=43 // pred_check
        %p419 = pneg %p199
      $region50: #{transformer_decoder.16} parent=43 // pred_check_branch
        %421 = sbr.rel (%p419) target = $region52
      $region51: #{transformer_decoder.16} parent=43 // pred_region
        _
      $region52: #{transformer_decoder.16} parent=43 // pred_fallthru
        _
    $region44: #{transformer_decoder.16} parent=5 // pred_fallthru
      _
    %p422 = scmp.le.s32.totalorder 2, %s14
    // Predicated region
    $region53: #{transformer_decoder.16} parent=5 // pred_check
      %p423 = pneg %p422
    $region54: #{transformer_decoder.16} parent=5 // pred_check_branch
      %425 = sbr.rel (%p423) target = $region56
    $region55: #{transformer_decoder.16} parent=5 // pred_region
      %s426 = ssub.s32 %s14, 2
      // Predicated region
      $region57: #{transformer_decoder.16} parent=55 // pred_check
        %p427 = pneg %p179
      $region58: #{transformer_decoder.16} parent=55 // pred_check_branch
        %429 = sbr.rel (%p427) target = $region60
      $region59: #{transformer_decoder.16} parent=55 // pred_region
        %p430 = scmp.lt.s32.totalorder %s20, 1
        %s431 = scalar_select %p430, %s20, 1
        %s432 = smul.addr %s431, 8
        %s433 = scalar_lea.vmem %s6, %s432
      $region60: #{transformer_decoder.16} parent=55 // pred_fallthru
        _
      // Predicated region
      $region61: #{transformer_decoder.16} parent=55 // pred_check
        %p434 = pneg %p205
      $region62: #{transformer_decoder.16} parent=55 // pred_check_branch
        %436 = sbr.rel (%p434) target = $region64
      $region63: #{transformer_decoder.16} parent=55 // pred_region
        %p437 = scmp.lt.s32.totalorder %s20, 1
        %s438 = scalar_select %p437, %s20, 1
        %s439 = smul.addr %s438, 4
        %s440 = scalar_lea.vmem %s7, %s439
      $region64: #{transformer_decoder.16} parent=55 // pred_fallthru
        _
    $region56: #{transformer_decoder.16} parent=5 // pred_fallthru
      _
  $region6: #{transformer_decoder.16} parent=0 // loop_footer
    %s18 = sadd.s32 1, %s14
  $region7: #{transformer_decoder.16} parent=0 // loop_footer_branch
    %13 = sbr.rel target = $region3
  $region8: #{transformer_decoder.16} parent=0 // loop_exit
    _

// kernel: transformer_decoder.18
$region0: #{transformer_decoder.18}
  #allocation0 [shape = 'u32[]', space=smem, size = 0x4, offset = 0x4, fixed_abs, tag = 'smem constant byte address 0x4 - core index']
  #allocation1 [shape = 'u32[144,128]{1,0:T(1,128)}', space=vmem, size = 0x12000, scoped, tag = 'internal scratch']
  %s0 = inlined_call_operand.vmem [shape: bf16[16,32], index: 0, kind: input, shape index: {}]
  %s1 = inlined_call_operand.vmem [shape: bf16[32,32], index: 1, kind: input, shape index: {}]
  %s2 = inlined_call_operand.vmem [shape: f32[1,32], index: 2, kind: input, shape index: {}]
  %s3 = inlined_call_operand.vmem [shape: f32[16,32], index: 3, kind: input, shape index: {}]
  %s4 = inlined_call_operand.vmem [shape: f32[1,32], index: 4, kind: input, shape index: {}]
  %s5 = inlined_call_operand.vmem [shape: f32[1,32], index: 5, kind: input, shape index: {}]
  %s6 = inlined_call_operand.vmem [shape: bf16[32,32], index: 6, kind: input, shape index: {}]
  %s7 = inlined_call_operand.vmem [shape: f32[1,32], index: 7, kind: input, shape index: {}]
  %s8 = inlined_call_operand.vmem [shape: f32[16,32], index: 8, kind: output, shape index: {0}]
  %s9 = inlined_call_operand.vmem [shape: bf16[16,32], index: 9, kind: output, shape index: {1}]
  %10 = xla_tuple %s8, %s9
  %s11 = sld [smem:[#allocation0]]
  $region73: #{transformer_decoder.18} parent=0
    _
  %s13 = ssub.s32 1, %s11
  %s14 = scalar_select 0, %s13, %s11
  loop: start=0, step=1, limit=4
  $region2: #{transformer_decoder.18} parent=0 // loop_pre_header
    _
  $region3: #{transformer_decoder.18} parent=0 // loop_header
    %s16 = sphi 0, %s20
    %p17 = scmp.ge.s32.totalorder %s16, 4
    %s26 = sphi 0, %s28
    %s29 = sphi 0, %s26
    %s30 = sphi 0, %s29
    %s46 = sphi 0, %s30
    %s50 = sphi 0, %s50
    %s52 = sphi 0, %s50
    %s53 = sphi 0, %s52
    %s67 = sphi 0, %s53
    %s71 = sphi 0, %s71
    %s73 = sphi 0, %s71
    %s74 = sphi 0, %s73
    %s88 = sphi 0, %s74
    %s94 = sphi 0, %s96
    %s97 = sphi 0, %s94
    %s98 = sphi 0, %s97
    %s114 = sphi 0, %s98
    %s118 = sphi 0, %s118
    %s120 = sphi 0, %s118
    %s121 = sphi 0, %s120
    %s135 = sphi 0, %s121
    %s139 = sphi 0, %s139
    %s141 = sphi 0, %s139
    %s142 = sphi 0, %s141
    %s156 = sphi 0, %s142
    %s160 = sphi 0, %s160
    %s162 = sphi 0, %s160
    %s163 = sphi 0, %s162
    %s177 = sphi 0, %s163
    %s181 = sphi 0, %s181
    %s183 = sphi 0, %s181
    %s184 = sphi 0, %s183
    %s198 = sphi 0, %s184
    %s204 = sphi 0, %s206
    %s207 = sphi 0, %s204
    %s208 = sphi 0, %s207
    %s224 = sphi 0, %s208
    %s230 = sphi 0, %s232
    %s233 = sphi 0, %s230
    %s234 = sphi 0, %s233
    %s250 = sphi 0, %s234
  $region4: #{transformer_decoder.18} parent=0 // loop_header_branch
    %19 = sbr.rel (%p17) target = $region8
  $region5: #{transformer_decoder.18} parent=0 // loop_body
    %s21 = ssub.s32 %s16, 1
    %s22 = ssub.s32 %s16, 2
    %s23 = sadd.s32 %s16, 1
    %s24 = ssub.s32 %s16, %s23
    %p25 = scmp.eq.s32.totalorder %s24, 0
    %s27 = sadd.s32 %s26, 1
    %s28 = scalar_select %p25, %s26, %s27
    %p31 = pneg %p25
    %p32 = scmp.eq.s32.totalorder %s16, 1
    %p33 = por %p31, %p32
    %p34 = scmp.ne.s32.totalorder %s26, %s29
    %p35 = scmp.eq.s32.totalorder %s16, 0
    %p36 = por %p34, %p35
    %p37 = scmp.ne.s32.totalorder %s26, %s29
    %p38 = scmp.eq.s32.totalorder %s21, 1
    %p39 = por %p37, %p38
    %p40 = scmp.ne.s32.totalorder %s29, %s30
    %p41 = scmp.eq.s32.totalorder %s21, 0
    %p42 = por %p40, %p41
    %p43 = scmp.ne.s32.totalorder %s29, %s30
    %p44 = scmp.eq.s32.totalorder %s22, 1
    %p45 = por %p43, %p44
    %p47 = scmp.ne.s32.totalorder %s30, %s46
    %p48 = scmp.eq.s32.totalorder %s22, 0
    %p49 = por %p47, %p48
    %s51 = sadd.s32 %s50, 1
    %p54 = scmp.eq.s32.totalorder %s16, 1
    %p55 = scmp.ne.s32.totalorder %s50, %s52
    %p56 = scmp.eq.s32.totalorder %s16, 0
    %p57 = por %p55, %p56
    %p58 = scmp.ne.s32.totalorder %s50, %s52
    %p59 = scmp.eq.s32.totalorder %s21, 1
    %p60 = por %p58, %p59
    %p61 = scmp.ne.s32.totalorder %s52, %s53
    %p62 = scmp.eq.s32.totalorder %s21, 0
    %p63 = por %p61, %p62
    %p64 = scmp.ne.s32.totalorder %s52, %s53
    %p65 = scmp.eq.s32.totalorder %s22, 1
    %p66 = por %p64, %p65
    %p68 = scmp.ne.s32.totalorder %s53, %s67
    %p69 = scmp.eq.s32.totalorder %s22, 0
    %p70 = por %p68, %p69
    %s72 = sadd.s32 %s71, 1
    %p75 = scmp.eq.s32.totalorder %s16, 1
    %p76 = scmp.ne.s32.totalorder %s71, %s73
    %p77 = scmp.eq.s32.totalorder %s16, 0
    %p78 = por %p76, %p77
    %p79 = scmp.ne.s32.totalorder %s71, %s73
    %p80 = scmp.eq.s32.totalorder %s21, 1
    %p81 = por %p79, %p80
    %p82 = scmp.ne.s32.totalorder %s73, %s74
    %p83 = scmp.eq.s32.totalorder %s21, 0
    %p84 = por %p82, %p83
    %p85 = scmp.ne.s32.totalorder %s73, %s74
    %p86 = scmp.eq.s32.totalorder %s22, 1
    %p87 = por %p85, %p86
    %p89 = scmp.ne.s32.totalorder %s74, %s88
    %p90 = scmp.eq.s32.totalorder %s22, 0
    %p91 = por %p89, %p90
    %s92 = ssub.s32 %s16, %s23
    %p93 = scmp.eq.s32.totalorder %s92, 0
    %s95 = sadd.s32 %s94, 1
    %s96 = scalar_select %p93, %s94, %s95
    %p99 = pneg %p93
    %p100 = scmp.eq.s32.totalorder %s16, 1
    %p101 = por %p99, %p100
    %p102 = scmp.ne.s32.totalorder %s94, %s97
    %p103 = scmp.eq.s32.totalorder %s16, 0
    %p104 = por %p102, %p103
    %p105 = scmp.ne.s32.totalorder %s94, %s97
    %p106 = scmp.eq.s32.totalorder %s21, 1
    %p107 = por %p105, %p106
    %p108 = scmp.ne.s32.totalorder %s97, %s98
    %p109 = scmp.eq.s32.totalorder %s21, 0
    %p110 = por %p108, %p109
    %p111 = scmp.ne.s32.totalorder %s97, %s98
    %p112 = scmp.eq.s32.totalorder %s22, 1
    %p113 = por %p111, %p112
    %p115 = scmp.ne.s32.totalorder %s98, %s114
    %p116 = scmp.eq.s32.totalorder %s22, 0
    %p117 = por %p115, %p116
    %s119 = sadd.s32 %s118, 1
    %p122 = scmp.eq.s32.totalorder %s16, 1
    %p123 = scmp.ne.s32.totalorder %s118, %s120
    %p124 = scmp.eq.s32.totalorder %s16, 0
    %p125 = por %p123, %p124
    %p126 = scmp.ne.s32.totalorder %s118, %s120
    %p127 = scmp.eq.s32.totalorder %s21, 1
    %p128 = por %p126, %p127
    %p129 = scmp.ne.s32.totalorder %s120, %s121
    %p130 = scmp.eq.s32.totalorder %s21, 0
    %p131 = por %p129, %p130
    %p132 = scmp.ne.s32.totalorder %s120, %s121
    %p133 = scmp.eq.s32.totalorder %s22, 1
    %p134 = por %p132, %p133
    %p136 = scmp.ne.s32.totalorder %s121, %s135
    %p137 = scmp.eq.s32.totalorder %s22, 0
    %p138 = por %p136, %p137
    %s140 = sadd.s32 %s139, 1
    %p143 = scmp.eq.s32.totalorder %s16, 1
    %p144 = scmp.ne.s32.totalorder %s139, %s141
    %p145 = scmp.eq.s32.totalorder %s16, 0
    %p146 = por %p144, %p145
    %p147 = scmp.ne.s32.totalorder %s139, %s141
    %p148 = scmp.eq.s32.totalorder %s21, 1
    %p149 = por %p147, %p148
    %p150 = scmp.ne.s32.totalorder %s141, %s142
    %p151 = scmp.eq.s32.totalorder %s21, 0
    %p152 = por %p150, %p151
    %p153 = scmp.ne.s32.totalorder %s141, %s142
    %p154 = scmp.eq.s32.totalorder %s22, 1
    %p155 = por %p153, %p154
    %p157 = scmp.ne.s32.totalorder %s142, %s156
    %p158 = scmp.eq.s32.totalorder %s22, 0
    %p159 = por %p157, %p158
    %s161 = sadd.s32 %s160, 1
    %p164 = scmp.eq.s32.totalorder %s16, 1
    %p165 = scmp.ne.s32.totalorder %s160, %s162
    %p166 = scmp.eq.s32.totalorder %s16, 0
    %p167 = por %p165, %p166
    %p168 = scmp.ne.s32.totalorder %s160, %s162
    %p169 = scmp.eq.s32.totalorder %s21, 1
    %p170 = por %p168, %p169
    %p171 = scmp.ne.s32.totalorder %s162, %s163
    %p172 = scmp.eq.s32.totalorder %s21, 0
    %p173 = por %p171, %p172
    %p174 = scmp.ne.s32.totalorder %s162, %s163
    %p175 = scmp.eq.s32.totalorder %s22, 1
    %p176 = por %p174, %p175
    %p178 = scmp.ne.s32.totalorder %s163, %s177
    %p179 = scmp.eq.s32.totalorder %s22, 0
    %p180 = por %p178, %p179
    %s182 = sadd.s32 %s181, 1
    %p185 = scmp.eq.s32.totalorder %s16, 1
    %p186 = scmp.ne.s32.totalorder %s181, %s183
    %p187 = scmp.eq.s32.totalorder %s16, 0
    %p188 = por %p186, %p187
    %p189 = scmp.ne.s32.totalorder %s181, %s183
    %p190 = scmp.eq.s32.totalorder %s21, 1
    %p191 = por %p189, %p190
    %p192 = scmp.ne.s32.totalorder %s183, %s184
    %p193 = scmp.eq.s32.totalorder %s21, 0
    %p194 = por %p192, %p193
    %p195 = scmp.ne.s32.totalorder %s183, %s184
    %p196 = scmp.eq.s32.totalorder %s22, 1
    %p197 = por %p195, %p196
    %p199 = scmp.ne.s32.totalorder %s184, %s198
    %p200 = scmp.eq.s32.totalorder %s22, 0
    %p201 = por %p199, %p200
    %s202 = ssub.s32 %s16, %s23
    %p203 = scmp.eq.s32.totalorder %s202, 0
    %s205 = sadd.s32 %s204, 1
    %s206 = scalar_select %p203, %s204, %s205
    %p209 = pneg %p203
    %p210 = scmp.eq.s32.totalorder %s16, 1
    %p211 = por %p209, %p210
    %p212 = scmp.ne.s32.totalorder %s204, %s207
    %p213 = scmp.eq.s32.totalorder %s16, 0
    %p214 = por %p212, %p213
    %p215 = scmp.ne.s32.totalorder %s204, %s207
    %p216 = scmp.eq.s32.totalorder %s21, 1
    %p217 = por %p215, %p216
    %p218 = scmp.ne.s32.totalorder %s207, %s208
    %p219 = scmp.eq.s32.totalorder %s21, 0
    %p220 = por %p218, %p219
    %p221 = scmp.ne.s32.totalorder %s207, %s208
    %p222 = scmp.eq.s32.totalorder %s22, 1
    %p223 = por %p221, %p222
    %p225 = scmp.ne.s32.totalorder %s208, %s224
    %p226 = scmp.eq.s32.totalorder %s22, 0
    %p227 = por %p225, %p226
    %s228 = ssub.s32 %s16, %s23
    %p229 = scmp.eq.s32.totalorder %s228, 0
    %s231 = sadd.s32 %s230, 1
    %s232 = scalar_select %p229, %s230, %s231
    %p235 = pneg %p229
    %p236 = scmp.eq.s32.totalorder %s16, 1
    %p237 = por %p235, %p236
    %p238 = scmp.ne.s32.totalorder %s230, %s233
    %p239 = scmp.eq.s32.totalorder %s16, 0
    %p240 = por %p238, %p239
    %p241 = scmp.ne.s32.totalorder %s230, %s233
    %p242 = scmp.eq.s32.totalorder %s21, 1
    %p243 = por %p241, %p242
    %p244 = scmp.ne.s32.totalorder %s233, %s234
    %p245 = scmp.eq.s32.totalorder %s21, 0
    %p246 = por %p244, %p245
    %p247 = scmp.ne.s32.totalorder %s233, %s234
    %p248 = scmp.eq.s32.totalorder %s22, 1
    %p249 = por %p247, %p248
    %p251 = scmp.ne.s32.totalorder %s234, %s250
    %p252 = scmp.eq.s32.totalorder %s22, 0
    %p253 = por %p251, %p252
    %p254 = scmp.le.s32.totalorder 1, %s16
    %p255 = scmp.lt.s32.totalorder %s16, 3
    %p256 = pnand %p254, %p255
    %p257 = pneg %p256
    // Predicated region
    $region9: #{transformer_decoder.18} parent=5 // pred_check
      _
    $region10: #{transformer_decoder.18} parent=5 // pred_check_branch
      %259 = sbr.rel (%p256) target = $region12
    $region11: #{transformer_decoder.18} parent=5 // pred_region
      %s260 = ssub.s32 %s16, 1
      // Predicated region
      $region13: #{transformer_decoder.18} parent=11 // pred_check
        %p261 = pneg %p63
      $region14: #{transformer_decoder.18} parent=11 // pred_check_branch
        %263 = sbr.rel (%p261) target = $region16
      $region15: #{transformer_decoder.18} parent=11 // pred_region
        _
      $region16: #{transformer_decoder.18} parent=11 // pred_fallthru
        _
      // Predicated region
      $region17: #{transformer_decoder.18} parent=11 // pred_check
        %p264 = pneg %p84
      $region18: #{transformer_decoder.18} parent=11 // pred_check_branch
        %266 = sbr.rel (%p264) target = $region20
      $region19: #{transformer_decoder.18} parent=11 // pred_region
        _
      $region20: #{transformer_decoder.18} parent=11 // pred_fallthru
        _
      // Predicated region
      $region21: #{transformer_decoder.18} parent=11 // pred_check
        %p267 = pneg %p131
      $region22: #{transformer_decoder.18} parent=11 // pred_check_branch
        %269 = sbr.rel (%p267) target = $region24
      $region23: #{transformer_decoder.18} parent=11 // pred_region
        _
      $region24: #{transformer_decoder.18} parent=11 // pred_fallthru
        _
      // Predicated region
      $region25: #{transformer_decoder.18} parent=11 // pred_check
        %p270 = pneg %p152
      $region26: #{transformer_decoder.18} parent=11 // pred_check_branch
        %272 = sbr.rel (%p270) target = $region28
      $region27: #{transformer_decoder.18} parent=11 // pred_region
        _
      $region28: #{transformer_decoder.18} parent=11 // pred_fallthru
        _
      // Predicated region
      $region29: #{transformer_decoder.18} parent=11 // pred_check
        %p273 = pneg %p173
      $region30: #{transformer_decoder.18} parent=11 // pred_check_branch
        %275 = sbr.rel (%p273) target = $region32
      $region31: #{transformer_decoder.18} parent=11 // pred_region
        _
      $region32: #{transformer_decoder.18} parent=11 // pred_fallthru
        _
      // Predicated region
      $region33: #{transformer_decoder.18} parent=11 // pred_check
        %p276 = pneg %p194
      $region34: #{transformer_decoder.18} parent=11 // pred_check_branch
        %278 = sbr.rel (%p276) target = $region36
      $region35: #{transformer_decoder.18} parent=11 // pred_region
        _
      $region36: #{transformer_decoder.18} parent=11 // pred_fallthru
        _
    $region12: #{transformer_decoder.18} parent=5 // pred_fallthru
      _
    %p279 = scmp.lt.s32.totalorder %s16, 2
    // Predicated region
    $region37: #{transformer_decoder.18} parent=5 // pred_check
      %p280 = pneg %p279
    $region38: #{transformer_decoder.18} parent=5 // pred_check_branch
      %282 = sbr.rel (%p280) target = $region40
    $region39: #{transformer_decoder.18} parent=5 // pred_region
      // Predicated region
      $region41: #{transformer_decoder.18} parent=39 // pred_check
        %p283 = pneg %p36
      $region42: #{transformer_decoder.18} parent=39 // pred_check_branch
        %285 = sbr.rel (%p283) target = $region44
      $region43: #{transformer_decoder.18} parent=39 // pred_region
        %p286 = scmp.lt.s32.totalorder %s16, 1
        %s287 = scalar_select %p286, %s16, 1
        %s288 = smul.addr %s287, 4
        %s289 = scalar_lea.vmem %s0, %s288
      $region44: #{transformer_decoder.18} parent=39 // pred_fallthru
        _
      // Predicated region
      $region45: #{transformer_decoder.18} parent=39 // pred_check
        %p290 = pneg %p104
      $region46: #{transformer_decoder.18} parent=39 // pred_check_branch
        %292 = sbr.rel (%p290) target = $region48
      $region47: #{transformer_decoder.18} parent=39 // pred_region
        %p293 = scmp.lt.s32.totalorder %s16, 1
        %s294 = scalar_select %p293, %s16, 1
        %s295 = smul.addr %s294, 8
        %s296 = scalar_lea.vmem %s3, %s295
      $region48: #{transformer_decoder.18} parent=39 // pred_fallthru
        _
    $region40: #{transformer_decoder.18} parent=5 // pred_fallthru
      _
    %p297 = scmp.le.s32.totalorder 1, %s16
    %p298 = scmp.lt.s32.totalorder %s16, 3
    %p299 = pnand %p297, %p298
    %p300 = pneg %p299
    // Predicated region
    $region49: #{transformer_decoder.18} parent=5 // pred_check
      _
    $region50: #{transformer_decoder.18} parent=5 // pred_check_branch
      %302 = sbr.rel (%p299) target = $region52
    $region51: #{transformer_decoder.18} parent=5 // pred_region
      %s303 = ssub.s32 %s16, 1
      %p304 = scmp.lt.s32.totalorder %s21, 1
      %s305 = scalar_select %p304, %s21, 1
      %s306 = smul.addr %s305, 4
      %s307 = scalar_lea.vmem %s0, %s306
      %p308 = pneg %p42
      %p309 = pneg %p39
      %p310 = pneg %p63
      %p311 = pneg %p60
      %p312 = pneg %p84
      %p313 = pneg %p81
      %p314 = scmp.lt.s32.totalorder %s21, 1
      %s315 = scalar_select %p314, %s21, 1
      %s316 = smul.addr %s315, 8
      %s317 = scalar_lea.vmem %s3, %s316
      %p318 = pneg %p110
      %p319 = pneg %p107
      %p320 = pneg %p131
      %p321 = pneg %p128
      %p322 = pneg %p152
      %p323 = pneg %p149
      %p324 = pneg %p173
      %p325 = pneg %p170
      %p326 = pneg %p194
      %p327 = pneg %p191
      %p328 = pneg %p220
      %p329 = pneg %p217
      %p330 = scmp.lt.s32.totalorder %s21, 1
      %s331 = scalar_select %p330, %s21, 1
      %s332 = smul.addr %s331, 8
      %s333 = scalar_lea.vmem %s8, %s332
      %p334 = pneg %p246
      %p335 = pneg %p243
      %p336 = scmp.lt.s32.totalorder %s21, 1
      %s337 = scalar_select %p336, %s21, 1
      %s338 = smul.addr %s337, 4
      %s339 = scalar_lea.vmem %s9, %s338
      %p340 = scmp.lt.s32.totalorder %s21, 1
      %s341 = scalar_select %p340, %s21, 1
      %s342 = smul.addr %s341, 4
      %s343 = scalar_lea.vmem %s0, %s342
      %p344 = scmp.lt.s32.totalorder %s21, 1
      %s345 = scalar_select %p344, %s21, 1
      %s346 = smul.addr %s345, 8
      %s347 = scalar_lea.vmem %s3, %s346
      %p348 = scmp.lt.s32.totalorder %s21, 1
      %s349 = scalar_select %p348, %s21, 1
      %s350 = smul.addr %s349, 8
      %s351 = scalar_lea.vmem %s8, %s350
      %p352 = scmp.lt.s32.totalorder %s21, 1
      %s353 = scalar_select %p352, %s21, 1
      %s354 = smul.addr %s353, 4
      %s355 = scalar_lea.vmem %s9, %s354
      %v357 = vld [vmem:[%s343] sm:$0xf]
      %v358 = vld [vmem:[%s1] sm:$0xf]
      %v359 = vld [vmem:[%s1 + $0x4] sm:$0xf]
      %v360 = vld [vmem:[%s1 + $0x8] sm:$0xf]
      %v361 = vld [vmem:[%s1 + $0xc] sm:$0xf]
      %v362 = vld [vmem:[%s2] sm:$0x1]
      %v364 = vlaneseq
      %v365 = vshrl.u32 %v364, 7
      %v366 = vsub.s32 0, %v365
      %v367 = vrot.slane %v362, %v366
      %v373 = vunpack.c.l.b16 %v358
      %v374 = vunpack.c.l.b16 %v359
      %v375 = vunpack.c.l.b16 %v360
      %v376 = vunpack.c.l.b16 %v361
      %v377 = vpack.c.b16 %v374, %v373
      %v378 = vpack.c.b16 %v376, %v375
      %vm381 = vcmask 261120
      %v383 = vsel %vm381, %v357, 0
      %385 = vmatprep.subr.bf16.mxu0 0
      %386 = vmatpush1.bf16.msra.mxu0 %v377
      %387 = vmatprep.subr.bf16.mxu0 0
      %388 = vmatpush1.bf16.msra.mxu0 %v378
      %389 = vmatprep.subr.bf16.mxu0 0
      %390 = vmatpush1.bf16.msra.mxu0 0
      %391 = vmatprep.subr.bf16.mxu0 0
      %392 = vmatpush1.bf16.msra.mxu0 0
      %393 = vmatprep.subr.bf16.mxu0 0
      %394 = vmatpush1.bf16.msra.mxu0 0
      %395 = vmatprep.subr.bf16.mxu0 0
      %396 = vmatpush1.bf16.msra.mxu0 0
      %397 = vmatprep.subr.bf16.mxu0 0
      %398 = vmatpush1.bf16.msra.mxu0 0
      %399 = vmatprep.subr.bf16.mxu0 0
      %400 = vmatpush1.bf16.msra.mxu0 0
      %401 = vmatprep.subr.bf16.mxu0 0
      %402 = vmatpush1.bf16.msra.mxu0 0
      %403 = vmatprep.subr.bf16.mxu0 0
      %404 = vmatpush1.bf16.msra.mxu0 0
      %405 = vmatprep.subr.bf16.mxu0 0
      %406 = vmatpush1.bf16.msra.mxu0 0
      %407 = vmatprep.subr.bf16.mxu0 0
      %408 = vmatpush1.bf16.msra.mxu0 0
      %409 = vmatprep.subr.bf16.mxu0 0
      %410 = vmatpush1.bf16.msra.mxu0 0
      %411 = vmatprep.subr.bf16.mxu0 0
      %412 = vmatpush1.bf16.msra.mxu0 0
      %413 = vmatprep.subr.bf16.mxu0 0
      %414 = vmatpush1.bf16.msra.mxu0 0
      %415 = vmatprep.subr.bf16.mxu0 0
      %416 = vmatpush1.bf16.msra.mxu0 0
      %417 = vmatprep.mubr.bf16.mxu0 0
      %418 = vmatmul.mubr.bf16.gmra.mrb[0].mxu0 %v383
      %v419 = vpop.f32.mrb[0].mxu0
      %v420 = vadd.f32 %v367, %v419
      %v421 = vpop.f32.mrb[0].mxu0
      %v422 = vpop.f32.mrb[0].mxu0
      %v423 = vpop.f32.mrb[0].mxu0
      %424 = vdwg.mxu0
      %v425 = vld [vmem:[%s347] sm:$0xff]
      %v426 = vadd.f32 %v425, %v420
      %v427 = vld [vmem:[%s4] sm:$0x1]
      %v428 = vld [vmem:[%s5] sm:$0x1]
      %v429 = vsel %vm381, %v426, 0.0
      %430 = vadd.xlane.f32.xlu0 %v429
      %v431 = vpop.xlane.xlu0 %430
      %v432 = vrcp.pop 32.0
      %v433 = vmul.f32 %v431, %v432
      %v434 = vsub.f32 %v426, %v433
      %v435 = vmul.f32 %v434, %v434
      %v436 = vsel %vm381, %v435, 0.0
      %437 = vadd.xlane.f32.xlu0 %v436
      %v438 = vpop.xlane.xlu0 %437
      %v439 = vmul.f32 %v438, %v432
      %v440 = vadd.f32 %v439, 1e-05
      %v441 = vrsqrt.pop %v440
      %v442 = vmul.f32 %v434, %v441
      %v444 = vlaneseq
      %v445 = vshrl.u32 %v444, 7
      %v446 = vsub.s32 0, %v445
      %v447 = vrot.slane %v427, %v446
      %v449 = vmul.f32 %v442, %v447
      %v451 = vlaneseq
      %v452 = vshrl.u32 %v451, 7
      %v453 = vsub.s32 0, %v452
      %v454 = vrot.slane %v428, %v453
      %v456 = vadd.f32 %v449, %v454
      %457 = vst.msk [vmem:[%s351] sm:$0xff] %vm381, %v456
      %v458 = vld [vmem:[%s6] sm:$0xf]
      %v459 = vld [vmem:[%s6 + $0x4] sm:$0xf]
      %v460 = vld [vmem:[%s6 + $0x8] sm:$0xf]
      %v461 = vld [vmem:[%s6 + $0xc] sm:$0xf]
      %v462 = vpack.c.bf16 %v456, %v456
      %v463 = vld [vmem:[%s7] sm:$0x1]
      %v465 = vlaneseq
      %v466 = vshrl.u32 %v465, 7
      %v467 = vsub.s32 0, %v466
      %v468 = vrot.slane %v463, %v467
      %v474 = vunpack.c.l.b16 %v458
      %v475 = vunpack.c.l.b16 %v459
      %v476 = vunpack.c.l.b16 %v460
      %v477 = vunpack.c.l.b16 %v461
      %v478 = vpack.c.b16 %v475, %v474
      %v479 = vpack.c.b16 %v477, %v476
      %v483 = vsel %vm381, %v462, 0
      %485 = vmatprep.subr.bf16.mxu0 0
      %486 = vmatpush1.bf16.msra.mxu0 %v478
      %487 = vmatprep.subr.bf16.mxu0 0
      %488 = vmatpush1.bf16.msra.mxu0 %v479
      %489 = vmatprep.subr.bf16.mxu0 0
      %490 = vmatpush1.bf16.msra.mxu0 0
      %491 = vmatprep.subr.bf16.mxu0 0
      %492 = vmatpush1.bf16.msra.mxu0 0
      %493 = vmatprep.subr.bf16.mxu0 0
      %494 = vmatpush1.bf16.msra.mxu0 0
      %495 = vmatprep.subr.bf16.mxu0 0
      %496 = vmatpush1.bf16.msra.mxu0 0
      %497 = vmatprep.subr.bf16.mxu0 0
      %498 = vmatpush1.bf16.msra.mxu0 0
      %499 = vmatprep.subr.bf16.mxu0 0
      %500 = vmatpush1.bf16.msra.mxu0 0
      %501 = vmatprep.subr.bf16.mxu0 0
      %502 = vmatpush1.bf16.msra.mxu0 0
      %503 = vmatprep.subr.bf16.mxu0 0
      %504 = vmatpush1.bf16.msra.mxu0 0
      %505 = vmatprep.subr.bf16.mxu0 0
      %506 = vmatpush1.bf16.msra.mxu0 0
      %507 = vmatprep.subr.bf16.mxu0 0
      %508 = vmatpush1.bf16.msra.mxu0 0
      %509 = vmatprep.subr.bf16.mxu0 0
      %510 = vmatpush1.bf16.msra.mxu0 0
      %511 = vmatprep.subr.bf16.mxu0 0
      %512 = vmatpush1.bf16.msra.mxu0 0
      %513 = vmatprep.subr.bf16.mxu0 0
      %514 = vmatpush1.bf16.msra.mxu0 0
      %515 = vmatprep.subr.bf16.mxu0 0
      %516 = vmatpush1.bf16.msra.mxu0 0
      %517 = vmatprep.mubr.bf16.mxu0 0
      %518 = vmatmul.mubr.bf16.gmra.mrb[0].mxu0 %v483
      %v519 = vpop.f32.mrb[0].mxu0
      %v520 = vadd.f32 %v468, %v519
      %v521 = vpop.f32.mrb[0].mxu0
      %v522 = vpop.f32.mrb[0].mxu0
      %v523 = vpop.f32.mrb[0].mxu0
      %524 = vdwg.mxu0
      %v525 = vpack.c.bf16 %v520, %v520
      %vm526 = vcmask 257024
      %527 = vst.msk [vmem:[%s355] sm:$0xf] %vm526, %v525
      %p528 = scmp.lt.s32.totalorder %s21, 1
      %s529 = scalar_select %p528, %s21, 1
      %s530 = smul.addr %s529, 8
      %s531 = scalar_lea.vmem %s8, %s530
      %p532 = scmp.lt.s32.totalorder %s21, 1
      %s533 = scalar_select %p532, %s21, 1
      %s534 = smul.addr %s533, 4
      %s535 = scalar_lea.vmem %s9, %s534
      // Predicated region
      $region53: #{transformer_decoder.18} parent=51 // pred_check
        %p536 = pneg %p217
      $region54: #{transformer_decoder.18} parent=51 // pred_check_branch
        %538 = sbr.rel (%p536) target = $region56
      $region55: #{transformer_decoder.18} parent=51 // pred_region
        _
      $region56: #{transformer_decoder.18} parent=51 // pred_fallthru
        _
      // Predicated region
      $region57: #{transformer_decoder.18} parent=51 // pred_check
        %p539 = pneg %p243
      $region58: #{transformer_decoder.18} parent=51 // pred_check_branch
        %541 = sbr.rel (%p539) target = $region60
      $region59: #{transformer_decoder.18} parent=51 // pred_region
        _
      $region60: #{transformer_decoder.18} parent=51 // pred_fallthru
        _
    $region52: #{transformer_decoder.18} parent=5 // pred_fallthru
      _
    %p542 = scmp.le.s32.totalorder 2, %s16
    // Predicated region
    $region61: #{transformer_decoder.18} parent=5 // pred_check
      %p543 = pneg %p542
    $region62: #{transformer_decoder.18} parent=5 // pred_check_branch
      %545 = sbr.rel (%p543) target = $region64
    $region63: #{transformer_decoder.18} parent=5 // pred_region
      %s546 = ssub.s32 %s16, 2
      // Predicated region
      $region65: #{transformer_decoder.18} parent=63 // pred_check
        %p547 = pneg %p223
      $region66: #{transformer_decoder.18} parent=63 // pred_check_branch
        %549 = sbr.rel (%p547) target = $region68
      $region67: #{transformer_decoder.18} parent=63 // pred_region
        %p550 = scmp.lt.s32.totalorder %s22, 1
        %s551 = scalar_select %p550, %s22, 1
        %s552 = smul.addr %s551, 8
        %s553 = scalar_lea.vmem %s8, %s552
      $region68: #{transformer_decoder.18} parent=63 // pred_fallthru
        _
      // Predicated region
      $region69: #{transformer_decoder.18} parent=63 // pred_check
        %p554 = pneg %p249
      $region70: #{transformer_decoder.18} parent=63 // pred_check_branch
        %556 = sbr.rel (%p554) target = $region72
      $region71: #{transformer_decoder.18} parent=63 // pred_region
        %p557 = scmp.lt.s32.totalorder %s22, 1
        %s558 = scalar_select %p557, %s22, 1
        %s559 = smul.addr %s558, 4
        %s560 = scalar_lea.vmem %s9, %s559
      $region72: #{transformer_decoder.18} parent=63 // pred_fallthru
        _
    $region64: #{transformer_decoder.18} parent=5 // pred_fallthru
      _
  $region6: #{transformer_decoder.18} parent=0 // loop_footer
    %s20 = sadd.s32 1, %s16
  $region7: #{transformer_decoder.18} parent=0 // loop_footer_branch
    %15 = sbr.rel target = $region3
  $region8: #{transformer_decoder.18} parent=0 // loop_exit
    _

// kernel: transformer_decoder.19
$region0: #{transformer_decoder.19}
  #allocation0 [shape = 'u32[]', space=smem, size = 0x4, offset = 0x4, fixed_abs, tag = 'smem constant byte address 0x4 - core index']
  #allocation1 [shape = 'u32[144,128]{1,0:T(1,128)}', space=vmem, size = 0x12000, scoped, tag = 'internal scratch']
  %s0 = inlined_call_operand.vmem [shape: bf16[32,32], index: 0, kind: input, shape index: {}]
  %s1 = inlined_call_operand.vmem [shape: bf16[32,64], index: 1, kind: input, shape index: {}]
  %s2 = inlined_call_operand.vmem [shape: f32[1,64], index: 2, kind: input, shape index: {}]
  %s3 = inlined_call_operand.vmem [shape: bf16[32,64], index: 3, kind: output, shape index: {}]
  %s4 = sld [smem:[#allocation0]]
  $region45: #{transformer_decoder.19} parent=0
    _
  %s6 = ssub.s32 1, %s4
  %s7 = scalar_select 0, %s6, %s4
  loop: start=0, step=1, limit=4
  $region2: #{transformer_decoder.19} parent=0 // loop_pre_header
    _
  $region3: #{transformer_decoder.19} parent=0 // loop_header
    %s9 = sphi 0, %s13
    %p10 = scmp.ge.s32.totalorder %s9, 4
    %s19 = sphi 0, %s21
    %s22 = sphi 0, %s19
    %s23 = sphi 0, %s22
    %s39 = sphi 0, %s23
    %s43 = sphi 0, %s43
    %s45 = sphi 0, %s43
    %s46 = sphi 0, %s45
    %s60 = sphi 0, %s46
    %s64 = sphi 0, %s64
    %s66 = sphi 0, %s64
    %s67 = sphi 0, %s66
    %s81 = sphi 0, %s67
    %s87 = sphi 0, %s89
    %s90 = sphi 0, %s87
    %s91 = sphi 0, %s90
    %s107 = sphi 0, %s91
  $region4: #{transformer_decoder.19} parent=0 // loop_header_branch
    %12 = sbr.rel (%p10) target = $region8
  $region5: #{transformer_decoder.19} parent=0 // loop_body
    %s14 = ssub.s32 %s9, 1
    %s15 = ssub.s32 %s9, 2
    %s16 = sadd.s32 %s9, 1
    %s17 = ssub.s32 %s9, %s16
    %p18 = scmp.eq.s32.totalorder %s17, 0
    %s20 = sadd.s32 %s19, 1
    %s21 = scalar_select %p18, %s19, %s20
    %p24 = pneg %p18
    %p25 = scmp.eq.s32.totalorder %s9, 1
    %p26 = por %p24, %p25
    %p27 = scmp.ne.s32.totalorder %s19, %s22
    %p28 = scmp.eq.s32.totalorder %s9, 0
    %p29 = por %p27, %p28
    %p30 = scmp.ne.s32.totalorder %s19, %s22
    %p31 = scmp.eq.s32.totalorder %s14, 1
    %p32 = por %p30, %p31
    %p33 = scmp.ne.s32.totalorder %s22, %s23
    %p34 = scmp.eq.s32.totalorder %s14, 0
    %p35 = por %p33, %p34
    %p36 = scmp.ne.s32.totalorder %s22, %s23
    %p37 = scmp.eq.s32.totalorder %s15, 1
    %p38 = por %p36, %p37
    %p40 = scmp.ne.s32.totalorder %s23, %s39
    %p41 = scmp.eq.s32.totalorder %s15, 0
    %p42 = por %p40, %p41
    %s44 = sadd.s32 %s43, 1
    %p47 = scmp.eq.s32.totalorder %s9, 1
    %p48 = scmp.ne.s32.totalorder %s43, %s45
    %p49 = scmp.eq.s32.totalorder %s9, 0
    %p50 = por %p48, %p49
    %p51 = scmp.ne.s32.totalorder %s43, %s45
    %p52 = scmp.eq.s32.totalorder %s14, 1
    %p53 = por %p51, %p52
    %p54 = scmp.ne.s32.totalorder %s45, %s46
    %p55 = scmp.eq.s32.totalorder %s14, 0
    %p56 = por %p54, %p55
    %p57 = scmp.ne.s32.totalorder %s45, %s46
    %p58 = scmp.eq.s32.totalorder %s15, 1
    %p59 = por %p57, %p58
    %p61 = scmp.ne.s32.totalorder %s46, %s60
    %p62 = scmp.eq.s32.totalorder %s15, 0
    %p63 = por %p61, %p62
    %s65 = sadd.s32 %s64, 1
    %p68 = scmp.eq.s32.totalorder %s9, 1
    %p69 = scmp.ne.s32.totalorder %s64, %s66
    %p70 = scmp.eq.s32.totalorder %s9, 0
    %p71 = por %p69, %p70
    %p72 = scmp.ne.s32.totalorder %s64, %s66
    %p73 = scmp.eq.s32.totalorder %s14, 1
    %p74 = por %p72, %p73
    %p75 = scmp.ne.s32.totalorder %s66, %s67
    %p76 = scmp.eq.s32.totalorder %s14, 0
    %p77 = por %p75, %p76
    %p78 = scmp.ne.s32.totalorder %s66, %s67
    %p79 = scmp.eq.s32.totalorder %s15, 1
    %p80 = por %p78, %p79
    %p82 = scmp.ne.s32.totalorder %s67, %s81
    %p83 = scmp.eq.s32.totalorder %s15, 0
    %p84 = por %p82, %p83
    %s85 = ssub.s32 %s9, %s16
    %p86 = scmp.eq.s32.totalorder %s85, 0
    %s88 = sadd.s32 %s87, 1
    %s89 = scalar_select %p86, %s87, %s88
    %p92 = pneg %p86
    %p93 = scmp.eq.s32.totalorder %s9, 1
    %p94 = por %p92, %p93
    %p95 = scmp.ne.s32.totalorder %s87, %s90
    %p96 = scmp.eq.s32.totalorder %s9, 0
    %p97 = por %p95, %p96
    %p98 = scmp.ne.s32.totalorder %s87, %s90
    %p99 = scmp.eq.s32.totalorder %s14, 1
    %p100 = por %p98, %p99
    %p101 = scmp.ne.s32.totalorder %s90, %s91
    %p102 = scmp.eq.s32.totalorder %s14, 0
    %p103 = por %p101, %p102
    %p104 = scmp.ne.s32.totalorder %s90, %s91
    %p105 = scmp.eq.s32.totalorder %s15, 1
    %p106 = por %p104, %p105
    %p108 = scmp.ne.s32.totalorder %s91, %s107
    %p109 = scmp.eq.s32.totalorder %s15, 0
    %p110 = por %p108, %p109
    %p111 = scmp.le.s32.totalorder 1, %s9
    %p112 = scmp.lt.s32.totalorder %s9, 3
    %p113 = pnand %p111, %p112
    %p114 = pneg %p113
    // Predicated region
    $region9: #{transformer_decoder.19} parent=5 // pred_check
      _
    $region10: #{transformer_decoder.19} parent=5 // pred_check_branch
      %116 = sbr.rel (%p113) target = $region12
    $region11: #{transformer_decoder.19} parent=5 // pred_region
      %s117 = ssub.s32 %s9, 1
      // Predicated region
      $region13: #{transformer_decoder.19} parent=11 // pred_check
        %p118 = pneg %p56
      $region14: #{transformer_decoder.19} parent=11 // pred_check_branch
        %120 = sbr.rel (%p118) target = $region16
      $region15: #{transformer_decoder.19} parent=11 // pred_region
        _
      $region16: #{transformer_decoder.19} parent=11 // pred_fallthru
        _
      // Predicated region
      $region17: #{transformer_decoder.19} parent=11 // pred_check
        %p121 = pneg %p77
      $region18: #{transformer_decoder.19} parent=11 // pred_check_branch
        %123 = sbr.rel (%p121) target = $region20
      $region19: #{transformer_decoder.19} parent=11 // pred_region
        _
      $region20: #{transformer_decoder.19} parent=11 // pred_fallthru
        _
    $region12: #{transformer_decoder.19} parent=5 // pred_fallthru
      _
    %p124 = scmp.lt.s32.totalorder %s9, 2
    // Predicated region
    $region21: #{transformer_decoder.19} parent=5 // pred_check
      %p125 = pneg %p124
    $region22: #{transformer_decoder.19} parent=5 // pred_check_branch
      %127 = sbr.rel (%p125) target = $region24
    $region23: #{transformer_decoder.19} parent=5 // pred_region
      // Predicated region
      $region25: #{transformer_decoder.19} parent=23 // pred_check
        %p128 = pneg %p29
      $region26: #{transformer_decoder.19} parent=23 // pred_check_branch
        %130 = sbr.rel (%p128) target = $region28
      $region27: #{transformer_decoder.19} parent=23 // pred_region
        %s131 = smul.u32 2, %s9
        %p132 = scmp.lt.s32.totalorder %s131, 3
        %s133 = scalar_select %p132, %s131, 3
        %s134 = smul.addr %s133, 4
        %s135 = scalar_lea.vmem %s0, %s134
        %s136 = smul.u32 2, %s9
      $region28: #{transformer_decoder.19} parent=23 // pred_fallthru
        _
    $region24: #{transformer_decoder.19} parent=5 // pred_fallthru
      _
    %p137 = scmp.le.s32.totalorder 1, %s9
    %p138 = scmp.lt.s32.totalorder %s9, 3
    %p139 = pnand %p137, %p138
    %p140 = pneg %p139
    // Predicated region
    $region29: #{transformer_decoder.19} parent=5 // pred_check
      _
    $region30: #{transformer_decoder.19} parent=5 // pred_check_branch
      %142 = sbr.rel (%p139) target = $region32
    $region31: #{transformer_decoder.19} parent=5 // pred_region
      %s143 = ssub.s32 %s9, 1
      %s144 = smul.u32 2, %s14
      %p145 = scmp.lt.s32.totalorder %s144, 3
      %s146 = scalar_select %p145, %s144, 3
      %s147 = smul.addr %s146, 4
      %s148 = scalar_lea.vmem %s0, %s147
      %p149 = pneg %p35
      %p150 = pneg %p32
      %p151 = pneg %p56
      %p152 = pneg %p53
      %p153 = pneg %p77
      %p154 = pneg %p74
      %p155 = pneg %p103
      %p156 = pneg %p100
      %s157 = smul.u32 2, %s14
      %p158 = scmp.lt.s32.totalorder %s157, 3
      %s159 = scalar_select %p158, %s157, 3
      %s160 = smul.addr %s159, 4
      %s161 = scalar_lea.vmem %s3, %s160
      %s162 = smul.u32 2, %s14
      %p163 = scmp.lt.s32.totalorder %s162, 3
      %s164 = scalar_select %p163, %s162, 3
      %s165 = smul.addr %s164, 4
      %s166 = scalar_lea.vmem %s0, %s165
      %s167 = smul.u32 2, %s14
      %s168 = smul.u32 2, %s14
      %p169 = scmp.lt.s32.totalorder %s168, 3
      %s170 = scalar_select %p169, %s168, 3
      %s171 = smul.addr %s170, 4
      %s172 = scalar_lea.vmem %s3, %s171
      %s173 = smul.u32 2, %s14
      %v175 = vld [vmem:[%s166] sm:$0xf]
      %v176 = vld [vmem:[%s166 + $0x4] sm:$0xf]
      %v177 = vld [vmem:[%s1] sm:$0xf]
      %v178 = vld [vmem:[%s1 + $0x4] sm:$0xf]
      %v179 = vld [vmem:[%s1 + $0x8] sm:$0xf]
      %v180 = vld [vmem:[%s1 + $0xc] sm:$0xf]
      %v181 = vld [vmem:[%s2] sm:$0x1]
      %v183 = vlaneseq
      %v184 = vshrl.u32 %v183, 7
      %v185 = vsub.s32 0, %v184
      %v186 = vrot.slane %v181, %v185
      %v190 = vunpack.c.l.b16 %v175
      %v191 = vunpack.c.l.b16 %v176
      %v192 = vpack.c.b16 %v191, %v190
      %v197 = vunpack.c.l.b16 %v177
      %v198 = vunpack.c.l.b16 %v178
      %v199 = vunpack.c.l.b16 %v179
      %v200 = vunpack.c.l.b16 %v180
      %v201 = vpack.c.b16 %v198, %v197
      %v202 = vpack.c.b16 %v200, %v199
      %vm205 = vcmask 261120
      %v207 = vsel %vm205, %v192, 0
      %209 = vmatprep.subr.bf16.mxu0 0
      %210 = vmatpush1.bf16.msra.mxu0 %v201
      %211 = vmatprep.subr.bf16.mxu0 0
      %212 = vmatpush1.bf16.msra.mxu0 %v202
      %213 = vmatprep.subr.bf16.mxu0 0
      %214 = vmatpush1.bf16.msra.mxu0 0
      %215 = vmatprep.subr.bf16.mxu0 0
      %216 = vmatpush1.bf16.msra.mxu0 0
      %217 = vmatprep.subr.bf16.mxu0 0
      %218 = vmatpush1.bf16.msra.mxu0 0
      %219 = vmatprep.subr.bf16.mxu0 0
      %220 = vmatpush1.bf16.msra.mxu0 0
      %221 = vmatprep.subr.bf16.mxu0 0
      %222 = vmatpush1.bf16.msra.mxu0 0
      %223 = vmatprep.subr.bf16.mxu0 0
      %224 = vmatpush1.bf16.msra.mxu0 0
      %225 = vmatprep.subr.bf16.mxu0 0
      %226 = vmatpush1.bf16.msra.mxu0 0
      %227 = vmatprep.subr.bf16.mxu0 0
      %228 = vmatpush1.bf16.msra.mxu0 0
      %229 = vmatprep.subr.bf16.mxu0 0
      %230 = vmatpush1.bf16.msra.mxu0 0
      %231 = vmatprep.subr.bf16.mxu0 0
      %232 = vmatpush1.bf16.msra.mxu0 0
      %233 = vmatprep.subr.bf16.mxu0 0
      %234 = vmatpush1.bf16.msra.mxu0 0
      %235 = vmatprep.subr.bf16.mxu0 0
      %236 = vmatpush1.bf16.msra.mxu0 0
      %237 = vmatprep.subr.bf16.mxu0 0
      %238 = vmatpush1.bf16.msra.mxu0 0
      %239 = vmatprep.subr.bf16.mxu0 0
      %240 = vmatpush1.bf16.msra.mxu0 0
      %241 = vmatprep.mubr.bf16.mxu0 0
      %242 = vmatmul.mubr.bf16.gmra.mrb[0].mxu0 %v207
      %v243 = vpop.f32.mrb[0].mxu0
      %v244 = vadd.f32 %v186, %v243
      %v245 = vpop.f32.mrb[0].mxu0
      %v246 = vpop.f32.mrb[0].mxu0
      %v247 = vadd.f32 %v186, %v246
      %v248 = vpop.f32.mrb[0].mxu0
      %249 = vdwg.mxu0
      %v250 = vpack.c.bf16 %v247, %v244
      %v252 = vunpack.c.l.b16 %v250
      %v253 = vunpack.c.h.b16 %v250
      %v254 = vpack.c.b16 %v252, %v252
      %v255 = vpack.c.b16 %v253, %v253
      %vm258 = vcmask 519168
      %259 = vst.msk [vmem:[%s172] sm:$0xf] %vm258, %v254
      %260 = vst.msk [vmem:[%s172 + $0x4] sm:$0xf] %vm258, %v255
      %s261 = smul.u32 2, %s14
      %p262 = scmp.lt.s32.totalorder %s261, 3
      %s263 = scalar_select %p262, %s261, 3
      %s264 = smul.addr %s263, 4
      %s265 = scalar_lea.vmem %s3, %s264
      // Predicated region
      $region33: #{transformer_decoder.19} parent=31 // pred_check
        %p266 = pneg %p100
      $region34: #{transformer_decoder.19} parent=31 // pred_check_branch
        %268 = sbr.rel (%p266) target = $region36
      $region35: #{transformer_decoder.19} parent=31 // pred_region
        %s269 = smul.u32 2, %s14
      $region36: #{transformer_decoder.19} parent=31 // pred_fallthru
        _
    $region32: #{transformer_decoder.19} parent=5 // pred_fallthru
      _
    %p270 = scmp.le.s32.totalorder 2, %s9
    // Predicated region
    $region37: #{transformer_decoder.19} parent=5 // pred_check
      %p271 = pneg %p270
    $region38: #{transformer_decoder.19} parent=5 // pred_check_branch
      %273 = sbr.rel (%p271) target = $region40
    $region39: #{transformer_decoder.19} parent=5 // pred_region
      %s274 = ssub.s32 %s9, 2
      // Predicated region
      $region41: #{transformer_decoder.19} parent=39 // pred_check
        %p275 = pneg %p106
      $region42: #{transformer_decoder.19} parent=39 // pred_check_branch
        %277 = sbr.rel (%p275) target = $region44
      $region43: #{transformer_decoder.19} parent=39 // pred_region
        %s278 = smul.u32 2, %s15
        %p279 = scmp.lt.s32.totalorder %s278, 3
        %s280 = scalar_select %p279, %s278, 3
        %s281 = smul.addr %s280, 4
        %s282 = scalar_lea.vmem %s3, %s281
      $region44: #{transformer_decoder.19} parent=39 // pred_fallthru
        _
    $region40: #{transformer_decoder.19} parent=5 // pred_fallthru
      _
  $region6: #{transformer_decoder.19} parent=0 // loop_footer
    %s13 = sadd.s32 1, %s9
  $region7: #{transformer_decoder.19} parent=0 // loop_footer_branch
    %8 = sbr.rel target = $region3
  $region8: #{transformer_decoder.19} parent=0 // loop_exit
    _

// kernel: transformer_decoder.20
$region0: #{transformer_decoder.20}
  #allocation0 [shape = 'u32[]', space=smem, size = 0x4, offset = 0x4, fixed_abs, tag = 'smem constant byte address 0x4 - core index']
  #allocation1 [shape = 'u32[144,128]{1,0:T(1,128)}', space=vmem, size = 0x12000, scoped, tag = 'internal scratch']
  %s0 = inlined_call_operand.vmem [shape: bf16[2,4,8,8], index: 0, kind: input, shape index: {}]
  %s1 = inlined_call_operand.vmem [shape: bf16[4,4,8,8], index: 1, kind: input, shape index: {}]
  %s2 = inlined_call_operand.vmem [shape: bf16[4,4,8,8], index: 2, kind: input, shape index: {}]
  %s3 = inlined_call_operand.vmem [shape: bf16[4,4,8,8], index: 3, kind: output, shape index: {}]
  %s4 = sld [smem:[#allocation0]]
  $region45: #{transformer_decoder.20} parent=0
    _
  %s6 = ssub.s32 1, %s4
  %s7 = scalar_select 0, %s6, %s4
  loop: start=0, step=1, limit=18
  $region2: #{transformer_decoder.20} parent=0 // loop_pre_header
    _
  $region3: #{transformer_decoder.20} parent=0 // loop_header
    %s9 = sphi 0, %s13
    %p10 = scmp.ge.s32.totalorder %s9, 18
    %s16 = sphi 0, %s28
    %s17 = sphi 0, %s24
    %s18 = sphi 0, %s16
    %s19 = sphi 0, %s17
    %s20 = sphi 0, %s18
    %s21 = sphi 0, %s19
    %s57 = sphi 0, %s59
    %s60 = sphi 0, %s57
    %s61 = sphi 0, %s60
    %s77 = sphi 0, %s61
    %s85 = sphi 0, %s87
    %s88 = sphi 0, %s85
    %s89 = sphi 0, %s88
    %s105 = sphi 0, %s89
    %s113 = sphi 0, %s115
    %s116 = sphi 0, %s113
    %s117 = sphi 0, %s116
    %s133 = sphi 0, %s117
    %s141 = sphi 0, %s143
    %s144 = sphi 0, %s141
    %s145 = sphi 0, %s144
    %s161 = sphi 0, %s145
  $region4: #{transformer_decoder.20} parent=0 // loop_header_branch
    %12 = sbr.rel (%p10) target = $region8
  $region5: #{transformer_decoder.20} parent=0 // loop_body
    %s14 = ssub.s32 %s9, 1
    %s15 = ssub.s32 %s9, 2
    %s22 = sadd.s32 1, %s17
    %p23 = scmp.ge.s32.totalorder %s22, 4
    %s24 = scalar_select %p23, 0, %s22
    %s25 = sadd.s32 1, %s16
    %s26 = scalar_select %p23, %s25, %s16
    %p27 = scmp.ge.s32.totalorder %s26, 4
    %s28 = scalar_select %p27, 0, %s26
    %p29 = scmp.lt.s32.totalorder %s16, 0
    %s30 = ssub.s32 0, %s16
    %s31 = scalar_select %p29, %s30, %s16
    %s32 = sand.u32 %s31, 1
    %s33 = ssub.s32 0, %s32
    %s34 = scalar_select %p29, %s33, %s32
    %p35 = scmp.ne.s32.totalorder %s34, 0
    %p36 = scmp.lt.s32.totalorder %s34, 0
    %p37 = pnand %p36, %p35
    %p38 = pneg %p37
    %s39 = sadd.s32 %s34, 2
    %s40 = scalar_select %p38, %s39, %s34
    %p41 = scmp.lt.s32.totalorder %s28, 0
    %s42 = ssub.s32 0, %s28
    %s43 = scalar_select %p41, %s42, %s28
    %s44 = sand.u32 %s43, 1
    %s45 = ssub.s32 0, %s44
    %s46 = scalar_select %p41, %s45, %s44
    %p47 = scmp.ne.s32.totalorder %s46, 0
    %p48 = scmp.lt.s32.totalorder %s46, 0
    %p49 = pnand %p48, %p47
    %p50 = pneg %p49
    %s51 = sadd.s32 %s46, 2
    %s52 = scalar_select %p50, %s51, %s46
    %s53 = ssub.s32 %s40, %s52
    %s54 = ssub.s32 %s17, %s24
    %s55 = sor.u32 %s53, %s54
    %p56 = scmp.eq.s32.totalorder %s55, 0
    %s58 = sadd.s32 %s57, 1
    %s59 = scalar_select %p56, %s57, %s58
    %p62 = pneg %p56
    %p63 = scmp.eq.s32.totalorder %s9, 15
    %p64 = por %p62, %p63
    %p65 = scmp.ne.s32.totalorder %s57, %s60
    %p66 = scmp.eq.s32.totalorder %s9, 0
    %p67 = por %p65, %p66
    %p68 = scmp.ne.s32.totalorder %s57, %s60
    %p69 = scmp.eq.s32.totalorder %s14, 15
    %p70 = por %p68, %p69
    %p71 = scmp.ne.s32.totalorder %s60, %s61
    %p72 = scmp.eq.s32.totalorder %s14, 0
    %p73 = por %p71, %p72
    %p74 = scmp.ne.s32.totalorder %s60, %s61
    %p75 = scmp.eq.s32.totalorder %s15, 15
    %p76 = por %p74, %p75
    %p78 = scmp.ne.s32.totalorder %s61, %s77
    %p79 = scmp.eq.s32.totalorder %s15, 0
    %p80 = por %p78, %p79
    %s81 = ssub.s32 %s16, %s28
    %s82 = ssub.s32 %s17, %s24
    %s83 = sor.u32 %s81, %s82
    %p84 = scmp.eq.s32.totalorder %s83, 0
    %s86 = sadd.s32 %s85, 1
    %s87 = scalar_select %p84, %s85, %s86
    %p90 = pneg %p84
    %p91 = scmp.eq.s32.totalorder %s9, 15
    %p92 = por %p90, %p91
    %p93 = scmp.ne.s32.totalorder %s85, %s88
    %p94 = scmp.eq.s32.totalorder %s9, 0
    %p95 = por %p93, %p94
    %p96 = scmp.ne.s32.totalorder %s85, %s88
    %p97 = scmp.eq.s32.totalorder %s14, 15
    %p98 = por %p96, %p97
    %p99 = scmp.ne.s32.totalorder %s88, %s89
    %p100 = scmp.eq.s32.totalorder %s14, 0
    %p101 = por %p99, %p100
    %p102 = scmp.ne.s32.totalorder %s88, %s89
    %p103 = scmp.eq.s32.totalorder %s15, 15
    %p104 = por %p102, %p103
    %p106 = scmp.ne.s32.totalorder %s89, %s105
    %p107 = scmp.eq.s32.totalorder %s15, 0
    %p108 = por %p106, %p107
    %s109 = ssub.s32 %s16, %s28
    %s110 = ssub.s32 %s17, %s24
    %s111 = sor.u32 %s109, %s110
    %p112 = scmp.eq.s32.totalorder %s111, 0
    %s114 = sadd.s32 %s113, 1
    %s115 = scalar_select %p112, %s113, %s114
    %p118 = pneg %p112
    %p119 = scmp.eq.s32.totalorder %s9, 15
    %p120 = por %p118, %p119
    %p121 = scmp.ne.s32.totalorder %s113, %s116
    %p122 = scmp.eq.s32.totalorder %s9, 0
    %p123 = por %p121, %p122
    %p124 = scmp.ne.s32.totalorder %s113, %s116
    %p125 = scmp.eq.s32.totalorder %s14, 15
    %p126 = por %p124, %p125
    %p127 = scmp.ne.s32.totalorder %s116, %s117
    %p128 = scmp.eq.s32.totalorder %s14, 0
    %p129 = por %p127, %p128
    %p130 = scmp.ne.s32.totalorder %s116, %s117
    %p131 = scmp.eq.s32.totalorder %s15, 15
    %p132 = por %p130, %p131
    %p134 = scmp.ne.s32.totalorder %s117, %s133
    %p135 = scmp.eq.s32.totalorder %s15, 0
    %p136 = por %p134, %p135
    %s137 = ssub.s32 %s16, %s28
    %s138 = ssub.s32 %s17, %s24
    %s139 = sor.u32 %s137, %s138
    %p140 = scmp.eq.s32.totalorder %s139, 0
    %s142 = sadd.s32 %s141, 1
    %s143 = scalar_select %p140, %s141, %s142
    %p146 = pneg %p140
    %p147 = scmp.eq.s32.totalorder %s9, 15
    %p148 = por %p146, %p147
    %p149 = scmp.ne.s32.totalorder %s141, %s144
    %p150 = scmp.eq.s32.totalorder %s9, 0
    %p151 = por %p149, %p150
    %p152 = scmp.ne.s32.totalorder %s141, %s144
    %p153 = scmp.eq.s32.totalorder %s14, 15
    %p154 = por %p152, %p153
    %p155 = scmp.ne.s32.totalorder %s144, %s145
    %p156 = scmp.eq.s32.totalorder %s14, 0
    %p157 = por %p155, %p156
    %p158 = scmp.ne.s32.totalorder %s144, %s145
    %p159 = scmp.eq.s32.totalorder %s15, 15
    %p160 = por %p158, %p159
    %p162 = scmp.ne.s32.totalorder %s145, %s161
    %p163 = scmp.eq.s32.totalorder %s15, 0
    %p164 = por %p162, %p163
    %p165 = scmp.le.s32.totalorder 1, %s9
    %p166 = scmp.lt.s32.totalorder %s9, 17
    %p167 = pnand %p165, %p166
    %p168 = pneg %p167
    // Predicated region
    $region9: #{transformer_decoder.20} parent=5 // pred_check
      _
    $region10: #{transformer_decoder.20} parent=5 // pred_check_branch
      %170 = sbr.rel (%p167) target = $region12
    $region11: #{transformer_decoder.20} parent=5 // pred_region
      %s171 = ssub.s32 %s9, 1
    $region12: #{transformer_decoder.20} parent=5 // pred_fallthru
      _
    %p172 = scmp.lt.s32.totalorder %s9, 16
    // Predicated region
    $region13: #{transformer_decoder.20} parent=5 // pred_check
      %p173 = pneg %p172
    $region14: #{transformer_decoder.20} parent=5 // pred_check_branch
      %175 = sbr.rel (%p173) target = $region16
    $region15: #{transformer_decoder.20} parent=5 // pred_region
      // Predicated region
      $region17: #{transformer_decoder.20} parent=15 // pred_check
        %p176 = pneg %p67
      $region18: #{transformer_decoder.20} parent=15 // pred_check_branch
        %178 = sbr.rel (%p176) target = $region20
      $region19: #{transformer_decoder.20} parent=15 // pred_region
        %p179 = scmp.lt.s32.totalorder %s16, 0
        %s180 = ssub.s32 0, %s16
        %s181 = scalar_select %p179, %s180, %s16
        %s182 = sand.u32 %s181, 1
        %s183 = ssub.s32 0, %s182
        %s184 = scalar_select %p179, %s183, %s182
        %p185 = scmp.ne.s32.totalorder %s184, 0
        %p186 = scmp.lt.s32.totalorder %s184, 0
        %p187 = pnand %p186, %p185
        %p188 = pneg %p187
        %s189 = sadd.s32 %s184, 2
        %s190 = scalar_select %p188, %s189, %s184
        %p191 = scmp.lt.s32.totalorder %s190, 1
        %s192 = scalar_select %p191, %s190, 1
        %p193 = scmp.lt.s32.totalorder %s17, 3
        %s194 = scalar_select %p193, %s17, 3
        %s195 = smul.addr %s192, 4
        %s196 = sadd.s32 %s194, %s195
        %s197 = smul.addr %s196, 4
        %s198 = scalar_lea.vmem %s0, %s197
        %p199 = scmp.lt.s32.totalorder %s16, 0
        %s200 = ssub.s32 0, %s16
        %s201 = scalar_select %p199, %s200, %s16
        %s202 = sand.u32 %s201, 1
        %s203 = ssub.s32 0, %s202
        %s204 = scalar_select %p199, %s203, %s202
        %p205 = scmp.ne.s32.totalorder %s204, 0
        %p206 = scmp.lt.s32.totalorder %s204, 0
        %p207 = pnand %p206, %p205
        %p208 = pneg %p207
        %s209 = sadd.s32 %s204, 2
        %s210 = scalar_select %p208, %s209, %s204
      $region20: #{transformer_decoder.20} parent=15 // pred_fallthru
        _
      // Predicated region
      $region21: #{transformer_decoder.20} parent=15 // pred_check
        %p211 = pneg %p95
      $region22: #{transformer_decoder.20} parent=15 // pred_check_branch
        %213 = sbr.rel (%p211) target = $region24
      $region23: #{transformer_decoder.20} parent=15 // pred_region
        %p214 = scmp.lt.s32.totalorder %s16, 3
        %s215 = scalar_select %p214, %s16, 3
        %p216 = scmp.lt.s32.totalorder %s17, 3
        %s217 = scalar_select %p216, %s17, 3
        %s218 = smul.addr %s215, 4
        %s219 = sadd.s32 %s217, %s218
        %s220 = smul.addr %s219, 4
        %s221 = scalar_lea.vmem %s1, %s220
      $region24: #{transformer_decoder.20} parent=15 // pred_fallthru
        _
      // Predicated region
      $region25: #{transformer_decoder.20} parent=15 // pred_check
        %p222 = pneg %p123
      $region26: #{transformer_decoder.20} parent=15 // pred_check_branch
        %224 = sbr.rel (%p222) target = $region28
      $region27: #{transformer_decoder.20} parent=15 // pred_region
        %p225 = scmp.lt.s32.totalorder %s16, 3
        %s226 = scalar_select %p225, %s16, 3
        %p227 = scmp.lt.s32.totalorder %s17, 3
        %s228 = scalar_select %p227, %s17, 3
        %s229 = smul.addr %s226, 4
        %s230 = sadd.s32 %s228, %s229
        %s231 = smul.addr %s230, 4
        %s232 = scalar_lea.vmem %s2, %s231
      $region28: #{transformer_decoder.20} parent=15 // pred_fallthru
        _
    $region16: #{transformer_decoder.20} parent=5 // pred_fallthru
      _
    %p233 = scmp.le.s32.totalorder 1, %s9
    %p234 = scmp.lt.s32.totalorder %s9, 17
    %p235 = pnand %p233, %p234
    %p236 = pneg %p235
    // Predicated region
    $region29: #{transformer_decoder.20} parent=5 // pred_check
      _
    $region30: #{transformer_decoder.20} parent=5 // pred_check_branch
      %238 = sbr.rel (%p235) target = $region32
    $region31: #{transformer_decoder.20} parent=5 // pred_region
      %s239 = ssub.s32 %s9, 1
      %p240 = scmp.lt.s32.totalorder %s18, 0
      %s241 = ssub.s32 0, %s18
      %s242 = scalar_select %p240, %s241, %s18
      %s243 = sand.u32 %s242, 1
      %s244 = ssub.s32 0, %s243
      %s245 = scalar_select %p240, %s244, %s243
      %p246 = scmp.ne.s32.totalorder %s245, 0
      %p247 = scmp.lt.s32.totalorder %s245, 0
      %p248 = pnand %p247, %p246
      %p249 = pneg %p248
      %s250 = sadd.s32 %s245, 2
      %s251 = scalar_select %p249, %s250, %s245
      %p252 = scmp.lt.s32.totalorder %s251, 1
      %s253 = scalar_select %p252, %s251, 1
      %p254 = scmp.lt.s32.totalorder %s19, 3
      %s255 = scalar_select %p254, %s19, 3
      %s256 = smul.addr %s253, 4
      %s257 = sadd.s32 %s255, %s256
      %s258 = smul.addr %s257, 4
      %s259 = scalar_lea.vmem %s0, %s258
      %p260 = pneg %p73
      %p261 = pneg %p70
      %p262 = scmp.lt.s32.totalorder %s18, 3
      %s263 = scalar_select %p262, %s18, 3
      %p264 = scmp.lt.s32.totalorder %s19, 3
      %s265 = scalar_select %p264, %s19, 3
      %s266 = smul.addr %s263, 4
      %s267 = sadd.s32 %s265, %s266
      %s268 = smul.addr %s267, 4
      %s269 = scalar_lea.vmem %s1, %s268
      %p270 = pneg %p101
      %p271 = pneg %p98
      %p272 = scmp.lt.s32.totalorder %s18, 3
      %s273 = scalar_select %p272, %s18, 3
      %p274 = scmp.lt.s32.totalorder %s19, 3
      %s275 = scalar_select %p274, %s19, 3
      %s276 = smul.addr %s273, 4
      %s277 = sadd.s32 %s275, %s276
      %s278 = smul.addr %s277, 4
      %s279 = scalar_lea.vmem %s2, %s278
      %p280 = pneg %p129
      %p281 = pneg %p126
      %p282 = pneg %p157
      %p283 = pneg %p154
      %p284 = scmp.lt.s32.totalorder %s18, 3
      %s285 = scalar_select %p284, %s18, 3
      %p286 = scmp.lt.s32.totalorder %s19, 3
      %s287 = scalar_select %p286, %s19, 3
      %s288 = smul.addr %s285, 4
      %s289 = sadd.s32 %s287, %s288
      %s290 = smul.addr %s289, 4
      %s291 = scalar_lea.vmem %s3, %s290
      %p292 = scmp.lt.s32.totalorder %s18, 0
      %s293 = ssub.s32 0, %s18
      %s294 = scalar_select %p292, %s293, %s18
      %s295 = sand.u32 %s294, 1
      %s296 = ssub.s32 0, %s295
      %s297 = scalar_select %p292, %s296, %s295
      %p298 = scmp.ne.s32.totalorder %s297, 0
      %p299 = scmp.lt.s32.totalorder %s297, 0
      %p300 = pnand %p299, %p298
      %p301 = pneg %p300
      %s302 = sadd.s32 %s297, 2
      %s303 = scalar_select %p301, %s302, %s297
      %p304 = scmp.lt.s32.totalorder %s303, 1
      %s305 = scalar_select %p304, %s303, 1
      %p306 = scmp.lt.s32.totalorder %s19, 3
      %s307 = scalar_select %p306, %s19, 3
      %s308 = smul.addr %s305, 4
      %s309 = sadd.s32 %s307, %s308
      %s310 = smul.addr %s309, 4
      %s311 = scalar_lea.vmem %s0, %s310
      %p312 = scmp.lt.s32.totalorder %s18, 0
      %s313 = ssub.s32 0, %s18
      %s314 = scalar_select %p312, %s313, %s18
      %s315 = sand.u32 %s314, 1
      %s316 = ssub.s32 0, %s315
      %s317 = scalar_select %p312, %s316, %s315
      %p318 = scmp.ne.s32.totalorder %s317, 0
      %p319 = scmp.lt.s32.totalorder %s317, 0
      %p320 = pnand %p319, %p318
      %p321 = pneg %p320
      %s322 = sadd.s32 %s317, 2
      %s323 = scalar_select %p321, %s322, %s317
      %p324 = scmp.lt.s32.totalorder %s18, 3
      %s325 = scalar_select %p324, %s18, 3
      %p326 = scmp.lt.s32.totalorder %s19, 3
      %s327 = scalar_select %p326, %s19, 3
      %s328 = smul.addr %s325, 4
      %s329 = sadd.s32 %s327, %s328
      %s330 = smul.addr %s329, 4
      %s331 = scalar_lea.vmem %s1, %s330
      %p332 = scmp.lt.s32.totalorder %s18, 3
      %s333 = scalar_select %p332, %s18, 3
      %p334 = scmp.lt.s32.totalorder %s19, 3
      %s335 = scalar_select %p334, %s19, 3
      %s336 = smul.addr %s333, 4
      %s337 = sadd.s32 %s335, %s336
      %s338 = smul.addr %s337, 4
      %s339 = scalar_lea.vmem %s2, %s338
      %p340 = scmp.lt.s32.totalorder %s18, 3
      %s341 = scalar_select %p340, %s18, 3
      %p342 = scmp.lt.s32.totalorder %s19, 3
      %s343 = scalar_select %p342, %s19, 3
      %s344 = smul.addr %s341, 4
      %s345 = sadd.s32 %s343, %s344
      %s346 = smul.addr %s345, 4
      %s347 = scalar_lea.vmem %s3, %s346
      %v349 = vld [vmem:[%s311] sm:$0xf]
      %v350 = vld [vmem:[%s331] sm:$0xf]
      %v351 = vld [vmem:[%s339] sm:$0xf]
      %vm352 = vcmask 64512
      %v354 = vsel %vm352, %v349, 0
      %v357 = vsel %vm352, %v350, 0
      %359 = vmatprep.subr.bf16.mxu0 0
      %360 = vmatpush1.bf16.xpose.msra.mxu0 %v357
      %361 = vmatprep.subr.bf16.mxu0 0
      %362 = vmatpush1.bf16.xpose.msra.mxu0 0
      %363 = vmatprep.subr.bf16.mxu0 0
      %364 = vmatpush1.bf16.xpose.msra.mxu0 0
      %365 = vmatprep.subr.bf16.mxu0 0
      %366 = vmatpush1.bf16.xpose.msra.mxu0 0
      %367 = vmatprep.subr.bf16.mxu0 0
      %368 = vmatpush1.bf16.xpose.msra.mxu0 0
      %369 = vmatprep.subr.bf16.mxu0 0
      %370 = vmatpush1.bf16.xpose.msra.mxu0 0
      %371 = vmatprep.subr.bf16.mxu0 0
      %372 = vmatpush1.bf16.xpose.msra.mxu0 0
      %373 = vmatprep.subr.bf16.mxu0 0
      %374 = vmatpush1.bf16.xpose.msra.mxu0 0
      %375 = vmatprep.subr.bf16.mxu0 0
      %376 = vmatpush1.bf16.xpose.msra.mxu0 0
      %377 = vmatprep.subr.bf16.mxu0 0
      %378 = vmatpush1.bf16.xpose.msra.mxu0 0
      %379 = vmatprep.subr.bf16.mxu0 0
      %380 = vmatpush1.bf16.xpose.msra.mxu0 0
      %381 = vmatprep.subr.bf16.mxu0 0
      %382 = vmatpush1.bf16.xpose.msra.mxu0 0
      %383 = vmatprep.subr.bf16.mxu0 0
      %384 = vmatpush1.bf16.xpose.msra.mxu0 0
      %385 = vmatprep.subr.bf16.mxu0 0
      %386 = vmatpush1.bf16.xpose.msra.mxu0 0
      %387 = vmatprep.subr.bf16.mxu0 0
      %388 = vmatpush1.bf16.xpose.msra.mxu0 0
      %389 = vmatprep.subr.bf16.mxu0 0
      %390 = vmatpush1.bf16.xpose.msra.mxu0 0
      %391 = vmatprep.mubr.bf16.mxu0 0
      %392 = vmatmul.mubr.bf16.gmra.mrb[0].mxu0 %v354
      %v393 = vpop.f32.mrb[0].mxu0
      %v394 = vadd.f32 0.0, %v393
      %v395 = vpop.f32.mrb[0].mxu0
      %v396 = vpop.f32.mrb[0].mxu0
      %v397 = vpop.f32.mrb[0].mxu0
      %398 = vdwg.mxu0
      %v399 = vmul.f32 %v394, 0.35355338
      %v400 = vsel %vm352, %v399, -inf
      %401 = vmax.xlane.f32.xlu0 %v400
      %v402 = vpop.xlane.xlu0 %401
      %v403 = vsub.f32 %v399, %v402
      %v404 = vmul.f32 %v403, 1.442695
      %v405 = vpow.pop %v404
      %v406 = vsel %vm352, %v405, 0.0
      %407 = vadd.xlane.f32.xlu0 %v406
      %v408 = vpop.xlane.xlu0 %407
      %v409 = vrcp.pop %v408
      %v410 = vmul.f32 %v405, %v409
      %v411 = vpack.c.bf16 %v410, %v410
      %v413 = vsel %vm352, %v411, 0
      %vm415 = vcmask 1043456
      %v417 = vsel %vm415, %v351, 0
      %419 = vmatprep.subr.bf16.mxu0 0
      %420 = vmatpush1.bf16.msra.mxu0 %v417
      %421 = vmatprep.subr.bf16.mxu0 0
      %422 = vmatpush1.bf16.msra.mxu0 0
      %423 = vmatprep.subr.bf16.mxu0 0
      %424 = vmatpush1.bf16.msra.mxu0 0
      %425 = vmatprep.subr.bf16.mxu0 0
      %426 = vmatpush1.bf16.msra.mxu0 0
      %427 = vmatprep.subr.bf16.mxu0 0
      %428 = vmatpush1.bf16.msra.mxu0 0
      %429 = vmatprep.subr.bf16.mxu0 0
      %430 = vmatpush1.bf16.msra.mxu0 0
      %431 = vmatprep.subr.bf16.mxu0 0
      %432 = vmatpush1.bf16.msra.mxu0 0
      %433 = vmatprep.subr.bf16.mxu0 0
      %434 = vmatpush1.bf16.msra.mxu0 0
      %435 = vmatprep.subr.bf16.mxu0 0
      %436 = vmatpush1.bf16.msra.mxu0 0
      %437 = vmatprep.subr.bf16.mxu0 0
      %438 = vmatpush1.bf16.msra.mxu0 0
      %439 = vmatprep.subr.bf16.mxu0 0
      %440 = vmatpush1.bf16.msra.mxu0 0
      %441 = vmatprep.subr.bf16.mxu0 0
      %442 = vmatpush1.bf16.msra.mxu0 0
      %443 = vmatprep.subr.bf16.mxu0 0
      %444 = vmatpush1.bf16.msra.mxu0 0
      %445 = vmatprep.subr.bf16.mxu0 0
      %446 = vmatpush1.bf16.msra.mxu0 0
      %447 = vmatprep.subr.bf16.mxu0 0
      %448 = vmatpush1.bf16.msra.mxu0 0
      %449 = vmatprep.subr.bf16.mxu0 0
      %450 = vmatpush1.bf16.msra.mxu0 0
      %451 = vmatprep.mubr.bf16.mxu0 0
      %452 = vmatmul.mubr.bf16.gmra.mrb[0].mxu0 %v413
      %v453 = vpop.f32.mrb[0].mxu0
      %v454 = vadd.f32 0.0, %v453
      %v455 = vpop.f32.mrb[0].mxu0
      %v456 = vpop.f32.mrb[0].mxu0
      %v457 = vpop.f32.mrb[0].mxu0
      %458 = vdwg.mxu0
      %v459 = vpack.c.bf16 %v454, %v454
      %vm460 = vcmask 60416
      %461 = vst.msk [vmem:[%s347] sm:$0xf] %vm460, %v459
      %p462 = scmp.lt.s32.totalorder %s18, 3
      %s463 = scalar_select %p462, %s18, 3
      %p464 = scmp.lt.s32.totalorder %s19, 3
      %s465 = scalar_select %p464, %s19, 3
      %s466 = smul.addr %s463, 4
      %s467 = sadd.s32 %s465, %s466
      %s468 = smul.addr %s467, 4
      %s469 = scalar_lea.vmem %s3, %s468
      // Predicated region
      $region33: #{transformer_decoder.20} parent=31 // pred_check
        %p470 = pneg %p154
      $region34: #{transformer_decoder.20} parent=31 // pred_check_branch
        %472 = sbr.rel (%p470) target = $region36
      $region35: #{transformer_decoder.20} parent=31 // pred_region
        _
      $region36: #{transformer_decoder.20} parent=31 // pred_fallthru
        _
    $region32: #{transformer_decoder.20} parent=5 // pred_fallthru
      _
    %p473 = scmp.le.s32.totalorder 2, %s9
    // Predicated region
    $region37: #{transformer_decoder.20} parent=5 // pred_check
      %p474 = pneg %p473
    $region38: #{transformer_decoder.20} parent=5 // pred_check_branch
      %476 = sbr.rel (%p474) target = $region40
    $region39: #{transformer_decoder.20} parent=5 // pred_region
      %s477 = ssub.s32 %s9, 2
      // Predicated region
      $region41: #{transformer_decoder.20} parent=39 // pred_check
        %p478 = pneg %p160
      $region42: #{transformer_decoder.20} parent=39 // pred_check_branch
        %480 = sbr.rel (%p478) target = $region44
      $region43: #{transformer_decoder.20} parent=39 // pred_region
        %p481 = scmp.lt.s32.totalorder %s20, 3
        %s482 = scalar_select %p481, %s20, 3
        %p483 = scmp.lt.s32.totalorder %s21, 3
        %s484 = scalar_select %p483, %s21, 3
        %s485 = smul.addr %s482, 4
        %s486 = sadd.s32 %s484, %s485
        %s487 = smul.addr %s486, 4
        %s488 = scalar_lea.vmem %s3, %s487
      $region44: #{transformer_decoder.20} parent=39 // pred_fallthru
        _
    $region40: #{transformer_decoder.20} parent=5 // pred_fallthru
      _
  $region6: #{transformer_decoder.20} parent=0 // loop_footer
    %s13 = sadd.s32 1, %s9
  $region7: #{transformer_decoder.20} parent=0 // loop_footer_branch
    %8 = sbr.rel target = $region3
  $region8: #{transformer_decoder.20} parent=0 // loop_exit
    _

// kernel: transformer_decoder.21
$region0: #{transformer_decoder.21}
  #allocation0 [shape = 'u32[]', space=smem, size = 0x4, offset = 0x4, fixed_abs, tag = 'smem constant byte address 0x4 - core index']
  #allocation1 [shape = 'u32[144,128]{1,0:T(1,128)}', space=vmem, size = 0x12000, scoped, tag = 'internal scratch']
  %s0 = inlined_call_operand.vmem [shape: bf16[32,32], index: 0, kind: input, shape index: {}]
  %s1 = inlined_call_operand.vmem [shape: bf16[32,32], index: 1, kind: input, shape index: {}]
  %s2 = inlined_call_operand.vmem [shape: f32[1,32], index: 2, kind: input, shape index: {}]
  %s3 = inlined_call_operand.vmem [shape: f32[16,32], index: 3, kind: input, shape index: {}]
  %s4 = inlined_call_operand.vmem [shape: f32[1,32], index: 4, kind: input, shape index: {}]
  %s5 = inlined_call_operand.vmem [shape: f32[1,32], index: 5, kind: input, shape index: {}]
  %s6 = inlined_call_operand.vmem [shape: f32[32,32], index: 6, kind: output, shape index: {}]
  %s7 = sld [smem:[#allocation0]]
  $region57: #{transformer_decoder.21} parent=0
    _
  %s9 = ssub.s32 1, %s7
  %s10 = scalar_select 0, %s9, %s7
  loop: start=0, step=1, limit=6
  $region2: #{transformer_decoder.21} parent=0 // loop_pre_header
    _
  $region3: #{transformer_decoder.21} parent=0 // loop_header
    %s12 = sphi 0, %s16
    %p13 = scmp.ge.s32.totalorder %s12, 6
    %s22 = sphi 0, %s24
    %s25 = sphi 0, %s22
    %s26 = sphi 0, %s25
    %s42 = sphi 0, %s26
    %s46 = sphi 0, %s46
    %s48 = sphi 0, %s46
    %s49 = sphi 0, %s48
    %s63 = sphi 0, %s49
    %s67 = sphi 0, %s67
    %s69 = sphi 0, %s67
    %s70 = sphi 0, %s69
    %s84 = sphi 0, %s70
    %s114 = sphi 0, %s116
    %s117 = sphi 0, %s114
    %s118 = sphi 0, %s117
    %s134 = sphi 0, %s118
    %s138 = sphi 0, %s138
    %s140 = sphi 0, %s138
    %s141 = sphi 0, %s140
    %s155 = sphi 0, %s141
    %s159 = sphi 0, %s159
    %s161 = sphi 0, %s159
    %s162 = sphi 0, %s161
    %s176 = sphi 0, %s162
    %s182 = sphi 0, %s184
    %s185 = sphi 0, %s182
    %s186 = sphi 0, %s185
    %s202 = sphi 0, %s186
  $region4: #{transformer_decoder.21} parent=0 // loop_header_branch
    %15 = sbr.rel (%p13) target = $region8
  $region5: #{transformer_decoder.21} parent=0 // loop_body
    %s17 = ssub.s32 %s12, 1
    %s18 = ssub.s32 %s12, 2
    %s19 = sadd.s32 %s12, 1
    %s20 = ssub.s32 %s12, %s19
    %p21 = scmp.eq.s32.totalorder %s20, 0
    %s23 = sadd.s32 %s22, 1
    %s24 = scalar_select %p21, %s22, %s23
    %p27 = pneg %p21
    %p28 = scmp.eq.s32.totalorder %s12, 3
    %p29 = por %p27, %p28
    %p30 = scmp.ne.s32.totalorder %s22, %s25
    %p31 = scmp.eq.s32.totalorder %s12, 0
    %p32 = por %p30, %p31
    %p33 = scmp.ne.s32.totalorder %s22, %s25
    %p34 = scmp.eq.s32.totalorder %s17, 3
    %p35 = por %p33, %p34
    %p36 = scmp.ne.s32.totalorder %s25, %s26
    %p37 = scmp.eq.s32.totalorder %s17, 0
    %p38 = por %p36, %p37
    %p39 = scmp.ne.s32.totalorder %s25, %s26
    %p40 = scmp.eq.s32.totalorder %s18, 3
    %p41 = por %p39, %p40
    %p43 = scmp.ne.s32.totalorder %s26, %s42
    %p44 = scmp.eq.s32.totalorder %s18, 0
    %p45 = por %p43, %p44
    %s47 = sadd.s32 %s46, 1
    %p50 = scmp.eq.s32.totalorder %s12, 3
    %p51 = scmp.ne.s32.totalorder %s46, %s48
    %p52 = scmp.eq.s32.totalorder %s12, 0
    %p53 = por %p51, %p52
    %p54 = scmp.ne.s32.totalorder %s46, %s48
    %p55 = scmp.eq.s32.totalorder %s17, 3
    %p56 = por %p54, %p55
    %p57 = scmp.ne.s32.totalorder %s48, %s49
    %p58 = scmp.eq.s32.totalorder %s17, 0
    %p59 = por %p57, %p58
    %p60 = scmp.ne.s32.totalorder %s48, %s49
    %p61 = scmp.eq.s32.totalorder %s18, 3
    %p62 = por %p60, %p61
    %p64 = scmp.ne.s32.totalorder %s49, %s63
    %p65 = scmp.eq.s32.totalorder %s18, 0
    %p66 = por %p64, %p65
    %s68 = sadd.s32 %s67, 1
    %p71 = scmp.eq.s32.totalorder %s12, 3
    %p72 = scmp.ne.s32.totalorder %s67, %s69
    %p73 = scmp.eq.s32.totalorder %s12, 0
    %p74 = por %p72, %p73
    %p75 = scmp.ne.s32.totalorder %s67, %s69
    %p76 = scmp.eq.s32.totalorder %s17, 3
    %p77 = por %p75, %p76
    %p78 = scmp.ne.s32.totalorder %s69, %s70
    %p79 = scmp.eq.s32.totalorder %s17, 0
    %p80 = por %p78, %p79
    %p81 = scmp.ne.s32.totalorder %s69, %s70
    %p82 = scmp.eq.s32.totalorder %s18, 3
    %p83 = por %p81, %p82
    %p85 = scmp.ne.s32.totalorder %s70, %s84
    %p86 = scmp.eq.s32.totalorder %s18, 0
    %p87 = por %p85, %p86
    %p88 = scmp.lt.s32.totalorder %s12, 0
    %s89 = ssub.s32 0, %s12
    %s90 = scalar_select %p88, %s89, %s12
    %s91 = sand.u32 %s90, 1
    %s92 = ssub.s32 0, %s91
    %s93 = scalar_select %p88, %s92, %s91
    %p94 = scmp.ne.s32.totalorder %s93, 0
    %p95 = scmp.lt.s32.totalorder %s93, 0
    %p96 = pnand %p95, %p94
    %p97 = pneg %p96
    %s98 = sadd.s32 %s93, 2
    %s99 = scalar_select %p97, %s98, %s93
    %p100 = scmp.lt.s32.totalorder %s19, 0
    %s101 = ssub.s32 0, %s19
    %s102 = scalar_select %p100, %s101, %s19
    %s103 = sand.u32 %s102, 1
    %s104 = ssub.s32 0, %s103
    %s105 = scalar_select %p100, %s104, %s103
    %p106 = scmp.ne.s32.totalorder %s105, 0
    %p107 = scmp.lt.s32.totalorder %s105, 0
    %p108 = pnand %p107, %p106
    %p109 = pneg %p108
    %s110 = sadd.s32 %s105, 2
    %s111 = scalar_select %p109, %s110, %s105
    %s112 = ssub.s32 %s99, %s111
    %p113 = scmp.eq.s32.totalorder %s112, 0
    %s115 = sadd.s32 %s114, 1
    %s116 = scalar_select %p113, %s114, %s115
    %p119 = pneg %p113
    %p120 = scmp.eq.s32.totalorder %s12, 3
    %p121 = por %p119, %p120
    %p122 = scmp.ne.s32.totalorder %s114, %s117
    %p123 = scmp.eq.s32.totalorder %s12, 0
    %p124 = por %p122, %p123
    %p125 = scmp.ne.s32.totalorder %s114, %s117
    %p126 = scmp.eq.s32.totalorder %s17, 3
    %p127 = por %p125, %p126
    %p128 = scmp.ne.s32.totalorder %s117, %s118
    %p129 = scmp.eq.s32.totalorder %s17, 0
    %p130 = por %p128, %p129
    %p131 = scmp.ne.s32.totalorder %s117, %s118
    %p132 = scmp.eq.s32.totalorder %s18, 3
    %p133 = por %p131, %p132
    %p135 = scmp.ne.s32.totalorder %s118, %s134
    %p136 = scmp.eq.s32.totalorder %s18, 0
    %p137 = por %p135, %p136
    %s139 = sadd.s32 %s138, 1
    %p142 = scmp.eq.s32.totalorder %s12, 3
    %p143 = scmp.ne.s32.totalorder %s138, %s140
    %p144 = scmp.eq.s32.totalorder %s12, 0
    %p145 = por %p143, %p144
    %p146 = scmp.ne.s32.totalorder %s138, %s140
    %p147 = scmp.eq.s32.totalorder %s17, 3
    %p148 = por %p146, %p147
    %p149 = scmp.ne.s32.totalorder %s140, %s141
    %p150 = scmp.eq.s32.totalorder %s17, 0
    %p151 = por %p149, %p150
    %p152 = scmp.ne.s32.totalorder %s140, %s141
    %p153 = scmp.eq.s32.totalorder %s18, 3
    %p154 = por %p152, %p153
    %p156 = scmp.ne.s32.totalorder %s141, %s155
    %p157 = scmp.eq.s32.totalorder %s18, 0
    %p158 = por %p156, %p157
    %s160 = sadd.s32 %s159, 1
    %p163 = scmp.eq.s32.totalorder %s12, 3
    %p164 = scmp.ne.s32.totalorder %s159, %s161
    %p165 = scmp.eq.s32.totalorder %s12, 0
    %p166 = por %p164, %p165
    %p167 = scmp.ne.s32.totalorder %s159, %s161
    %p168 = scmp.eq.s32.totalorder %s17, 3
    %p169 = por %p167, %p168
    %p170 = scmp.ne.s32.totalorder %s161, %s162
    %p171 = scmp.eq.s32.totalorder %s17, 0
    %p172 = por %p170, %p171
    %p173 = scmp.ne.s32.totalorder %s161, %s162
    %p174 = scmp.eq.s32.totalorder %s18, 3
    %p175 = por %p173, %p174
    %p177 = scmp.ne.s32.totalorder %s162, %s176
    %p178 = scmp.eq.s32.totalorder %s18, 0
    %p179 = por %p177, %p178
    %s180 = ssub.s32 %s12, %s19
    %p181 = scmp.eq.s32.totalorder %s180, 0
    %s183 = sadd.s32 %s182, 1
    %s184 = scalar_select %p181, %s182, %s183
    %p187 = pneg %p181
    %p188 = scmp.eq.s32.totalorder %s12, 3
    %p189 = por %p187, %p188
    %p190 = scmp.ne.s32.totalorder %s182, %s185
    %p191 = scmp.eq.s32.totalorder %s12, 0
    %p192 = por %p190, %p191
    %p193 = scmp.ne.s32.totalorder %s182, %s185
    %p194 = scmp.eq.s32.totalorder %s17, 3
    %p195 = por %p193, %p194
    %p196 = scmp.ne.s32.totalorder %s185, %s186
    %p197 = scmp.eq.s32.totalorder %s17, 0
    %p198 = por %p196, %p197
    %p199 = scmp.ne.s32.totalorder %s185, %s186
    %p200 = scmp.eq.s32.totalorder %s18, 3
    %p201 = por %p199, %p200
    %p203 = scmp.ne.s32.totalorder %s186, %s202
    %p204 = scmp.eq.s32.totalorder %s18, 0
    %p205 = por %p203, %p204
    %p206 = scmp.le.s32.totalorder 1, %s12
    %p207 = scmp.lt.s32.totalorder %s12, 5
    %p208 = pnand %p206, %p207
    %p209 = pneg %p208
    // Predicated region
    $region9: #{transformer_decoder.21} parent=5 // pred_check
      _
    $region10: #{transformer_decoder.21} parent=5 // pred_check_branch
      %211 = sbr.rel (%p208) target = $region12
    $region11: #{transformer_decoder.21} parent=5 // pred_region
      %s212 = ssub.s32 %s12, 1
      // Predicated region
      $region13: #{transformer_decoder.21} parent=11 // pred_check
        %p213 = pneg %p59
      $region14: #{transformer_decoder.21} parent=11 // pred_check_branch
        %215 = sbr.rel (%p213) target = $region16
      $region15: #{transformer_decoder.21} parent=11 // pred_region
        _
      $region16: #{transformer_decoder.21} parent=11 // pred_fallthru
        _
      // Predicated region
      $region17: #{transformer_decoder.21} parent=11 // pred_check
        %p216 = pneg %p80
      $region18: #{transformer_decoder.21} parent=11 // pred_check_branch
        %218 = sbr.rel (%p216) target = $region20
      $region19: #{transformer_decoder.21} parent=11 // pred_region
        _
      $region20: #{transformer_decoder.21} parent=11 // pred_fallthru
        _
      // Predicated region
      $region21: #{transformer_decoder.21} parent=11 // pred_check
        %p219 = pneg %p151
      $region22: #{transformer_decoder.21} parent=11 // pred_check_branch
        %221 = sbr.rel (%p219) target = $region24
      $region23: #{transformer_decoder.21} parent=11 // pred_region
        _
      $region24: #{transformer_decoder.21} parent=11 // pred_fallthru
        _
      // Predicated region
      $region25: #{transformer_decoder.21} parent=11 // pred_check
        %p222 = pneg %p172
      $region26: #{transformer_decoder.21} parent=11 // pred_check_branch
        %224 = sbr.rel (%p222) target = $region28
      $region27: #{transformer_decoder.21} parent=11 // pred_region
        _
      $region28: #{transformer_decoder.21} parent=11 // pred_fallthru
        _
    $region12: #{transformer_decoder.21} parent=5 // pred_fallthru
      _
    %p225 = scmp.lt.s32.totalorder %s12, 4
    // Predicated region
    $region29: #{transformer_decoder.21} parent=5 // pred_check
      %p226 = pneg %p225
    $region30: #{transformer_decoder.21} parent=5 // pred_check_branch
      %228 = sbr.rel (%p226) target = $region32
    $region31: #{transformer_decoder.21} parent=5 // pred_region
      // Predicated region
      $region33: #{transformer_decoder.21} parent=31 // pred_check
        %p229 = pneg %p32
      $region34: #{transformer_decoder.21} parent=31 // pred_check_branch
        %231 = sbr.rel (%p229) target = $region36
      $region35: #{transformer_decoder.21} parent=31 // pred_region
        %p232 = scmp.lt.s32.totalorder %s12, 3
        %s233 = scalar_select %p232, %s12, 3
        %s234 = smul.addr %s233, 4
        %s235 = scalar_lea.vmem %s0, %s234
      $region36: #{transformer_decoder.21} parent=31 // pred_fallthru
        _
      // Predicated region
      $region37: #{transformer_decoder.21} parent=31 // pred_check
        %p236 = pneg %p124
      $region38: #{transformer_decoder.21} parent=31 // pred_check_branch
        %238 = sbr.rel (%p236) target = $region40
      $region39: #{transformer_decoder.21} parent=31 // pred_region
        %p239 = scmp.lt.s32.totalorder %s12, 0
        %s240 = ssub.s32 0, %s12
        %s241 = scalar_select %p239, %s240, %s12
        %s242 = sand.u32 %s241, 1
        %s243 = ssub.s32 0, %s242
        %s244 = scalar_select %p239, %s243, %s242
        %p245 = scmp.ne.s32.totalorder %s244, 0
        %p246 = scmp.lt.s32.totalorder %s244, 0
        %p247 = pnand %p246, %p245
        %p248 = pneg %p247
        %s249 = sadd.s32 %s244, 2
        %s250 = scalar_select %p248, %s249, %s244
        %p251 = scmp.lt.s32.totalorder %s250, 1
        %s252 = scalar_select %p251, %s250, 1
        %s253 = smul.addr %s252, 8
        %s254 = scalar_lea.vmem %s3, %s253
        %p255 = scmp.lt.s32.totalorder %s12, 0
        %s256 = ssub.s32 0, %s12
        %s257 = scalar_select %p255, %s256, %s12
        %s258 = sand.u32 %s257, 1
        %s259 = ssub.s32 0, %s258
        %s260 = scalar_select %p255, %s259, %s258
        %p261 = scmp.ne.s32.totalorder %s260, 0
        %p262 = scmp.lt.s32.totalorder %s260, 0
        %p263 = pnand %p262, %p261
        %p264 = pneg %p263
        %s265 = sadd.s32 %s260, 2
        %s266 = scalar_select %p264, %s265, %s260
      $region40: #{transformer_decoder.21} parent=31 // pred_fallthru
        _
    $region32: #{transformer_decoder.21} parent=5 // pred_fallthru
      _
    %p267 = scmp.le.s32.totalorder 1, %s12
    %p268 = scmp.lt.s32.totalorder %s12, 5
    %p269 = pnand %p267, %p268
    %p270 = pneg %p269
    // Predicated region
    $region41: #{transformer_decoder.21} parent=5 // pred_check
      _
    $region42: #{transformer_decoder.21} parent=5 // pred_check_branch
      %272 = sbr.rel (%p269) target = $region44
    $region43: #{transformer_decoder.21} parent=5 // pred_region
      %s273 = ssub.s32 %s12, 1
      %p274 = scmp.lt.s32.totalorder %s17, 3
      %s275 = scalar_select %p274, %s17, 3
      %s276 = smul.addr %s275, 4
      %s277 = scalar_lea.vmem %s0, %s276
      %p278 = pneg %p38
      %p279 = pneg %p35
      %p280 = pneg %p59
      %p281 = pneg %p56
      %p282 = pneg %p80
      %p283 = pneg %p77
      %p284 = scmp.lt.s32.totalorder %s17, 0
      %s285 = ssub.s32 0, %s17
      %s286 = scalar_select %p284, %s285, %s17
      %s287 = sand.u32 %s286, 1
      %s288 = ssub.s32 0, %s287
      %s289 = scalar_select %p284, %s288, %s287
      %p290 = scmp.ne.s32.totalorder %s289, 0
      %p291 = scmp.lt.s32.totalorder %s289, 0
      %p292 = pnand %p291, %p290
      %p293 = pneg %p292
      %s294 = sadd.s32 %s289, 2
      %s295 = scalar_select %p293, %s294, %s289
      %p296 = scmp.lt.s32.totalorder %s295, 1
      %s297 = scalar_select %p296, %s295, 1
      %s298 = smul.addr %s297, 8
      %s299 = scalar_lea.vmem %s3, %s298
      %p300 = pneg %p130
      %p301 = pneg %p127
      %p302 = pneg %p151
      %p303 = pneg %p148
      %p304 = pneg %p172
      %p305 = pneg %p169
      %p306 = pneg %p198
      %p307 = pneg %p195
      %p308 = scmp.lt.s32.totalorder %s17, 3
      %s309 = scalar_select %p308, %s17, 3
      %s310 = smul.addr %s309, 8
      %s311 = scalar_lea.vmem %s6, %s310
      %p312 = scmp.lt.s32.totalorder %s17, 3
      %s313 = scalar_select %p312, %s17, 3
      %s314 = smul.addr %s313, 4
      %s315 = scalar_lea.vmem %s0, %s314
      %p316 = scmp.lt.s32.totalorder %s17, 0
      %s317 = ssub.s32 0, %s17
      %s318 = scalar_select %p316, %s317, %s17
      %s319 = sand.u32 %s318, 1
      %s320 = ssub.s32 0, %s319
      %s321 = scalar_select %p316, %s320, %s319
      %p322 = scmp.ne.s32.totalorder %s321, 0
      %p323 = scmp.lt.s32.totalorder %s321, 0
      %p324 = pnand %p323, %p322
      %p325 = pneg %p324
      %s326 = sadd.s32 %s321, 2
      %s327 = scalar_select %p325, %s326, %s321
      %p328 = scmp.lt.s32.totalorder %s327, 1
      %s329 = scalar_select %p328, %s327, 1
      %s330 = smul.addr %s329, 8
      %s331 = scalar_lea.vmem %s3, %s330
      %p332 = scmp.lt.s32.totalorder %s17, 0
      %s333 = ssub.s32 0, %s17
      %s334 = scalar_select %p332, %s333, %s17
      %s335 = sand.u32 %s334, 1
      %s336 = ssub.s32 0, %s335
      %s337 = scalar_select %p332, %s336, %s335
      %p338 = scmp.ne.s32.totalorder %s337, 0
      %p339 = scmp.lt.s32.totalorder %s337, 0
      %p340 = pnand %p339, %p338
      %p341 = pneg %p340
      %s342 = sadd.s32 %s337, 2
      %s343 = scalar_select %p341, %s342, %s337
      %p344 = scmp.lt.s32.totalorder %s17, 3
      %s345 = scalar_select %p344, %s17, 3
      %s346 = smul.addr %s345, 8
      %s347 = scalar_lea.vmem %s6, %s346
      %v349 = vld [vmem:[%s315] sm:$0xf]
      %v350 = vld [vmem:[%s1] sm:$0xf]
      %v351 = vld [vmem:[%s1 + $0x4] sm:$0xf]
      %v352 = vld [vmem:[%s1 + $0x8] sm:$0xf]
      %v353 = vld [vmem:[%s1 + $0xc] sm:$0xf]
      %v354 = vld [vmem:[%s2] sm:$0x1]
      %v356 = vlaneseq
      %v357 = vshrl.u32 %v356, 7
      %v358 = vsub.s32 0, %v357
      %v359 = vrot.slane %v354, %v358
      %v365 = vunpack.c.l.b16 %v350
      %v366 = vunpack.c.l.b16 %v351
      %v367 = vunpack.c.l.b16 %v352
      %v368 = vunpack.c.l.b16 %v353
      %v369 = vpack.c.b16 %v366, %v365
      %v370 = vpack.c.b16 %v368, %v367
      %vm373 = vcmask 261120
      %v375 = vsel %vm373, %v349, 0
      %377 = vmatprep.subr.bf16.mxu0 0
      %378 = vmatpush1.bf16.msra.mxu0 %v369
      %379 = vmatprep.subr.bf16.mxu0 0
      %380 = vmatpush1.bf16.msra.mxu0 %v370
      %381 = vmatprep.subr.bf16.mxu0 0
      %382 = vmatpush1.bf16.msra.mxu0 0
      %383 = vmatprep.subr.bf16.mxu0 0
      %384 = vmatpush1.bf16.msra.mxu0 0
      %385 = vmatprep.subr.bf16.mxu0 0
      %386 = vmatpush1.bf16.msra.mxu0 0
      %387 = vmatprep.subr.bf16.mxu0 0
      %388 = vmatpush1.bf16.msra.mxu0 0
      %389 = vmatprep.subr.bf16.mxu0 0
      %390 = vmatpush1.bf16.msra.mxu0 0
      %391 = vmatprep.subr.bf16.mxu0 0
      %392 = vmatpush1.bf16.msra.mxu0 0
      %393 = vmatprep.subr.bf16.mxu0 0
      %394 = vmatpush1.bf16.msra.mxu0 0
      %395 = vmatprep.subr.bf16.mxu0 0
      %396 = vmatpush1.bf16.msra.mxu0 0
      %397 = vmatprep.subr.bf16.mxu0 0
      %398 = vmatpush1.bf16.msra.mxu0 0
      %399 = vmatprep.subr.bf16.mxu0 0
      %400 = vmatpush1.bf16.msra.mxu0 0
      %401 = vmatprep.subr.bf16.mxu0 0
      %402 = vmatpush1.bf16.msra.mxu0 0
      %403 = vmatprep.subr.bf16.mxu0 0
      %404 = vmatpush1.bf16.msra.mxu0 0
      %405 = vmatprep.subr.bf16.mxu0 0
      %406 = vmatpush1.bf16.msra.mxu0 0
      %407 = vmatprep.subr.bf16.mxu0 0
      %408 = vmatpush1.bf16.msra.mxu0 0
      %409 = vmatprep.mubr.bf16.mxu0 0
      %410 = vmatmul.mubr.bf16.gmra.mrb[0].mxu0 %v375
      %v411 = vpop.f32.mrb[0].mxu0
      %v412 = vadd.f32 %v359, %v411
      %v413 = vpop.f32.mrb[0].mxu0
      %v414 = vpop.f32.mrb[0].mxu0
      %v415 = vpop.f32.mrb[0].mxu0
      %416 = vdwg.mxu0
      %v417 = vld [vmem:[%s331] sm:$0xff]
      %v418 = vadd.f32 %v417, %v412
      %v419 = vld [vmem:[%s4] sm:$0x1]
      %v420 = vld [vmem:[%s5] sm:$0x1]
      %v421 = vsel %vm373, %v418, 0.0
      %422 = vadd.xlane.f32.xlu0 %v421
      %v423 = vpop.xlane.xlu0 %422
      %v424 = vrcp.pop 32.0
      %v425 = vmul.f32 %v423, %v424
      %v426 = vsub.f32 %v418, %v425
      %v427 = vmul.f32 %v426, %v426
      %v428 = vsel %vm373, %v427, 0.0
      %429 = vadd.xlane.f32.xlu0 %v428
      %v430 = vpop.xlane.xlu0 %429
      %v431 = vmul.f32 %v430, %v424
      %v432 = vadd.f32 %v431, 1e-05
      %v433 = vrsqrt.pop %v432
      %v434 = vmul.f32 %v426, %v433
      %v436 = vlaneseq
      %v437 = vshrl.u32 %v436, 7
      %v438 = vsub.s32 0, %v437
      %v439 = vrot.slane %v419, %v438
      %v441 = vmul.f32 %v434, %v439
      %v443 = vlaneseq
      %v444 = vshrl.u32 %v443, 7
      %v445 = vsub.s32 0, %v444
      %v446 = vrot.slane %v420, %v445
      %v448 = vadd.f32 %v441, %v446
      %449 = vst.msk [vmem:[%s347] sm:$0xff] %vm373, %v448
      %p450 = scmp.lt.s32.totalorder %s17, 3
      %s451 = scalar_select %p450, %s17, 3
      %s452 = smul.addr %s451, 8
      %s453 = scalar_lea.vmem %s6, %s452
      // Predicated region
      $region45: #{transformer_decoder.21} parent=43 // pred_check
        %p454 = pneg %p195
      $region46: #{transformer_decoder.21} parent=43 // pred_check_branch
        %456 = sbr.rel (%p454) target = $region48
      $region47: #{transformer_decoder.21} parent=43 // pred_region
        _
      $region48: #{transformer_decoder.21} parent=43 // pred_fallthru
        _
    $region44: #{transformer_decoder.21} parent=5 // pred_fallthru
      _
    %p457 = scmp.le.s32.totalorder 2, %s12
    // Predicated region
    $region49: #{transformer_decoder.21} parent=5 // pred_check
      %p458 = pneg %p457
    $region50: #{transformer_decoder.21} parent=5 // pred_check_branch
      %460 = sbr.rel (%p458) target = $region52
    $region51: #{transformer_decoder.21} parent=5 // pred_region
      %s461 = ssub.s32 %s12, 2
      // Predicated region
      $region53: #{transformer_decoder.21} parent=51 // pred_check
        %p462 = pneg %p201
      $region54: #{transformer_decoder.21} parent=51 // pred_check_branch
        %464 = sbr.rel (%p462) target = $region56
      $region55: #{transformer_decoder.21} parent=51 // pred_region
        %p465 = scmp.lt.s32.totalorder %s18, 3
        %s466 = scalar_select %p465, %s18, 3
        %s467 = smul.addr %s466, 8
        %s468 = scalar_lea.vmem %s6, %s467
      $region56: #{transformer_decoder.21} parent=51 // pred_fallthru
        _
    $region52: #{transformer_decoder.21} parent=5 // pred_fallthru
      _
  $region6: #{transformer_decoder.21} parent=0 // loop_footer
    %s16 = sadd.s32 1, %s12
  $region7: #{transformer_decoder.21} parent=0 // loop_footer_branch
    %11 = sbr.rel target = $region3
  $region8: #{transformer_decoder.21} parent=0 // loop_exit
    _

// kernel: transformer_decoder.22
$region0: #{transformer_decoder.22}
  #allocation0 [shape = 'u32[]', space=smem, size = 0x4, offset = 0x4, fixed_abs, tag = 'smem constant byte address 0x4 - core index']
  #allocation1 [shape = 'u32[144,128]{1,0:T(1,128)}', space=vmem, size = 0x12000, scoped, tag = 'internal scratch']
  #allocation2 [shape = 'f32[8,32]{1,0:T(8,128)}', space=vmem, size = 0x1000, scoped, tag = 'scratch operand']
  #allocation3 [shape = 'f32[8,32]{1,0:T(8,128)}', space=vmem, size = 0x1000, scoped, tag = 'scratch operand']
  %s0 = inlined_call_operand.vmem [shape: f32[32,32], index: 0, kind: input, shape index: {}, may-alias: {0,1}]
  %s1 = inlined_call_operand.vmem [shape: f32[32,32], index: 1, kind: input, shape index: {}, may-alias: {0,1}]
  %s2 = inlined_call_operand.vmem [shape: bf16[32,64], index: 2, kind: input, shape index: {}]
  %s3 = inlined_call_operand.vmem [shape: f32[1,64], index: 3, kind: input, shape index: {}]
  %s4 = inlined_call_operand.vmem [shape: bf16[64,32], index: 4, kind: input, shape index: {}]
  %s5 = inlined_call_operand.vmem [shape: f32[1,32], index: 5, kind: input, shape index: {}]
  %s6 = inlined_call_operand.vmem [shape: f32[1,32], index: 6, kind: input, shape index: {}]
  %s7 = inlined_call_operand.vmem [shape: f32[1,32], index: 7, kind: input, shape index: {}]
  %s8 = inlined_call_operand.vmem [shape: f32[16,32], index: 8, kind: output, shape index: {}]
  %s9 = sld [smem:[#allocation0]]
  $region73: #{transformer_decoder.22} parent=0
    _
  %s11 = ssub.s32 1, %s9
  %s12 = scalar_select 0, %s11, %s9
  loop: start=0, step=1, limit=4
  $region2: #{transformer_decoder.22} parent=0 // loop_pre_header
    _
  $region3: #{transformer_decoder.22} parent=0 // loop_header
    %s14 = sphi 0, %s18
    %p15 = scmp.ge.s32.totalorder %s14, 4
    %s21 = sphi 0, %s33
    %s22 = sphi 0, %s29
    %s23 = sphi 0, %s21
    %s24 = sphi 0, %s22
    %s25 = sphi 0, %s23
    %s26 = sphi 0, %s24
    %s36 = sphi 0, %s38
    %s39 = sphi 0, %s36
    %s40 = sphi 0, %s39
    %s56 = sphi 0, %s40
    %s64 = sphi 0, %s66
    %s67 = sphi 0, %s64
    %s68 = sphi 0, %s67
    %s84 = sphi 0, %s68
    %s90 = sphi 0, %s92
    %s93 = sphi 0, %s90
    %s94 = sphi 0, %s93
    %s110 = sphi 0, %s94
    %s116 = sphi 0, %s118
    %s119 = sphi 0, %s116
    %s120 = sphi 0, %s119
    %s136 = sphi 0, %s120
    %s142 = sphi 0, %s144
    %s145 = sphi 0, %s142
    %s146 = sphi 0, %s145
    %s162 = sphi 0, %s146
    %s166 = sphi 0, %s166
    %s168 = sphi 0, %s166
    %s169 = sphi 0, %s168
    %s183 = sphi 0, %s169
    %s187 = sphi 0, %s187
    %s189 = sphi 0, %s187
    %s190 = sphi 0, %s189
    %s204 = sphi 0, %s190
    %s208 = sphi 0, %s208
    %s210 = sphi 0, %s208
    %s211 = sphi 0, %s210
    %s225 = sphi 0, %s211
    %s231 = sphi 0, %s233
    %s234 = sphi 0, %s231
    %s235 = sphi 0, %s234
    %s251 = sphi 0, %s235
  $region4: #{transformer_decoder.22} parent=0 // loop_header_branch
    %17 = sbr.rel (%p15) target = $region8
  $region5: #{transformer_decoder.22} parent=0 // loop_body
    %s19 = ssub.s32 %s14, 1
    %s20 = ssub.s32 %s14, 2
    %s27 = sadd.s32 1, %s22
    %p28 = scmp.ge.s32.totalorder %s27, 1
    %s29 = scalar_select %p28, 0, %s27
    %s30 = sadd.s32 1, %s21
    %s31 = scalar_select %p28, %s30, %s21
    %p32 = scmp.ge.s32.totalorder %s31, 2
    %s33 = scalar_select %p32, 0, %s31
    %s34 = ssub.s32 %s21, %s33
    %p35 = scmp.eq.s32.totalorder %s34, 0
    %s37 = sadd.s32 %s36, 1
    %s38 = scalar_select %p35, %s36, %s37
    %p41 = pneg %p35
    %p42 = scmp.eq.s32.totalorder %s14, 1
    %p43 = por %p41, %p42
    %p44 = scmp.ne.s32.totalorder %s36, %s39
    %p45 = scmp.eq.s32.totalorder %s14, 0
    %p46 = por %p44, %p45
    %p47 = scmp.ne.s32.totalorder %s36, %s39
    %p48 = scmp.eq.s32.totalorder %s19, 1
    %p49 = por %p47, %p48
    %p50 = scmp.ne.s32.totalorder %s39, %s40
    %p51 = scmp.eq.s32.totalorder %s19, 0
    %p52 = por %p50, %p51
    %p53 = scmp.ne.s32.totalorder %s39, %s40
    %p54 = scmp.eq.s32.totalorder %s20, 1
    %p55 = por %p53, %p54
    %p57 = scmp.ne.s32.totalorder %s40, %s56
    %p58 = scmp.eq.s32.totalorder %s20, 0
    %p59 = por %p57, %p58
    %s60 = sadd.s32 %s21, 2
    %s61 = sadd.s32 %s33, 2
    %s62 = ssub.s32 %s60, %s61
    %p63 = scmp.eq.s32.totalorder %s62, 0
    %s65 = sadd.s32 %s64, 1
    %s66 = scalar_select %p63, %s64, %s65
    %p69 = pneg %p63
    %p70 = scmp.eq.s32.totalorder %s14, 1
    %p71 = por %p69, %p70
    %p72 = scmp.ne.s32.totalorder %s64, %s67
    %p73 = scmp.eq.s32.totalorder %s14, 0
    %p74 = por %p72, %p73
    %p75 = scmp.ne.s32.totalorder %s64, %s67
    %p76 = scmp.eq.s32.totalorder %s19, 1
    %p77 = por %p75, %p76
    %p78 = scmp.ne.s32.totalorder %s67, %s68
    %p79 = scmp.eq.s32.totalorder %s19, 0
    %p80 = por %p78, %p79
    %p81 = scmp.ne.s32.totalorder %s67, %s68
    %p82 = scmp.eq.s32.totalorder %s20, 1
    %p83 = por %p81, %p82
    %p85 = scmp.ne.s32.totalorder %s68, %s84
    %p86 = scmp.eq.s32.totalorder %s20, 0
    %p87 = por %p85, %p86
    %s88 = ssub.s32 %s22, %s29
    %p89 = scmp.eq.s32.totalorder %s88, 0
    %s91 = sadd.s32 %s90, 1
    %s92 = scalar_select %p89, %s90, %s91
    %p95 = pneg %p89
    %p96 = scmp.eq.s32.totalorder %s14, 1
    %p97 = por %p95, %p96
    %p98 = scmp.ne.s32.totalorder %s90, %s93
    %p99 = scmp.eq.s32.totalorder %s14, 0
    %p100 = por %p98, %p99
    %p101 = scmp.ne.s32.totalorder %s90, %s93
    %p102 = scmp.eq.s32.totalorder %s19, 1
    %p103 = por %p101, %p102
    %p104 = scmp.ne.s32.totalorder %s93, %s94
    %p105 = scmp.eq.s32.totalorder %s19, 0
    %p106 = por %p104, %p105
    %p107 = scmp.ne.s32.totalorder %s93, %s94
    %p108 = scmp.eq.s32.totalorder %s20, 1
    %p109 = por %p107, %p108
    %p111 = scmp.ne.s32.totalorder %s94, %s110
    %p112 = scmp.eq.s32.totalorder %s20, 0
    %p113 = por %p111, %p112
    %s114 = ssub.s32 %s22, %s29
    %p115 = scmp.eq.s32.totalorder %s114, 0
    %s117 = sadd.s32 %s116, 1
    %s118 = scalar_select %p115, %s116, %s117
    %p121 = pneg %p115
    %p122 = scmp.eq.s32.totalorder %s14, 1
    %p123 = por %p121, %p122
    %p124 = scmp.ne.s32.totalorder %s116, %s119
    %p125 = scmp.eq.s32.totalorder %s14, 0
    %p126 = por %p124, %p125
    %p127 = scmp.ne.s32.totalorder %s116, %s119
    %p128 = scmp.eq.s32.totalorder %s19, 1
    %p129 = por %p127, %p128
    %p130 = scmp.ne.s32.totalorder %s119, %s120
    %p131 = scmp.eq.s32.totalorder %s19, 0
    %p132 = por %p130, %p131
    %p133 = scmp.ne.s32.totalorder %s119, %s120
    %p134 = scmp.eq.s32.totalorder %s20, 1
    %p135 = por %p133, %p134
    %p137 = scmp.ne.s32.totalorder %s120, %s136
    %p138 = scmp.eq.s32.totalorder %s20, 0
    %p139 = por %p137, %p138
    %s140 = ssub.s32 %s22, %s29
    %p141 = scmp.eq.s32.totalorder %s140, 0
    %s143 = sadd.s32 %s142, 1
    %s144 = scalar_select %p141, %s142, %s143
    %p147 = pneg %p141
    %p148 = scmp.eq.s32.totalorder %s14, 1
    %p149 = por %p147, %p148
    %p150 = scmp.ne.s32.totalorder %s142, %s145
    %p151 = scmp.eq.s32.totalorder %s14, 0
    %p152 = por %p150, %p151
    %p153 = scmp.ne.s32.totalorder %s142, %s145
    %p154 = scmp.eq.s32.totalorder %s19, 1
    %p155 = por %p153, %p154
    %p156 = scmp.ne.s32.totalorder %s145, %s146
    %p157 = scmp.eq.s32.totalorder %s19, 0
    %p158 = por %p156, %p157
    %p159 = scmp.ne.s32.totalorder %s145, %s146
    %p160 = scmp.eq.s32.totalorder %s20, 1
    %p161 = por %p159, %p160
    %p163 = scmp.ne.s32.totalorder %s146, %s162
    %p164 = scmp.eq.s32.totalorder %s20, 0
    %p165 = por %p163, %p164
    %s167 = sadd.s32 %s166, 1
    %p170 = scmp.eq.s32.totalorder %s14, 1
    %p171 = scmp.ne.s32.totalorder %s166, %s168
    %p172 = scmp.eq.s32.totalorder %s14, 0
    %p173 = por %p171, %p172
    %p174 = scmp.ne.s32.totalorder %s166, %s168
    %p175 = scmp.eq.s32.totalorder %s19, 1
    %p176 = por %p174, %p175
    %p177 = scmp.ne.s32.totalorder %s168, %s169
    %p178 = scmp.eq.s32.totalorder %s19, 0
    %p179 = por %p177, %p178
    %p180 = scmp.ne.s32.totalorder %s168, %s169
    %p181 = scmp.eq.s32.totalorder %s20, 1
    %p182 = por %p180, %p181
    %p184 = scmp.ne.s32.totalorder %s169, %s183
    %p185 = scmp.eq.s32.totalorder %s20, 0
    %p186 = por %p184, %p185
    %s188 = sadd.s32 %s187, 1
    %p191 = scmp.eq.s32.totalorder %s14, 1
    %p192 = scmp.ne.s32.totalorder %s187, %s189
    %p193 = scmp.eq.s32.totalorder %s14, 0
    %p194 = por %p192, %p193
    %p195 = scmp.ne.s32.totalorder %s187, %s189
    %p196 = scmp.eq.s32.totalorder %s19, 1
    %p197 = por %p195, %p196
    %p198 = scmp.ne.s32.totalorder %s189, %s190
    %p199 = scmp.eq.s32.totalorder %s19, 0
    %p200 = por %p198, %p199
    %p201 = scmp.ne.s32.totalorder %s189, %s190
    %p202 = scmp.eq.s32.totalorder %s20, 1
    %p203 = por %p201, %p202
    %p205 = scmp.ne.s32.totalorder %s190, %s204
    %p206 = scmp.eq.s32.totalorder %s20, 0
    %p207 = por %p205, %p206
    %s209 = sadd.s32 %s208, 1
    %p212 = scmp.eq.s32.totalorder %s14, 1
    %p213 = scmp.ne.s32.totalorder %s208, %s210
    %p214 = scmp.eq.s32.totalorder %s14, 0
    %p215 = por %p213, %p214
    %p216 = scmp.ne.s32.totalorder %s208, %s210
    %p217 = scmp.eq.s32.totalorder %s19, 1
    %p218 = por %p216, %p217
    %p219 = scmp.ne.s32.totalorder %s210, %s211
    %p220 = scmp.eq.s32.totalorder %s19, 0
    %p221 = por %p219, %p220
    %p222 = scmp.ne.s32.totalorder %s210, %s211
    %p223 = scmp.eq.s32.totalorder %s20, 1
    %p224 = por %p222, %p223
    %p226 = scmp.ne.s32.totalorder %s211, %s225
    %p227 = scmp.eq.s32.totalorder %s20, 0
    %p228 = por %p226, %p227
    %s229 = ssub.s32 %s21, %s33
    %p230 = scmp.eq.s32.totalorder %s229, 0
    %s232 = sadd.s32 %s231, 1
    %s233 = scalar_select %p230, %s231, %s232
    %p236 = pneg %p230
    %p237 = scmp.eq.s32.totalorder %s14, 1
    %p238 = por %p236, %p237
    %p239 = scmp.ne.s32.totalorder %s231, %s234
    %p240 = scmp.eq.s32.totalorder %s14, 0
    %p241 = por %p239, %p240
    %p242 = scmp.ne.s32.totalorder %s231, %s234
    %p243 = scmp.eq.s32.totalorder %s19, 1
    %p244 = por %p242, %p243
    %p245 = scmp.ne.s32.totalorder %s234, %s235
    %p246 = scmp.eq.s32.totalorder %s19, 0
    %p247 = por %p245, %p246
    %p248 = scmp.ne.s32.totalorder %s234, %s235
    %p249 = scmp.eq.s32.totalorder %s20, 1
    %p250 = por %p248, %p249
    %p252 = scmp.ne.s32.totalorder %s235, %s251
    %p253 = scmp.eq.s32.totalorder %s20, 0
    %p254 = por %p252, %p253
    %p255 = scmp.le.s32.totalorder 1, %s14
    %p256 = scmp.lt.s32.totalorder %s14, 3
    %p257 = pnand %p255, %p256
    %p258 = pneg %p257
    // Predicated region
    $region9: #{transformer_decoder.22} parent=5 // pred_check
      _
    $region10: #{transformer_decoder.22} parent=5 // pred_check_branch
      %260 = sbr.rel (%p257) target = $region12
    $region11: #{transformer_decoder.22} parent=5 // pred_region
      %s261 = ssub.s32 %s14, 1
      // Predicated region
      $region13: #{transformer_decoder.22} parent=11 // pred_check
        %p262 = pneg %p106
      $region14: #{transformer_decoder.22} parent=11 // pred_check_branch
        %264 = sbr.rel (%p262) target = $region16
      $region15: #{transformer_decoder.22} parent=11 // pred_region
        %p265 = scmp.lt.s32.totalorder %s24, 0
        %s266 = scalar_select %p265, %s24, 0
        %s267 = smul.addr %s266, 4
        %s268 = scalar_lea.vmem %s2, %s267
      $region16: #{transformer_decoder.22} parent=11 // pred_fallthru
        _
      // Predicated region
      $region17: #{transformer_decoder.22} parent=11 // pred_check
        %p269 = pneg %p132
      $region18: #{transformer_decoder.22} parent=11 // pred_check_branch
        %271 = sbr.rel (%p269) target = $region20
      $region19: #{transformer_decoder.22} parent=11 // pred_region
        %p272 = scmp.lt.s32.totalorder %s24, 0
        %s273 = scalar_select %p272, %s24, 0
        %s274 = scalar_lea.vmem %s3, %s273
      $region20: #{transformer_decoder.22} parent=11 // pred_fallthru
        _
      // Predicated region
      $region21: #{transformer_decoder.22} parent=11 // pred_check
        %p275 = pneg %p158
      $region22: #{transformer_decoder.22} parent=11 // pred_check_branch
        %277 = sbr.rel (%p275) target = $region24
      $region23: #{transformer_decoder.22} parent=11 // pred_region
        %s278 = smul.u32 8, %s24
        %p279 = scmp.lt.s32.totalorder %s278, 7
        %s280 = scalar_select %p279, %s278, 7
        %s281 = smul.addr %s280, 4
        %s282 = scalar_lea.vmem %s4, %s281
        %s283 = smul.u32 8, %s24
      $region24: #{transformer_decoder.22} parent=11 // pred_fallthru
        _
      // Predicated region
      $region25: #{transformer_decoder.22} parent=11 // pred_check
        %p284 = pneg %p179
      $region26: #{transformer_decoder.22} parent=11 // pred_check_branch
        %286 = sbr.rel (%p284) target = $region28
      $region27: #{transformer_decoder.22} parent=11 // pred_region
        _
      $region28: #{transformer_decoder.22} parent=11 // pred_fallthru
        _
      // Predicated region
      $region29: #{transformer_decoder.22} parent=11 // pred_check
        %p287 = pneg %p200
      $region30: #{transformer_decoder.22} parent=11 // pred_check_branch
        %289 = sbr.rel (%p287) target = $region32
      $region31: #{transformer_decoder.22} parent=11 // pred_region
        _
      $region32: #{transformer_decoder.22} parent=11 // pred_fallthru
        _
      // Predicated region
      $region33: #{transformer_decoder.22} parent=11 // pred_check
        %p290 = pneg %p221
      $region34: #{transformer_decoder.22} parent=11 // pred_check_branch
        %292 = sbr.rel (%p290) target = $region36
      $region35: #{transformer_decoder.22} parent=11 // pred_region
        _
      $region36: #{transformer_decoder.22} parent=11 // pred_fallthru
        _
    $region12: #{transformer_decoder.22} parent=5 // pred_fallthru
      _
    %p293 = scmp.lt.s32.totalorder %s14, 2
    // Predicated region
    $region37: #{transformer_decoder.22} parent=5 // pred_check
      %p294 = pneg %p293
    $region38: #{transformer_decoder.22} parent=5 // pred_check_branch
      %296 = sbr.rel (%p294) target = $region40
    $region39: #{transformer_decoder.22} parent=5 // pred_region
      // Predicated region
      $region41: #{transformer_decoder.22} parent=39 // pred_check
        %p297 = pneg %p46
      $region42: #{transformer_decoder.22} parent=39 // pred_check_branch
        %299 = sbr.rel (%p297) target = $region44
      $region43: #{transformer_decoder.22} parent=39 // pred_region
        %p300 = scmp.lt.s32.totalorder %s21, 3
        %s301 = scalar_select %p300, %s21, 3
        %s302 = smul.addr %s301, 8
        %s303 = scalar_lea.vmem %s0, %s302
      $region44: #{transformer_decoder.22} parent=39 // pred_fallthru
        _
      // Predicated region
      $region45: #{transformer_decoder.22} parent=39 // pred_check
        %p304 = pneg %p74
      $region46: #{transformer_decoder.22} parent=39 // pred_check_branch
        %306 = sbr.rel (%p304) target = $region48
      $region47: #{transformer_decoder.22} parent=39 // pred_region
        %s307 = sadd.s32 %s21, 2
        %p308 = scmp.lt.s32.totalorder %s307, 3
        %s309 = scalar_select %p308, %s307, 3
        %s310 = smul.addr %s309, 8
        %s311 = scalar_lea.vmem %s1, %s310
        %s312 = sadd.s32 %s21, 2
      $region48: #{transformer_decoder.22} parent=39 // pred_fallthru
        _
    $region40: #{transformer_decoder.22} parent=5 // pred_fallthru
      _
    %p313 = scmp.le.s32.totalorder 1, %s14
    %p314 = scmp.lt.s32.totalorder %s14, 3
    %p315 = pnand %p313, %p314
    %p316 = pneg %p315
    // Predicated region
    $region49: #{transformer_decoder.22} parent=5 // pred_check
      _
    $region50: #{transformer_decoder.22} parent=5 // pred_check_branch
      %318 = sbr.rel (%p315) target = $region52
    $region51: #{transformer_decoder.22} parent=5 // pred_region
      %s319 = ssub.s32 %s14, 1
      %p320 = scmp.lt.s32.totalorder %s23, 3
      %s321 = scalar_select %p320, %s23, 3
      %s322 = smul.addr %s321, 8
      %s323 = scalar_lea.vmem %s0, %s322
      %p324 = pneg %p52
      %p325 = pneg %p49
      %s326 = sadd.s32 %s23, 2
      %p327 = scmp.lt.s32.totalorder %s326, 3
      %s328 = scalar_select %p327, %s326, 3
      %s329 = smul.addr %s328, 8
      %s330 = scalar_lea.vmem %s1, %s329
      %p331 = pneg %p80
      %p332 = pneg %p77
      %p333 = scmp.lt.s32.totalorder %s24, 0
      %s334 = scalar_select %p333, %s24, 0
      %s335 = smul.addr %s334, 4
      %s336 = scalar_lea.vmem %s2, %s335
      %p337 = pneg %p106
      %p338 = pneg %p103
      %p339 = scmp.lt.s32.totalorder %s24, 0
      %s340 = scalar_select %p339, %s24, 0
      %s341 = scalar_lea.vmem %s3, %s340
      %p342 = pneg %p132
      %p343 = pneg %p129
      %s344 = smul.u32 8, %s24
      %p345 = scmp.lt.s32.totalorder %s344, 7
      %s346 = scalar_select %p345, %s344, 7
      %s347 = smul.addr %s346, 4
      %s348 = scalar_lea.vmem %s4, %s347
      %p349 = pneg %p158
      %p350 = pneg %p155
      %p351 = pneg %p179
      %p352 = pneg %p176
      %p353 = pneg %p200
      %p354 = pneg %p197
      %p355 = pneg %p221
      %p356 = pneg %p218
      %p357 = pneg %p247
      %p358 = pneg %p244
      %p359 = scmp.lt.s32.totalorder %s23, 1
      %s360 = scalar_select %p359, %s23, 1
      %s361 = smul.addr %s360, 8
      %s362 = scalar_lea.vmem %s8, %s361
      %p363 = scmp.lt.s32.totalorder %s23, 3
      %s364 = scalar_select %p363, %s23, 3
      %s365 = smul.addr %s364, 8
      %s366 = scalar_lea.vmem %s0, %s365
      %s367 = sadd.s32 %s23, 2
      %p368 = scmp.lt.s32.totalorder %s367, 3
      %s369 = scalar_select %p368, %s367, 3
      %s370 = smul.addr %s369, 8
      %s371 = scalar_lea.vmem %s1, %s370
      %s372 = sadd.s32 %s23, 2
      %p373 = scmp.lt.s32.totalorder %s24, 0
      %s374 = scalar_select %p373, %s24, 0
      %s375 = smul.addr %s374, 4
      %s376 = scalar_lea.vmem %s2, %s375
      %p377 = scmp.lt.s32.totalorder %s24, 0
      %s378 = scalar_select %p377, %s24, 0
      %s379 = scalar_lea.vmem %s3, %s378
      %s380 = smul.u32 8, %s24
      %p381 = scmp.lt.s32.totalorder %s380, 7
      %s382 = scalar_select %p381, %s380, 7
      %s383 = smul.addr %s382, 4
      %s384 = scalar_lea.vmem %s4, %s383
      %s385 = smul.u32 8, %s24
      %p386 = scmp.lt.s32.totalorder %s23, 1
      %s387 = scalar_select %p386, %s23, 1
      %s388 = smul.addr %s387, 8
      %s389 = scalar_lea.vmem %s8, %s388
      %p391 = scmp.eq.s32.totalorder %s24, 0
      // Predicated region
      $region53: #{transformer_decoder.22} parent=51 // pred_check
        %p392 = pneg %p391
      $region54: #{transformer_decoder.22} parent=51 // pred_check_branch
        %394 = sbr.rel (%p392) target = $region56
      $region55: #{transformer_decoder.22} parent=51 // pred_region
        %v395 = vld [vmem:[%s366] sm:$0xff]
        %v396 = vld [vmem:[%s371] sm:$0xff]
        %v397 = vadd.f32 %v395, %v396
        %v398 = vmul.f32 %v397, 0.5
        %vm399 = vcmask 261120
        %400 = vst.msk [vmem:[#allocation2] sm:$0xff] %vm399, %v398
        %401 = vst.msk [vmem:[#allocation3] sm:$0xff] %vm399, 0.0
      $region56: #{transformer_decoder.22} parent=51 // pred_fallthru
        _
      %v402 = vld [vmem:[#allocation2] sm:$0xff]
      %v403 = vld [vmem:[%s376] sm:$0xf]
      %v404 = vld [vmem:[%s376 + $0x4] sm:$0xf]
      %v405 = vld [vmem:[%s376 + $0x8] sm:$0xf]
      %v406 = vld [vmem:[%s376 + $0xc] sm:$0xf]
      %v407 = vpack.c.bf16 %v402, %v402
      %v408 = vld [vmem:[%s379] sm:$0x1]
      %v410 = vlaneseq
      %v411 = vshrl.u32 %v410, 7
      %v412 = vsub.s32 0, %v411
      %v413 = vrot.slane %v408, %v412
      %v419 = vunpack.c.l.b16 %v403
      %v420 = vunpack.c.l.b16 %v404
      %v421 = vunpack.c.l.b16 %v405
      %v422 = vunpack.c.l.b16 %v406
      %v423 = vpack.c.b16 %v420, %v419
      %v424 = vpack.c.b16 %v422, %v421
      %vm427 = vcmask 261120
      %v429 = vsel %vm427, %v407, 0
      %431 = vmatprep.subr.bf16.mxu0 0
      %432 = vmatpush1.bf16.msra.mxu0 %v423
      %433 = vmatprep.subr.bf16.mxu0 0
      %434 = vmatpush1.bf16.msra.mxu0 %v424
      %435 = vmatprep.subr.bf16.mxu0 0
      %436 = vmatpush1.bf16.msra.mxu0 0
      %437 = vmatprep.subr.bf16.mxu0 0
      %438 = vmatpush1.bf16.msra.mxu0 0
      %439 = vmatprep.subr.bf16.mxu0 0
      %440 = vmatpush1.bf16.msra.mxu0 0
      %441 = vmatprep.subr.bf16.mxu0 0
      %442 = vmatpush1.bf16.msra.mxu0 0
      %443 = vmatprep.subr.bf16.mxu0 0
      %444 = vmatpush1.bf16.msra.mxu0 0
      %445 = vmatprep.subr.bf16.mxu0 0
      %446 = vmatpush1.bf16.msra.mxu0 0
      %447 = vmatprep.subr.bf16.mxu0 0
      %448 = vmatpush1.bf16.msra.mxu0 0
      %449 = vmatprep.subr.bf16.mxu0 0
      %450 = vmatpush1.bf16.msra.mxu0 0
      %451 = vmatprep.subr.bf16.mxu0 0
      %452 = vmatpush1.bf16.msra.mxu0 0
      %453 = vmatprep.subr.bf16.mxu0 0
      %454 = vmatpush1.bf16.msra.mxu0 0
      %455 = vmatprep.subr.bf16.mxu0 0
      %456 = vmatpush1.bf16.msra.mxu0 0
      %457 = vmatprep.subr.bf16.mxu0 0
      %458 = vmatpush1.bf16.msra.mxu0 0
      %459 = vmatprep.subr.bf16.mxu0 0
      %460 = vmatpush1.bf16.msra.mxu0 0
      %461 = vmatprep.subr.bf16.mxu0 0
      %462 = vmatpush1.bf16.msra.mxu0 0
      %463 = vmatprep.mubr.bf16.mxu0 0
      %464 = vmatmul.mubr.bf16.gmra.mrb[0].mxu0 %v429
      %v465 = vpop.f32.mrb[0].mxu0
      %v466 = vadd.f32 %v413, %v465
      %v467 = vpop.f32.mrb[0].mxu0
      %v468 = vpop.f32.mrb[0].mxu0
      %v469 = vpop.f32.mrb[0].mxu0
      %470 = vdwg.mxu0
      %v471 = vmax.f32 %v466, 0.0
      %v472 = vld [vmem:[#allocation3] sm:$0xff]
      %v473 = vld [vmem:[%s384] sm:$0xf]
      %v474 = vld [vmem:[%s384 + $0x4] sm:$0xf]
      %v475 = vld [vmem:[%s384 + $0x8] sm:$0xf]
      %v476 = vld [vmem:[%s384 + $0xc] sm:$0xf]
      %v477 = vld [vmem:[%s384 + $0x10] sm:$0xf]
      %v478 = vld [vmem:[%s384 + $0x14] sm:$0xf]
      %v479 = vld [vmem:[%s384 + $0x18] sm:$0xf]
      %v480 = vld [vmem:[%s384 + $0x1c] sm:$0xf]
      %v481 = vpack.c.bf16 %v471, %v471
      %v490 = vunpack.c.l.b16 %v473
      %v491 = vunpack.c.l.b16 %v474
      %v492 = vunpack.c.l.b16 %v475
      %v493 = vunpack.c.l.b16 %v476
      %v494 = vunpack.c.l.b16 %v477
      %v495 = vunpack.c.l.b16 %v478
      %v496 = vunpack.c.l.b16 %v479
      %v497 = vunpack.c.l.b16 %v480
      %v498 = vpack.c.b16 %v491, %v490
      %v499 = vpack.c.b16 %v493, %v492
      %v500 = vpack.c.b16 %v495, %v494
      %v501 = vpack.c.b16 %v497, %v496
      %vm506 = vcmask 523264
      %v508 = vsel %vm506, %v481, 0
      %510 = vmatprep.subr.bf16.mxu0 0
      %511 = vmatpush1.bf16.msra.mxu0 %v498
      %512 = vmatprep.subr.bf16.mxu0 0
      %513 = vmatpush1.bf16.msra.mxu0 %v499
      %514 = vmatprep.subr.bf16.mxu0 0
      %515 = vmatpush1.bf16.msra.mxu0 %v500
      %516 = vmatprep.subr.bf16.mxu0 0
      %517 = vmatpush1.bf16.msra.mxu0 %v501
      %518 = vmatprep.subr.bf16.mxu0 0
      %519 = vmatpush1.bf16.msra.mxu0 0
      %520 = vmatprep.subr.bf16.mxu0 0
      %521 = vmatpush1.bf16.msra.mxu0 0
      %522 = vmatprep.subr.bf16.mxu0 0
      %523 = vmatpush1.bf16.msra.mxu0 0
      %524 = vmatprep.subr.bf16.mxu0 0
      %525 = vmatpush1.bf16.msra.mxu0 0
      %526 = vmatprep.subr.bf16.mxu0 0
      %527 = vmatpush1.bf16.msra.mxu0 0
      %528 = vmatprep.subr.bf16.mxu0 0
      %529 = vmatpush1.bf16.msra.mxu0 0
      %530 = vmatprep.subr.bf16.mxu0 0
      %531 = vmatpush1.bf16.msra.mxu0 0
      %532 = vmatprep.subr.bf16.mxu0 0
      %533 = vmatpush1.bf16.msra.mxu0 0
      %534 = vmatprep.subr.bf16.mxu0 0
      %535 = vmatpush1.bf16.msra.mxu0 0
      %536 = vmatprep.subr.bf16.mxu0 0
      %537 = vmatpush1.bf16.msra.mxu0 0
      %538 = vmatprep.subr.bf16.mxu0 0
      %539 = vmatpush1.bf16.msra.mxu0 0
      %540 = vmatprep.subr.bf16.mxu0 0
      %541 = vmatpush1.bf16.msra.mxu0 0
      %542 = vmatprep.mubr.bf16.mxu0 0
      %543 = vmatmul.mubr.bf16.gmra.mrb[0].mxu0 %v508
      %v544 = vpop.f32.mrb[0].mxu0
      %v545 = vadd.f32 0.0, %v544
      %v546 = vpop.f32.mrb[0].mxu0
      %v547 = vpop.f32.mrb[0].mxu0
      %v548 = vpop.f32.mrb[0].mxu0
      %549 = vdwg.mxu0
      %v550 = vadd.f32 %v472, %v545
      %551 = vst.msk [vmem:[#allocation3] sm:$0xff] %vm427, %v550
      // Predicated region
      $region57: #{transformer_decoder.22} parent=51 // pred_check
        %p552 = pneg %p391
      $region58: #{transformer_decoder.22} parent=51 // pred_check_branch
        %554 = sbr.rel (%p552) target = $region60
      $region59: #{transformer_decoder.22} parent=51 // pred_region
        %v555 = vld [vmem:[#allocation3] sm:$0xff]
        %v556 = vld [vmem:[%s5] sm:$0x1]
        %v558 = vlaneseq
        %v559 = vshrl.u32 %v558, 7
        %v560 = vsub.s32 0, %v559
        %v561 = vrot.slane %v556, %v560
        %v563 = vadd.f32 %v555, %v561
        %v564 = vld [vmem:[#allocation2] sm:$0xff]
        %v565 = vadd.f32 %v564, %v563
        %v566 = vld [vmem:[%s6] sm:$0x1]
        %v567 = vld [vmem:[%s7] sm:$0x1]
        %v568 = vsel %vm427, %v565, 0.0
        %569 = vadd.xlane.f32.xlu0 %v568
        %v570 = vpop.xlane.xlu0 %569
        %v571 = vrcp.pop 32.0
        %v572 = vmul.f32 %v570, %v571
        %v573 = vsub.f32 %v565, %v572
        %v574 = vmul.f32 %v573, %v573
        %v575 = vsel %vm427, %v574, 0.0
        %576 = vadd.xlane.f32.xlu0 %v575
        %v577 = vpop.xlane.xlu0 %576
        %v578 = vmul.f32 %v577, %v571
        %v579 = vadd.f32 %v578, 1e-05
        %v580 = vrsqrt.pop %v579
        %v581 = vmul.f32 %v573, %v580
        %v583 = vlaneseq
        %v584 = vshrl.u32 %v583, 7
        %v585 = vsub.s32 0, %v584
        %v586 = vrot.slane %v566, %v585
        %v588 = vmul.f32 %v581, %v586
        %v590 = vlaneseq
        %v591 = vshrl.u32 %v590, 7
        %v592 = vsub.s32 0, %v591
        %v593 = vrot.slane %v567, %v592
        %v595 = vadd.f32 %v588, %v593
        %596 = vst.msk [vmem:[%s389] sm:$0xff] %vm427, %v595
      $region60: #{transformer_decoder.22} parent=51 // pred_fallthru
        _
      %p597 = scmp.lt.s32.totalorder %s23, 1
      %s598 = scalar_select %p597, %s23, 1
      %s599 = smul.addr %s598, 8
      %s600 = scalar_lea.vmem %s8, %s599
      // Predicated region
      $region61: #{transformer_decoder.22} parent=51 // pred_check
        %p601 = pneg %p244
      $region62: #{transformer_decoder.22} parent=51 // pred_check_branch
        %603 = sbr.rel (%p601) target = $region64
      $region63: #{transformer_decoder.22} parent=51 // pred_region
        _
      $region64: #{transformer_decoder.22} parent=51 // pred_fallthru
        _
    $region52: #{transformer_decoder.22} parent=5 // pred_fallthru
      _
    %p604 = scmp.le.s32.totalorder 2, %s14
    // Predicated region
    $region65: #{transformer_decoder.22} parent=5 // pred_check
      %p605 = pneg %p604
    $region66: #{transformer_decoder.22} parent=5 // pred_check_branch
      %607 = sbr.rel (%p605) target = $region68
    $region67: #{transformer_decoder.22} parent=5 // pred_region
      %s608 = ssub.s32 %s14, 2
      // Predicated region
      $region69: #{transformer_decoder.22} parent=67 // pred_check
        %p609 = pneg %p250
      $region70: #{transformer_decoder.22} parent=67 // pred_check_branch
        %611 = sbr.rel (%p609) target = $region72
      $region71: #{transformer_decoder.22} parent=67 // pred_region
        %p612 = scmp.lt.s32.totalorder %s25, 1
        %s613 = scalar_select %p612, %s25, 1
        %s614 = smul.addr %s613, 8
        %s615 = scalar_lea.vmem %s8, %s614
      $region72: #{transformer_decoder.22} parent=67 // pred_fallthru
        _
    $region68: #{transformer_decoder.22} parent=5 // pred_fallthru
      _
  $region6: #{transformer_decoder.22} parent=0 // loop_footer
    %s18 = sadd.s32 1, %s14
  $region7: #{transformer_decoder.22} parent=0 // loop_footer_branch
    %13 = sbr.rel target = $region3
  $region8: #{transformer_decoder.22} parent=0 // loop_exit
    _

// kernel: transformer_decoder.29
$region0: #{transformer_decoder.29}
  #allocation0 [shape = 'u32[]', space=smem, size = 0x4, offset = 0x4, fixed_abs, tag = 'smem constant byte address 0x4 - core index']
  #allocation1 [shape = 'u32[144,128]{1,0:T(1,128)}', space=vmem, size = 0x12000, scoped, tag = 'internal scratch']
  #allocation2 [shape = 'f32[8,32]{1,0:T(8,128)}', space=vmem, size = 0x1000, scoped, tag = 'scratch operand']
  #allocation3 [shape = 'f32[8,32]{1,0:T(8,128)}', space=vmem, size = 0x1000, scoped, tag = 'scratch operand']
  %s0 = inlined_call_operand.vmem [shape: f32[32,32], index: 0, kind: input, shape index: {}, may-alias: {0,1}]
  %s1 = inlined_call_operand.vmem [shape: f32[32,32], index: 1, kind: input, shape index: {}, may-alias: {0,1}]
  %s2 = inlined_call_operand.vmem [shape: bf16[32,64], index: 2, kind: input, shape index: {}]
  %s3 = inlined_call_operand.vmem [shape: f32[1,64], index: 3, kind: input, shape index: {}]
  %s4 = inlined_call_operand.vmem [shape: bf16[64,32], index: 4, kind: input, shape index: {}]
  %s5 = inlined_call_operand.vmem [shape: f32[1,32], index: 5, kind: input, shape index: {}]
  %s6 = inlined_call_operand.vmem [shape: f32[1,32], index: 6, kind: input, shape index: {}]
  %s7 = inlined_call_operand.vmem [shape: f32[1,32], index: 7, kind: input, shape index: {}]
  %s8 = inlined_call_operand.hbm [shape: f32[16,32], index: 8, kind: output, shape index: {}]
  %s9 = sld [smem:[#allocation0]]
  $region73: #{transformer_decoder.29} parent=0
    _
  %s11 = ssub.s32 1, %s9
  %s12 = scalar_select 0, %s11, %s9
  $region1: #{transformer_decoder.29} parent=0
    #allocation4 [shape = 'u8[8192]{0}', space=vmem, size = 0x2000, scoped, tag = 'output window, operand 0']
    #allocation5 [shape = 's32[2]{0}', space=sflag, size = 0x8, scoped, tag = 'scoped memory for transformer_decoder.29']
    %13 = vsyncpa [#allocation5], 0
    %s14 = scalar_lea.sflag [#allocation5], 1
    %15 = vsyncpa %s14, 0
    loop: start=0, step=1, limit=4
    $region2: #{transformer_decoder.29} parent=1 // loop_pre_header
      _
    $region3: #{transformer_decoder.29} parent=1 // loop_header
      %s17 = sphi 0, %s21
      %p18 = scmp.ge.s32.totalorder %s17, 4
      %s24 = sphi 0, %s36
      %s25 = sphi 0, %s32
      %s26 = sphi 0, %s24
      %s27 = sphi 0, %s25
      %s28 = sphi 0, %s26
      %s29 = sphi 0, %s27
      %s39 = sphi 0, %s41
      %s42 = sphi 0, %s39
      %s43 = sphi 0, %s42
      %s59 = sphi 0, %s43
      %s67 = sphi 0, %s69
      %s70 = sphi 0, %s67
      %s71 = sphi 0, %s70
      %s87 = sphi 0, %s71
      %s93 = sphi 0, %s95
      %s96 = sphi 0, %s93
      %s97 = sphi 0, %s96
      %s113 = sphi 0, %s97
      %s119 = sphi 0, %s121
      %s122 = sphi 0, %s119
      %s123 = sphi 0, %s122
      %s139 = sphi 0, %s123
      %s145 = sphi 0, %s147
      %s148 = sphi 0, %s145
      %s149 = sphi 0, %s148
      %s165 = sphi 0, %s149
      %s169 = sphi 0, %s169
      %s171 = sphi 0, %s169
      %s172 = sphi 0, %s171
      %s186 = sphi 0, %s172
      %s190 = sphi 0, %s190
      %s192 = sphi 0, %s190
      %s193 = sphi 0, %s192
      %s207 = sphi 0, %s193
      %s211 = sphi 0, %s211
      %s213 = sphi 0, %s211
      %s214 = sphi 0, %s213
      %s228 = sphi 0, %s214
      %s234 = sphi 0, %s236
      %s237 = sphi 0, %s234
      %s238 = sphi 0, %s237
      %s254 = sphi 0, %s238
    $region4: #{transformer_decoder.29} parent=1 // loop_header_branch
      %20 = sbr.rel (%p18) target = $region8
    $region5: #{transformer_decoder.29} parent=1 // loop_body
      %s22 = ssub.s32 %s17, 1
      %s23 = ssub.s32 %s17, 2
      %s30 = sadd.s32 1, %s25
      %p31 = scmp.ge.s32.totalorder %s30, 1
      %s32 = scalar_select %p31, 0, %s30
      %s33 = sadd.s32 1, %s24
      %s34 = scalar_select %p31, %s33, %s24
      %p35 = scmp.ge.s32.totalorder %s34, 2
      %s36 = scalar_select %p35, 0, %s34
      %s37 = ssub.s32 %s24, %s36
      %p38 = scmp.eq.s32.totalorder %s37, 0
      %s40 = sadd.s32 %s39, 1
      %s41 = scalar_select %p38, %s39, %s40
      %p44 = pneg %p38
      %p45 = scmp.eq.s32.totalorder %s17, 1
      %p46 = por %p44, %p45
      %p47 = scmp.ne.s32.totalorder %s39, %s42
      %p48 = scmp.eq.s32.totalorder %s17, 0
      %p49 = por %p47, %p48
      %p50 = scmp.ne.s32.totalorder %s39, %s42
      %p51 = scmp.eq.s32.totalorder %s22, 1
      %p52 = por %p50, %p51
      %p53 = scmp.ne.s32.totalorder %s42, %s43
      %p54 = scmp.eq.s32.totalorder %s22, 0
      %p55 = por %p53, %p54
      %p56 = scmp.ne.s32.totalorder %s42, %s43
      %p57 = scmp.eq.s32.totalorder %s23, 1
      %p58 = por %p56, %p57
      %p60 = scmp.ne.s32.totalorder %s43, %s59
      %p61 = scmp.eq.s32.totalorder %s23, 0
      %p62 = por %p60, %p61
      %s63 = sadd.s32 %s24, 2
      %s64 = sadd.s32 %s36, 2
      %s65 = ssub.s32 %s63, %s64
      %p66 = scmp.eq.s32.totalorder %s65, 0
      %s68 = sadd.s32 %s67, 1
      %s69 = scalar_select %p66, %s67, %s68
      %p72 = pneg %p66
      %p73 = scmp.eq.s32.totalorder %s17, 1
      %p74 = por %p72, %p73
      %p75 = scmp.ne.s32.totalorder %s67, %s70
      %p76 = scmp.eq.s32.totalorder %s17, 0
      %p77 = por %p75, %p76
      %p78 = scmp.ne.s32.totalorder %s67, %s70
      %p79 = scmp.eq.s32.totalorder %s22, 1
      %p80 = por %p78, %p79
      %p81 = scmp.ne.s32.totalorder %s70, %s71
      %p82 = scmp.eq.s32.totalorder %s22, 0
      %p83 = por %p81, %p82
      %p84 = scmp.ne.s32.totalorder %s70, %s71
      %p85 = scmp.eq.s32.totalorder %s23, 1
      %p86 = por %p84, %p85
      %p88 = scmp.ne.s32.totalorder %s71, %s87
      %p89 = scmp.eq.s32.totalorder %s23, 0
      %p90 = por %p88, %p89
      %s91 = ssub.s32 %s25, %s32
      %p92 = scmp.eq.s32.totalorder %s91, 0
      %s94 = sadd.s32 %s93, 1
      %s95 = scalar_select %p92, %s93, %s94
      %p98 = pneg %p92
      %p99 = scmp.eq.s32.totalorder %s17, 1
      %p100 = por %p98, %p99
      %p101 = scmp.ne.s32.totalorder %s93, %s96
      %p102 = scmp.eq.s32.totalorder %s17, 0
      %p103 = por %p101, %p102
      %p104 = scmp.ne.s32.totalorder %s93, %s96
      %p105 = scmp.eq.s32.totalorder %s22, 1
      %p106 = por %p104, %p105
      %p107 = scmp.ne.s32.totalorder %s96, %s97
      %p108 = scmp.eq.s32.totalorder %s22, 0
      %p109 = por %p107, %p108
      %p110 = scmp.ne.s32.totalorder %s96, %s97
      %p111 = scmp.eq.s32.totalorder %s23, 1
      %p112 = por %p110, %p111
      %p114 = scmp.ne.s32.totalorder %s97, %s113
      %p115 = scmp.eq.s32.totalorder %s23, 0
      %p116 = por %p114, %p115
      %s117 = ssub.s32 %s25, %s32
      %p118 = scmp.eq.s32.totalorder %s117, 0
      %s120 = sadd.s32 %s119, 1
      %s121 = scalar_select %p118, %s119, %s120
      %p124 = pneg %p118
      %p125 = scmp.eq.s32.totalorder %s17, 1
      %p126 = por %p124, %p125
      %p127 = scmp.ne.s32.totalorder %s119, %s122
      %p128 = scmp.eq.s32.totalorder %s17, 0
      %p129 = por %p127, %p128
      %p130 = scmp.ne.s32.totalorder %s119, %s122
      %p131 = scmp.eq.s32.totalorder %s22, 1
      %p132 = por %p130, %p131
      %p133 = scmp.ne.s32.totalorder %s122, %s123
      %p134 = scmp.eq.s32.totalorder %s22, 0
      %p135 = por %p133, %p134
      %p136 = scmp.ne.s32.totalorder %s122, %s123
      %p137 = scmp.eq.s32.totalorder %s23, 1
      %p138 = por %p136, %p137
      %p140 = scmp.ne.s32.totalorder %s123, %s139
      %p141 = scmp.eq.s32.totalorder %s23, 0
      %p142 = por %p140, %p141
      %s143 = ssub.s32 %s25, %s32
      %p144 = scmp.eq.s32.totalorder %s143, 0
      %s146 = sadd.s32 %s145, 1
      %s147 = scalar_select %p144, %s145, %s146
      %p150 = pneg %p144
      %p151 = scmp.eq.s32.totalorder %s17, 1
      %p152 = por %p150, %p151
      %p153 = scmp.ne.s32.totalorder %s145, %s148
      %p154 = scmp.eq.s32.totalorder %s17, 0
      %p155 = por %p153, %p154
      %p156 = scmp.ne.s32.totalorder %s145, %s148
      %p157 = scmp.eq.s32.totalorder %s22, 1
      %p158 = por %p156, %p157
      %p159 = scmp.ne.s32.totalorder %s148, %s149
      %p160 = scmp.eq.s32.totalorder %s22, 0
      %p161 = por %p159, %p160
      %p162 = scmp.ne.s32.totalorder %s148, %s149
      %p163 = scmp.eq.s32.totalorder %s23, 1
      %p164 = por %p162, %p163
      %p166 = scmp.ne.s32.totalorder %s149, %s165
      %p167 = scmp.eq.s32.totalorder %s23, 0
      %p168 = por %p166, %p167
      %s170 = sadd.s32 %s169, 1
      %p173 = scmp.eq.s32.totalorder %s17, 1
      %p174 = scmp.ne.s32.totalorder %s169, %s171
      %p175 = scmp.eq.s32.totalorder %s17, 0
      %p176 = por %p174, %p175
      %p177 = scmp.ne.s32.totalorder %s169, %s171
      %p178 = scmp.eq.s32.totalorder %s22, 1
      %p179 = por %p177, %p178
      %p180 = scmp.ne.s32.totalorder %s171, %s172
      %p181 = scmp.eq.s32.totalorder %s22, 0
      %p182 = por %p180, %p181
      %p183 = scmp.ne.s32.totalorder %s171, %s172
      %p184 = scmp.eq.s32.totalorder %s23, 1
      %p185 = por %p183, %p184
      %p187 = scmp.ne.s32.totalorder %s172, %s186
      %p188 = scmp.eq.s32.totalorder %s23, 0
      %p189 = por %p187, %p188
      %s191 = sadd.s32 %s190, 1
      %p194 = scmp.eq.s32.totalorder %s17, 1
      %p195 = scmp.ne.s32.totalorder %s190, %s192
      %p196 = scmp.eq.s32.totalorder %s17, 0
      %p197 = por %p195, %p196
      %p198 = scmp.ne.s32.totalorder %s190, %s192
      %p199 = scmp.eq.s32.totalorder %s22, 1
      %p200 = por %p198, %p199
      %p201 = scmp.ne.s32.totalorder %s192, %s193
      %p202 = scmp.eq.s32.totalorder %s22, 0
      %p203 = por %p201, %p202
      %p204 = scmp.ne.s32.totalorder %s192, %s193
      %p205 = scmp.eq.s32.totalorder %s23, 1
      %p206 = por %p204, %p205
      %p208 = scmp.ne.s32.totalorder %s193, %s207
      %p209 = scmp.eq.s32.totalorder %s23, 0
      %p210 = por %p208, %p209
      %s212 = sadd.s32 %s211, 1
      %p215 = scmp.eq.s32.totalorder %s17, 1
      %p216 = scmp.ne.s32.totalorder %s211, %s213
      %p217 = scmp.eq.s32.totalorder %s17, 0
      %p218 = por %p216, %p217
      %p219 = scmp.ne.s32.totalorder %s211, %s213
      %p220 = scmp.eq.s32.totalorder %s22, 1
      %p221 = por %p219, %p220
      %p222 = scmp.ne.s32.totalorder %s213, %s214
      %p223 = scmp.eq.s32.totalorder %s22, 0
      %p224 = por %p222, %p223
      %p225 = scmp.ne.s32.totalorder %s213, %s214
      %p226 = scmp.eq.s32.totalorder %s23, 1
      %p227 = por %p225, %p226
      %p229 = scmp.ne.s32.totalorder %s214, %s228
      %p230 = scmp.eq.s32.totalorder %s23, 0
      %p231 = por %p229, %p230
      %s232 = ssub.s32 %s24, %s36
      %p233 = scmp.eq.s32.totalorder %s232, 0
      %s235 = sadd.s32 %s234, 1
      %s236 = scalar_select %p233, %s234, %s235
      %p239 = pneg %p233
      %p240 = scmp.eq.s32.totalorder %s17, 1
      %p241 = por %p239, %p240
      %p242 = scmp.ne.s32.totalorder %s234, %s237
      %p243 = scmp.eq.s32.totalorder %s17, 0
      %p244 = por %p242, %p243
      %p245 = scmp.ne.s32.totalorder %s234, %s237
      %p246 = scmp.eq.s32.totalorder %s22, 1
      %p247 = por %p245, %p246
      %p248 = scmp.ne.s32.totalorder %s237, %s238
      %p249 = scmp.eq.s32.totalorder %s22, 0
      %p250 = por %p248, %p249
      %p251 = scmp.ne.s32.totalorder %s237, %s238
      %p252 = scmp.eq.s32.totalorder %s23, 1
      %p253 = por %p251, %p252
      %p255 = scmp.ne.s32.totalorder %s238, %s254
      %p256 = scmp.eq.s32.totalorder %s23, 0
      %p257 = por %p255, %p256
      %p258 = scmp.le.s32.totalorder 1, %s17
      %p259 = scmp.lt.s32.totalorder %s17, 3
      %p260 = pnand %p258, %p259
      %p261 = pneg %p260
      // Predicated region
      $region9: #{transformer_decoder.29} parent=5 // pred_check
        _
      $region10: #{transformer_decoder.29} parent=5 // pred_check_branch
        %263 = sbr.rel (%p260) target = $region12
      $region11: #{transformer_decoder.29} parent=5 // pred_region
        %s264 = ssub.s32 %s17, 1
        // Predicated region
        $region13: #{transformer_decoder.29} parent=11 // pred_check
          %p265 = pneg %p109
        $region14: #{transformer_decoder.29} parent=11 // pred_check_branch
          %267 = sbr.rel (%p265) target = $region16
        $region15: #{transformer_decoder.29} parent=11 // pred_region
          %p268 = scmp.lt.s32.totalorder %s27, 0
          %s269 = scalar_select %p268, %s27, 0
          %s270 = smul.addr %s269, 4
          %s271 = scalar_lea.vmem %s2, %s270
        $region16: #{transformer_decoder.29} parent=11 // pred_fallthru
          _
        // Predicated region
        $region17: #{transformer_decoder.29} parent=11 // pred_check
          %p272 = pneg %p135
        $region18: #{transformer_decoder.29} parent=11 // pred_check_branch
          %274 = sbr.rel (%p272) target = $region20
        $region19: #{transformer_decoder.29} parent=11 // pred_region
          %p275 = scmp.lt.s32.totalorder %s27, 0
          %s276 = scalar_select %p275, %s27, 0
          %s277 = scalar_lea.vmem %s3, %s276
        $region20: #{transformer_decoder.29} parent=11 // pred_fallthru
          _
        // Predicated region
        $region21: #{transformer_decoder.29} parent=11 // pred_check
          %p278 = pneg %p161
        $region22: #{transformer_decoder.29} parent=11 // pred_check_branch
          %280 = sbr.rel (%p278) target = $region24
        $region23: #{transformer_decoder.29} parent=11 // pred_region
          %s281 = smul.u32 8, %s27
          %p282 = scmp.lt.s32.totalorder %s281, 7
          %s283 = scalar_select %p282, %s281, 7
          %s284 = smul.addr %s283, 4
          %s285 = scalar_lea.vmem %s4, %s284
          %s286 = smul.u32 8, %s27
        $region24: #{transformer_decoder.29} parent=11 // pred_fallthru
          _
        // Predicated region
        $region25: #{transformer_decoder.29} parent=11 // pred_check
          %p287 = pneg %p182
        $region26: #{transformer_decoder.29} parent=11 // pred_check_branch
          %289 = sbr.rel (%p287) target = $region28
        $region27: #{transformer_decoder.29} parent=11 // pred_region
          _
        $region28: #{transformer_decoder.29} parent=11 // pred_fallthru
          _
        // Predicated region
        $region29: #{transformer_decoder.29} parent=11 // pred_check
          %p290 = pneg %p203
        $region30: #{transformer_decoder.29} parent=11 // pred_check_branch
          %292 = sbr.rel (%p290) target = $region32
        $region31: #{transformer_decoder.29} parent=11 // pred_region
          _
        $region32: #{transformer_decoder.29} parent=11 // pred_fallthru
          _
        // Predicated region
        $region33: #{transformer_decoder.29} parent=11 // pred_check
          %p293 = pneg %p224
        $region34: #{transformer_decoder.29} parent=11 // pred_check_branch
          %295 = sbr.rel (%p293) target = $region36
        $region35: #{transformer_decoder.29} parent=11 // pred_region
          _
        $region36: #{transformer_decoder.29} parent=11 // pred_fallthru
          _
      $region12: #{transformer_decoder.29} parent=5 // pred_fallthru
        _
      %p296 = scmp.lt.s32.totalorder %s17, 2
      // Predicated region
      $region37: #{transformer_decoder.29} parent=5 // pred_check
        %p297 = pneg %p296
      $region38: #{transformer_decoder.29} parent=5 // pred_check_branch
        %299 = sbr.rel (%p297) target = $region40
      $region39: #{transformer_decoder.29} parent=5 // pred_region
        // Predicated region
        $region41: #{transformer_decoder.29} parent=39 // pred_check
          %p300 = pneg %p49
        $region42: #{transformer_decoder.29} parent=39 // pred_check_branch
          %302 = sbr.rel (%p300) target = $region44
        $region43: #{transformer_decoder.29} parent=39 // pred_region
          %p303 = scmp.lt.s32.totalorder %s24, 3
          %s304 = scalar_select %p303, %s24, 3
          %s305 = smul.addr %s304, 8
          %s306 = scalar_lea.vmem %s0, %s305
        $region44: #{transformer_decoder.29} parent=39 // pred_fallthru
          _
        // Predicated region
        $region45: #{transformer_decoder.29} parent=39 // pred_check
          %p307 = pneg %p77
        $region46: #{transformer_decoder.29} parent=39 // pred_check_branch
          %309 = sbr.rel (%p307) target = $region48
        $region47: #{transformer_decoder.29} parent=39 // pred_region
          %s310 = sadd.s32 %s24, 2
          %p311 = scmp.lt.s32.totalorder %s310, 3
          %s312 = scalar_select %p311, %s310, 3
          %s313 = smul.addr %s312, 8
          %s314 = scalar_lea.vmem %s1, %s313
          %s315 = sadd.s32 %s24, 2
        $region48: #{transformer_decoder.29} parent=39 // pred_fallthru
          _
      $region40: #{transformer_decoder.29} parent=5 // pred_fallthru
        _
      %p316 = scmp.le.s32.totalorder 1, %s17
      %p317 = scmp.lt.s32.totalorder %s17, 3
      %p318 = pnand %p316, %p317
      %p319 = pneg %p318
      // Predicated region
      $region49: #{transformer_decoder.29} parent=5 // pred_check
        _
      $region50: #{transformer_decoder.29} parent=5 // pred_check_branch
        %321 = sbr.rel (%p318) target = $region52
      $region51: #{transformer_decoder.29} parent=5 // pred_region
        %s322 = ssub.s32 %s17, 1
        %p323 = scmp.lt.s32.totalorder %s26, 3
        %s324 = scalar_select %p323, %s26, 3
        %s325 = smul.addr %s324, 8
        %s326 = scalar_lea.vmem %s0, %s325
        %p327 = pneg %p55
        %p328 = pneg %p52
        %s329 = sadd.s32 %s26, 2
        %p330 = scmp.lt.s32.totalorder %s329, 3
        %s331 = scalar_select %p330, %s329, 3
        %s332 = smul.addr %s331, 8
        %s333 = scalar_lea.vmem %s1, %s332
        %p334 = pneg %p83
        %p335 = pneg %p80
        %p336 = scmp.lt.s32.totalorder %s27, 0
        %s337 = scalar_select %p336, %s27, 0
        %s338 = smul.addr %s337, 4
        %s339 = scalar_lea.vmem %s2, %s338
        %p340 = pneg %p109
        %p341 = pneg %p106
        %p342 = scmp.lt.s32.totalorder %s27, 0
        %s343 = scalar_select %p342, %s27, 0
        %s344 = scalar_lea.vmem %s3, %s343
        %p345 = pneg %p135
        %p346 = pneg %p132
        %s347 = smul.u32 8, %s27
        %p348 = scmp.lt.s32.totalorder %s347, 7
        %s349 = scalar_select %p348, %s347, 7
        %s350 = smul.addr %s349, 4
        %s351 = scalar_lea.vmem %s4, %s350
        %p352 = pneg %p161
        %p353 = pneg %p158
        %p354 = pneg %p182
        %p355 = pneg %p179
        %p356 = pneg %p203
        %p357 = pneg %p200
        %p358 = pneg %p224
        %p359 = pneg %p221
        %p360 = pneg %p250
        %p361 = pneg %p247
        %s362 = sand.u32 %s237, 1
        %s363 = scalar_lea.sflag [#allocation5], %s362
        %s364 = sand.u32 %s237, 1
        %s365 = smul.addr %s364, 8
        %s366 = scalar_lea.vmem [#allocation4], %s365
        %p367 = scmp.lt.s32.totalorder %s26, 3
        %s368 = scalar_select %p367, %s26, 3
        %s369 = smul.addr %s368, 8
        %s370 = scalar_lea.vmem %s0, %s369
        %s371 = sadd.s32 %s26, 2
        %p372 = scmp.lt.s32.totalorder %s371, 3
        %s373 = scalar_select %p372, %s371, 3
        %s374 = smul.addr %s373, 8
        %s375 = scalar_lea.vmem %s1, %s374
        %s376 = sadd.s32 %s26, 2
        %p377 = scmp.lt.s32.totalorder %s27, 0
        %s378 = scalar_select %p377, %s27, 0
        %s379 = smul.addr %s378, 4
        %s380 = scalar_lea.vmem %s2, %s379
        %p381 = scmp.lt.s32.totalorder %s27, 0
        %s382 = scalar_select %p381, %s27, 0
        %s383 = scalar_lea.vmem %s3, %s382
        %s384 = smul.u32 8, %s27
        %p385 = scmp.lt.s32.totalorder %s384, 7
        %s386 = scalar_select %p385, %s384, 7
        %s387 = smul.addr %s386, 4
        %s388 = scalar_lea.vmem %s4, %s387
        %s389 = smul.u32 8, %s27
        %p391 = scmp.eq.s32.totalorder %s27, 0
        // Predicated region
        $region53: #{transformer_decoder.29} parent=51 // pred_check
          %p392 = pneg %p391
        $region54: #{transformer_decoder.29} parent=51 // pred_check_branch
          %394 = sbr.rel (%p392) target = $region56
        $region55: #{transformer_decoder.29} parent=51 // pred_region
          %v395 = vld [vmem:[%s370] sm:$0xff]
          %v396 = vld [vmem:[%s375] sm:$0xff]
          %v397 = vadd.f32 %v395, %v396
          %v398 = vmul.f32 %v397, 0.5
          %vm399 = vcmask 261120
          %400 = vst.msk [vmem:[#allocation2] sm:$0xff] %vm399, %v398
          %401 = vst.msk [vmem:[#allocation3] sm:$0xff] %vm399, 0.0
        $region56: #{transformer_decoder.29} parent=51 // pred_fallthru
          _
        %v402 = vld [vmem:[#allocation2] sm:$0xff]
        %v403 = vld [vmem:[%s380] sm:$0xf]
        %v404 = vld [vmem:[%s380 + $0x4] sm:$0xf]
        %v405 = vld [vmem:[%s380 + $0x8] sm:$0xf]
        %v406 = vld [vmem:[%s380 + $0xc] sm:$0xf]
        %v407 = vpack.c.bf16 %v402, %v402
        %v408 = vld [vmem:[%s383] sm:$0x1]
        %v410 = vlaneseq
        %v411 = vshrl.u32 %v410, 7
        %v412 = vsub.s32 0, %v411
        %v413 = vrot.slane %v408, %v412
        %v419 = vunpack.c.l.b16 %v403
        %v420 = vunpack.c.l.b16 %v404
        %v421 = vunpack.c.l.b16 %v405
        %v422 = vunpack.c.l.b16 %v406
        %v423 = vpack.c.b16 %v420, %v419
        %v424 = vpack.c.b16 %v422, %v421
        %vm427 = vcmask 261120
        %v429 = vsel %vm427, %v407, 0
        %431 = vmatprep.subr.bf16.mxu0 0
        %432 = vmatpush1.bf16.msra.mxu0 %v423
        %433 = vmatprep.subr.bf16.mxu0 0
        %434 = vmatpush1.bf16.msra.mxu0 %v424
        %435 = vmatprep.subr.bf16.mxu0 0
        %436 = vmatpush1.bf16.msra.mxu0 0
        %437 = vmatprep.subr.bf16.mxu0 0
        %438 = vmatpush1.bf16.msra.mxu0 0
        %439 = vmatprep.subr.bf16.mxu0 0
        %440 = vmatpush1.bf16.msra.mxu0 0
        %441 = vmatprep.subr.bf16.mxu0 0
        %442 = vmatpush1.bf16.msra.mxu0 0
        %443 = vmatprep.subr.bf16.mxu0 0
        %444 = vmatpush1.bf16.msra.mxu0 0
        %445 = vmatprep.subr.bf16.mxu0 0
        %446 = vmatpush1.bf16.msra.mxu0 0
        %447 = vmatprep.subr.bf16.mxu0 0
        %448 = vmatpush1.bf16.msra.mxu0 0
        %449 = vmatprep.subr.bf16.mxu0 0
        %450 = vmatpush1.bf16.msra.mxu0 0
        %451 = vmatprep.subr.bf16.mxu0 0
        %452 = vmatpush1.bf16.msra.mxu0 0
        %453 = vmatprep.subr.bf16.mxu0 0
        %454 = vmatpush1.bf16.msra.mxu0 0
        %455 = vmatprep.subr.bf16.mxu0 0
        %456 = vmatpush1.bf16.msra.mxu0 0
        %457 = vmatprep.subr.bf16.mxu0 0
        %458 = vmatpush1.bf16.msra.mxu0 0
        %459 = vmatprep.subr.bf16.mxu0 0
        %460 = vmatpush1.bf16.msra.mxu0 0
        %461 = vmatprep.subr.bf16.mxu0 0
        %462 = vmatpush1.bf16.msra.mxu0 0
        %463 = vmatprep.mubr.bf16.mxu0 0
        %464 = vmatmul.mubr.bf16.gmra.mrb[0].mxu0 %v429
        %v465 = vpop.f32.mrb[0].mxu0
        %v466 = vadd.f32 %v413, %v465
        %v467 = vpop.f32.mrb[0].mxu0
        %v468 = vpop.f32.mrb[0].mxu0
        %v469 = vpop.f32.mrb[0].mxu0
        %470 = vdwg.mxu0
        %v471 = vmax.f32 %v466, 0.0
        %v472 = vld [vmem:[#allocation3] sm:$0xff]
        %v473 = vld [vmem:[%s388] sm:$0xf]
        %v474 = vld [vmem:[%s388 + $0x4] sm:$0xf]
        %v475 = vld [vmem:[%s388 + $0x8] sm:$0xf]
        %v476 = vld [vmem:[%s388 + $0xc] sm:$0xf]
        %v477 = vld [vmem:[%s388 + $0x10] sm:$0xf]
        %v478 = vld [vmem:[%s388 + $0x14] sm:$0xf]
        %v479 = vld [vmem:[%s388 + $0x18] sm:$0xf]
        %v480 = vld [vmem:[%s388 + $0x1c] sm:$0xf]
        %v481 = vpack.c.bf16 %v471, %v471
        %v490 = vunpack.c.l.b16 %v473
        %v491 = vunpack.c.l.b16 %v474
        %v492 = vunpack.c.l.b16 %v475
        %v493 = vunpack.c.l.b16 %v476
        %v494 = vunpack.c.l.b16 %v477
        %v495 = vunpack.c.l.b16 %v478
        %v496 = vunpack.c.l.b16 %v479
        %v497 = vunpack.c.l.b16 %v480
        %v498 = vpack.c.b16 %v491, %v490
        %v499 = vpack.c.b16 %v493, %v492
        %v500 = vpack.c.b16 %v495, %v494
        %v501 = vpack.c.b16 %v497, %v496
        %vm506 = vcmask 523264
        %v508 = vsel %vm506, %v481, 0
        %510 = vmatprep.subr.bf16.mxu0 0
        %511 = vmatpush1.bf16.msra.mxu0 %v498
        %512 = vmatprep.subr.bf16.mxu0 0
        %513 = vmatpush1.bf16.msra.mxu0 %v499
        %514 = vmatprep.subr.bf16.mxu0 0
        %515 = vmatpush1.bf16.msra.mxu0 %v500
        %516 = vmatprep.subr.bf16.mxu0 0
        %517 = vmatpush1.bf16.msra.mxu0 %v501
        %518 = vmatprep.subr.bf16.mxu0 0
        %519 = vmatpush1.bf16.msra.mxu0 0
        %520 = vmatprep.subr.bf16.mxu0 0
        %521 = vmatpush1.bf16.msra.mxu0 0
        %522 = vmatprep.subr.bf16.mxu0 0
        %523 = vmatpush1.bf16.msra.mxu0 0
        %524 = vmatprep.subr.bf16.mxu0 0
        %525 = vmatpush1.bf16.msra.mxu0 0
        %526 = vmatprep.subr.bf16.mxu0 0
        %527 = vmatpush1.bf16.msra.mxu0 0
        %528 = vmatprep.subr.bf16.mxu0 0
        %529 = vmatpush1.bf16.msra.mxu0 0
        %530 = vmatprep.subr.bf16.mxu0 0
        %531 = vmatpush1.bf16.msra.mxu0 0
        %532 = vmatprep.subr.bf16.mxu0 0
        %533 = vmatpush1.bf16.msra.mxu0 0
        %534 = vmatprep.subr.bf16.mxu0 0
        %535 = vmatpush1.bf16.msra.mxu0 0
        %536 = vmatprep.subr.bf16.mxu0 0
        %537 = vmatpush1.bf16.msra.mxu0 0
        %538 = vmatprep.subr.bf16.mxu0 0
        %539 = vmatpush1.bf16.msra.mxu0 0
        %540 = vmatprep.subr.bf16.mxu0 0
        %541 = vmatpush1.bf16.msra.mxu0 0
        %542 = vmatprep.mubr.bf16.mxu0 0
        %543 = vmatmul.mubr.bf16.gmra.mrb[0].mxu0 %v508
        %v544 = vpop.f32.mrb[0].mxu0
        %v545 = vadd.f32 0.0, %v544
        %v546 = vpop.f32.mrb[0].mxu0
        %v547 = vpop.f32.mrb[0].mxu0
        %v548 = vpop.f32.mrb[0].mxu0
        %549 = vdwg.mxu0
        %v550 = vadd.f32 %v472, %v545
        %551 = vst.msk [vmem:[#allocation3] sm:$0xff] %vm427, %v550
        // Predicated region
        $region57: #{transformer_decoder.29} parent=51 // pred_check
          %p552 = pneg %p391
        $region58: #{transformer_decoder.29} parent=51 // pred_check_branch
          %554 = sbr.rel (%p552) target = $region60
        $region59: #{transformer_decoder.29} parent=51 // pred_region
          %v555 = vld [vmem:[#allocation3] sm:$0xff]
          %v556 = vld [vmem:[%s5] sm:$0x1]
          %v558 = vlaneseq
          %v559 = vshrl.u32 %v558, 7
          %v560 = vsub.s32 0, %v559
          %v561 = vrot.slane %v556, %v560
          %v563 = vadd.f32 %v555, %v561
          %v564 = vld [vmem:[#allocation2] sm:$0xff]
          %v565 = vadd.f32 %v564, %v563
          %v566 = vld [vmem:[%s6] sm:$0x1]
          %v567 = vld [vmem:[%s7] sm:$0x1]
          %v568 = vsel %vm427, %v565, 0.0
          %569 = vadd.xlane.f32.xlu0 %v568
          %v570 = vpop.xlane.xlu0 %569
          %v571 = vrcp.pop 32.0
          %v572 = vmul.f32 %v570, %v571
          %v573 = vsub.f32 %v565, %v572
          %v574 = vmul.f32 %v573, %v573
          %v575 = vsel %vm427, %v574, 0.0
          %576 = vadd.xlane.f32.xlu0 %v575
          %v577 = vpop.xlane.xlu0 %576
          %v578 = vmul.f32 %v577, %v571
          %v579 = vadd.f32 %v578, 1e-05
          %v580 = vrsqrt.pop %v579
          %v581 = vmul.f32 %v573, %v580
          %v583 = vlaneseq
          %v584 = vshrl.u32 %v583, 7
          %v585 = vsub.s32 0, %v584
          %v586 = vrot.slane %v566, %v585
          %v588 = vmul.f32 %v581, %v586
          %v590 = vlaneseq
          %v591 = vshrl.u32 %v590, 7
          %v592 = vsub.s32 0, %v591
          %v593 = vrot.slane %v567, %v592
          %v595 = vadd.f32 %v588, %v593
          %596 = vst.msk [vmem:[%s366] sm:$0xff] %vm427, %v595
        $region60: #{transformer_decoder.29} parent=51 // pred_fallthru
          _
        %s597 = sand.u32 %s237, 1
        %s598 = scalar_lea.sflag [#allocation5], %s597
        %s599 = sand.u32 %s237, 1
        %s600 = smul.addr %s599, 8
        %s601 = scalar_lea.vmem [#allocation4], %s600
        // Predicated region
        $region61: #{transformer_decoder.29} parent=51 // pred_check
          %p602 = pneg %p247
        $region62: #{transformer_decoder.29} parent=51 // pred_check_branch
          %604 = sbr.rel (%p602) target = $region64
        $region63: #{transformer_decoder.29} parent=51 // pred_region
          %s606 = ssub.s32 128, 128
          %607 = vsyncadd %s598, %s606
          %s608 = smul.addr %s26, 128
          %s609 = scalar_lea.hbm %s8, %s608
          %s611 = sshll.u32 %s601, 4
          %s612 = int_to_ptr.vmem [resolvable:$true] %s611
          %614 = dma.vmem_to_hbm [thread:$0]  %s612, 128, %s609, %s598
        $region64: #{transformer_decoder.29} parent=51 // pred_fallthru
          _
      $region52: #{transformer_decoder.29} parent=5 // pred_fallthru
        _
      %p615 = scmp.le.s32.totalorder 2, %s17
      // Predicated region
      $region65: #{transformer_decoder.29} parent=5 // pred_check
        %p616 = pneg %p615
      $region66: #{transformer_decoder.29} parent=5 // pred_check_branch
        %618 = sbr.rel (%p616) target = $region68
      $region67: #{transformer_decoder.29} parent=5 // pred_region
        %s619 = ssub.s32 %s17, 2
        // Predicated region
        $region69: #{transformer_decoder.29} parent=67 // pred_check
          %p620 = pneg %p253
        $region70: #{transformer_decoder.29} parent=67 // pred_check_branch
          %622 = sbr.rel (%p620) target = $region72
        $region71: #{transformer_decoder.29} parent=67 // pred_region
          %s623 = sand.u32 %s238, 1
          %s624 = scalar_lea.sflag [#allocation5], %s623
          %s625 = sand.u32 %s238, 1
          %s626 = smul.addr %s625, 8
          %s627 = scalar_lea.vmem [#allocation4], %s626
          %628 = dma.done %s624, 128
        $region72: #{transformer_decoder.29} parent=67 // pred_fallthru
          _
      $region68: #{transformer_decoder.29} parent=5 // pred_fallthru
        _
    $region6: #{transformer_decoder.29} parent=1 // loop_footer
      %s21 = sadd.s32 1, %s17
    $region7: #{transformer_decoder.29} parent=1 // loop_footer_branch
      %16 = sbr.rel target = $region3
    $region8: #{transformer_decoder.29} parent=1 // loop_exit
      _
    %629 = vsyncpa [#allocation5], 1
    %s630 = scalar_lea.sflag [#allocation5], 1
    %631 = vsyncpa %s630, 1

</llo_original>
